<compile_context>
chip_gen: v6e
topology: v6e:2x2x1
jax: 0.10.0
libtpu: 0.0.40
codegen_flags: <defaults>
</compile_context>

<pallas_src>
import functools

import jax
import jax.numpy as jnp
from jax.experimental import pallas as pl
from jax.experimental.pallas import tpu as pltpu

LANE = 128


def _round_up(n, m):
    return (n + m - 1) // m * m


# ---------------------------------------------------------------------------
# Kernel: whole sequence, weights resident, hidden carried through the loop.
# ---------------------------------------------------------------------------
def rnn_seq_kernel(x_ref, h0_ref, w1x_ref, w1h_ref, b1_ref, w2_ref, b2_ref,
                   out_ref, hid_ref, *, unroll):
    T = x_ref.shape[0]
    hp = h0_ref.shape[1]          # padded hidden width

    def step(t, h):
        x_t = x_ref[t]            # (B, input)

        # Stage 1: fused i2h + i2o.  z = [new_hidden | pad | output | pad]
        z = (jnp.dot(x_t, w1x_ref[...], preferred_element_type=jnp.float32)
             + jnp.dot(h, w1h_ref[...], preferred_element_type=jnp.float32)
             + b1_ref[...])

        # Stage 2: o2o — its input is exactly cat(hidden, output) == z.
        logits = jnp.dot(z, w2_ref[...], preferred_element_type=jnp.float32) + b2_ref[...]

        # Numerically stable log-softmax over the (lane-padded) output dim.
        m = jnp.max(logits, axis=1, keepdims=True)
        shifted = logits - m
        lse = jnp.log(jnp.sum(jnp.exp(shifted), axis=1, keepdims=True))
        out_ref[t] = (shifted - lse).astype(out_ref.dtype)

        return z[:, :hp]          # new (padded) hidden, carried in registers

    h_final = jax.lax.fori_loop(0, T, step, h0_ref[...].astype(jnp.float32),
                                unroll=unroll)
    hid_ref[...] = h_final.astype(hid_ref.dtype)


# ---------------------------------------------------------------------------
# One-time parameter preprocessing: transpose, merge i2h+i2o, lane-pad, build
# the -inf bias for padded logit lanes.  Run ONCE, not per forward call.
# ---------------------------------------------------------------------------
def prepare_params(params, input_size, hidden_size, output_size):
    w_i2h, b_i2h = params["i2h"]          # (H, I+H), (H,)
    w_i2o, b_i2o = params["i2o"]          # (O, I+H), (O,)
    w_o2o, b_o2o = params["o2o"]          # (O, H+O), (O,)
    I, H, O = input_size, hidden_size, output_size
    Hp, Op = _round_up(H, LANE), _round_up(O, LANE)

    wih_t = w_i2h.T.astype(jnp.float32)   # (I+H, H)
    wio_t = w_i2o.T.astype(jnp.float32)   # (I+H, O)
    woo_t = w_o2o.T.astype(jnp.float32)   # (H+O, O)

    # Stage-1 merged weight, split along the cat(x, h) axis.  Columns: [H | pad | O | pad].
    w1x = jnp.zeros((I, Hp + Op), jnp.float32)
    w1x = w1x.at[:, :H].set(wih_t[:I]).at[:, Hp:Hp + O].set(wio_t[:I])

    w1h = jnp.zeros((Hp, Hp + Op), jnp.float32)
    w1h = w1h.at[:H, :H].set(wih_t[I:]).at[:H, Hp:Hp + O].set(wio_t[I:])

    b1 = jnp.zeros((1, Hp + Op), jnp.float32)
    b1 = b1.at[0, :H].set(b_i2h).at[0, Hp:Hp + O].set(b_i2o)

    # Stage-2 (o2o) weight, rows laid out to match z's [H | pad | O | pad] columns.
    w2 = jnp.zeros((Hp + Op, Op), jnp.float32)
    w2 = w2.at[:H, :O].set(woo_t[:H]).at[Hp:Hp + O, :O].set(woo_t[H:])

    # Padded logit lanes get a huge negative bias -> exp underflows to 0, so the
    # log-softmax over the real O columns is exact.
    b2 = jnp.full((1, Op), -1e30, jnp.float32)
    b2 = b2.at[0, :O].set(b_o2o)

    return {"w1x": w1x, "w1h": w1h, "b1": b1, "w2": w2, "b2": b2,
            "sizes": (I, H, O, Hp, Op)}


# ---------------------------------------------------------------------------
# Wrappers
# ---------------------------------------------------------------------------
def rnn_forward_seq(x_seq, h0, prepped):
    """x_seq: (T, B, input), h0: (B, hidden) -> (log_probs (T, B, out), final hidden (B, hidden))."""
    I, H, O, Hp, Op = prepped["sizes"]
    T, B, _ = x_seq.shape

    h0_pad = jnp.zeros((B, Hp), jnp.float32).at[:, :H].set(h0.astype(jnp.float32))

    vmem = pl.BlockSpec(memory_space=pltpu.MemorySpace.VMEM)
    kernel = functools.partial(rnn_seq_kernel, unroll=(T <= 16))

    out_pad, hid_pad = pl.pallas_call(
        kernel,
        out_shape=(
            jax.ShapeDtypeStruct((T, B, Op), jnp.float32),
            jax.ShapeDtypeStruct((B, Hp), jnp.float32),
        ),
        in_specs=[vmem] * 7,
        out_specs=(vmem, vmem),
    )(x_seq.astype(jnp.float32), h0_pad,
      prepped["w1x"], prepped["w1h"], prepped["b1"], prepped["w2"], prepped["b2"])

    return out_pad[:, :, :O], hid_pad[:, :H]


def rnn_forward(x, h, prepped):
    """Single-step forward matching the PyTorch module: (B, input), (B, hidden) -> (out, hidden)."""
    out_seq, h_new = rnn_forward_seq(x[None], h, prepped)
    return out_seq[0], h_new


def init_params(key, input_size, hidden_size, output_size):
    """Deterministic init mimicking nn.Linear default (uniform(-1/sqrt(fan_in), +1/sqrt(fan_in)))."""
    def linear(key, fan_in, fan_out):
        kw, kb = jax.random.split(key)
        bound = 1.0 / jnp.sqrt(fan_in)
        w = jax.random.uniform(kw, (fan_out, fan_in), jnp.float32, -bound, bound)
        b = jax.random.uniform(kb, (fan_out,), jnp.float32, -bound, bound)
        return w, b

    k1, k2, k3 = jax.random.split(key, 3)
    return {
        "i2h": linear(k1, input_size + hidden_size, hidden_size),
        "i2o": linear(k2, input_size + hidden_size, output_size),
        "o2o": linear(k3, hidden_size + output_size, output_size),
    }


if __name__ == "__main__":
    B, INPUT, HIDDEN, OUTPUT, T = 2, 16, 32, 24, 8

    key = jax.random.PRNGKey(0)
    k_x, k_p = jax.random.split(key)

    x_seq = jax.random.normal(k_x, (T, B, INPUT), jnp.float32)
    h0 = jnp.zeros((B, HIDDEN), jnp.float32)          # init_hidden
    params = init_params(k_p, INPUT, HIDDEN, OUTPUT)
    prepped = prepare_params(params, INPUT, HIDDEN, OUTPUT)

    out_seq, h_final = rnn_forward_seq(x_seq, h0, prepped)
    jax.block_until_ready((out_seq, h_final))

    # Pure-JAX reference: the original per-step module math, looped over time.
    def ref_step(h, x):
        comb = jnp.concatenate([x, h], axis=1)
        new_h = comb @ params["i2h"][0].T + params["i2h"][1]
        o = comb @ params["i2o"][0].T + params["i2o"][1]
        comb2 = jnp.concatenate([new_h, o], axis=1)
        o2 = comb2 @ params["o2o"][0].T + params["o2o"][1]
        return new_h, jax.nn.log_softmax(o2, axis=1)

    h_ref = h0
    ref_outs = []
    for t in range(T):
        h_ref, o_ref = ref_step(h_ref, x_seq[t])
        ref_outs.append(o_ref)
    ref_out_seq = jnp.stack(ref_outs)

    assert out_seq.shape == (T, B, OUTPUT)
    assert h_final.shape == (B, HIDDEN)
    assert jnp.allclose(out_seq, ref_out_seq, atol=1e-4), "log-softmax output mismatch"
    assert jnp.allclose(h_final, h_ref, atol=1e-4), "hidden mismatch"

    # Single-step API matches the module's forward() as well.
    out1, h1 = rnn_forward(x_seq[0], h0, prepped)
    assert jnp.allclose(out1, ref_out_seq[0], atol=1e-4), "single-step mismatch"

    print("KERNEL_OK")
</pallas_src>

<mosaic_0001>
module attributes {stable_mosaic.version = 11 : i64} {
  func.func @rnn_seq_kernel(%arg0: memref<8x2x16xf32, #tpu.memory_space<vmem>>, %arg1: memref<2x128xf32, #tpu.memory_space<vmem>>, %arg2: memref<16x256xf32, #tpu.memory_space<vmem>>, %arg3: memref<128x256xf32, #tpu.memory_space<vmem>>, %arg4: memref<1x256xf32, #tpu.memory_space<vmem>>, %arg5: memref<256x128xf32, #tpu.memory_space<vmem>>, %arg6: memref<1x128xf32, #tpu.memory_space<vmem>>, %arg7: memref<8x2x128xf32, #tpu.memory_space<vmem>>, %arg8: memref<2x128xf32, #tpu.memory_space<vmem>>) attributes {dimension_semantics = [], scalar_prefetch = 0 : i64, scratch_operands = 0 : i64, tpu.core_type = #tpu.core_type<tc>} {
    %c0 = arith.constant 0 : index
    %c0_0 = arith.constant 0 : index
    %0 = vector.load %arg1[%c0, %c0_0] : memref<2x128xf32, #tpu.memory_space<vmem>>, vector<2x128xf32>
    %c0_i32 = arith.constant 0 : i32
    %1 = arith.index_cast %c0_i32 : i32 to index
    %c0_1 = arith.constant 0 : index
    %c0_2 = arith.constant 0 : index
    %2 = vector.load %arg0[%1, %c0_1, %c0_2] : memref<8x2x16xf32, #tpu.memory_space<vmem>>, vector<1x2x16xf32>
    %3 = vector.shape_cast %2 : vector<1x2x16xf32> to vector<2x16xf32>
    %c0_3 = arith.constant 0 : index
    %c0_4 = arith.constant 0 : index
    %4 = vector.load %arg2[%c0_3, %c0_4] : memref<16x256xf32, #tpu.memory_space<vmem>>, vector<16x256xf32>
    %cst = arith.constant dense<0.000000e+00> : vector<2x256xf32>
    %5 = tpu.matmul %3, %4, %cst {dimension_numbers = #tpu.dot_dimension_numbers<[1], [0], [0], [1], [0, 0, 1, 1], [], []>} : vector<2x16xf32>, vector<16x256xf32>, vector<2x256xf32> -> vector<2x256xf32>
    %c0_5 = arith.constant 0 : index
    %c0_6 = arith.constant 0 : index
    %6 = vector.load %arg3[%c0_5, %c0_6] : memref<128x256xf32, #tpu.memory_space<vmem>>, vector<128x256xf32>
    %cst_7 = arith.constant dense<0.000000e+00> : vector<2x256xf32>
    %7 = tpu.matmul %0, %6, %cst_7 {dimension_numbers = #tpu.dot_dimension_numbers<[1], [0], [0], [1], [0, 0, 1, 1], [], []>} : vector<2x128xf32>, vector<128x256xf32>, vector<2x256xf32> -> vector<2x256xf32>
    %8 = arith.addf %5, %7 : vector<2x256xf32>
    %c0_8 = arith.constant 0 : index
    %c0_9 = arith.constant 0 : index
    %9 = vector.load %arg4[%c0_8, %c0_9] : memref<1x256xf32, #tpu.memory_space<vmem>>, vector<1x256xf32>
    %10 = vector.broadcast %9 : vector<1x256xf32> to vector<2x256xf32>
    %11 = arith.addf %8, %10 : vector<2x256xf32>
    %c0_10 = arith.constant 0 : index
    %c0_11 = arith.constant 0 : index
    %12 = vector.load %arg5[%c0_10, %c0_11] : memref<256x128xf32, #tpu.memory_space<vmem>>, vector<256x128xf32>
    %cst_12 = arith.constant dense<0.000000e+00> : vector<2x128xf32>
    %13 = tpu.matmul %11, %12, %cst_12 {dimension_numbers = #tpu.dot_dimension_numbers<[1], [0], [0], [1], [0, 0, 1, 1], [], []>} : vector<2x256xf32>, vector<256x128xf32>, vector<2x128xf32> -> vector<2x128xf32>
    %c0_13 = arith.constant 0 : index
    %c0_14 = arith.constant 0 : index
    %14 = vector.load %arg6[%c0_13, %c0_14] : memref<1x128xf32, #tpu.memory_space<vmem>>, vector<1x128xf32>
    %15 = vector.broadcast %14 : vector<1x128xf32> to vector<2x128xf32>
    %16 = arith.addf %13, %15 : vector<2x128xf32>
    %cst_15 = arith.constant dense<0xFF800000> : vector<2xf32>
    %17 = vector.multi_reduction <maximumf>, %16, %cst_15 [1] : vector<2x128xf32> to vector<2xf32>
    %18 = vector.shape_cast %17 : vector<2xf32> to vector<2x1xf32>
    %19 = vector.broadcast %18 : vector<2x1xf32> to vector<2x128xf32>
    %20 = arith.subf %16, %19 : vector<2x128xf32>
    %21 = math.exp %20 : vector<2x128xf32>
    %cst_16 = arith.constant dense<0.000000e+00> : vector<2xf32>
    %22 = vector.multi_reduction <add>, %21, %cst_16 [1] : vector<2x128xf32> to vector<2xf32>
    %23 = vector.shape_cast %22 : vector<2xf32> to vector<2x1xf32>
    %24 = math.log %23 : vector<2x1xf32>
    %25 = vector.broadcast %24 : vector<2x1xf32> to vector<2x128xf32>
    %26 = arith.subf %20, %25 : vector<2x128xf32>
    %27 = arith.index_cast %c0_i32 : i32 to index
    %c0_17 = arith.constant 0 : index
    %c0_18 = arith.constant 0 : index
    %28 = vector.load %arg7[%27, %c0_17, %c0_18] : memref<8x2x128xf32, #tpu.memory_space<vmem>>, vector<1x2x128xf32>
    %29 = vector.shape_cast %28 : vector<1x2x128xf32> to vector<2x128xf32>
    %30 = vector.shape_cast %26 : vector<2x128xf32> to vector<1x2x128xf32>
    tpu.vector_store %arg7[%27, %c0_17, %c0_18], %30 {strides = array<i32>} : memref<8x2x128xf32, #tpu.memory_space<vmem>>, vector<1x2x128xf32>,
    %31 = vector.extract_strided_slice %11 {offsets = [0, 0], sizes = [2, 128], strides = [1, 1]} : vector<2x256xf32> to vector<2x128xf32>
    %c1_i32 = arith.constant 1 : i32
    %32 = arith.index_cast %c1_i32 : i32 to index
    %c0_19 = arith.constant 0 : index
    %c0_20 = arith.constant 0 : index
    %33 = vector.load %arg0[%32, %c0_19, %c0_20] : memref<8x2x16xf32, #tpu.memory_space<vmem>>, vector<1x2x16xf32>
    %34 = vector.shape_cast %33 : vector<1x2x16xf32> to vector<2x16xf32>
    %c0_21 = arith.constant 0 : index
    %c0_22 = arith.constant 0 : index
    %35 = vector.load %arg2[%c0_21, %c0_22] : memref<16x256xf32, #tpu.memory_space<vmem>>, vector<16x256xf32>
    %cst_23 = arith.constant dense<0.000000e+00> : vector<2x256xf32>
    %36 = tpu.matmul %34, %35, %cst_23 {dimension_numbers = #tpu.dot_dimension_numbers<[1], [0], [0], [1], [0, 0, 1, 1], [], []>} : vector<2x16xf32>, vector<16x256xf32>, vector<2x256xf32> -> vector<2x256xf32>
    %c0_24 = arith.constant 0 : index
    %c0_25 = arith.constant 0 : index
    %37 = vector.load %arg3[%c0_24, %c0_25] : memref<128x256xf32, #tpu.memory_space<vmem>>, vector<128x256xf32>
    %cst_26 = arith.constant dense<0.000000e+00> : vector<2x256xf32>
    %38 = tpu.matmul %31, %37, %cst_26 {dimension_numbers = #tpu.dot_dimension_numbers<[1], [0], [0], [1], [0, 0, 1, 1], [], []>} : vector<2x128xf32>, vector<128x256xf32>, vector<2x256xf32> -> vector<2x256xf32>
    %39 = arith.addf %36, %38 : vector<2x256xf32>
    %c0_27 = arith.constant 0 : index
    %c0_28 = arith.constant 0 : index
    %40 = vector.load %arg4[%c0_27, %c0_28] : memref<1x256xf32, #tpu.memory_space<vmem>>, vector<1x256xf32>
    %41 = vector.broadcast %40 : vector<1x256xf32> to vector<2x256xf32>
    %42 = arith.addf %39, %41 : vector<2x256xf32>
    %c0_29 = arith.constant 0 : index
    %c0_30 = arith.constant 0 : index
    %43 = vector.load %arg5[%c0_29, %c0_30] : memref<256x128xf32, #tpu.memory_space<vmem>>, vector<256x128xf32>
    %cst_31 = arith.constant dense<0.000000e+00> : vector<2x128xf32>
    %44 = tpu.matmul %42, %43, %cst_31 {dimension_numbers = #tpu.dot_dimension_numbers<[1], [0], [0], [1], [0, 0, 1, 1], [], []>} : vector<2x256xf32>, vector<256x128xf32>, vector<2x128xf32> -> vector<2x128xf32>
    %c0_32 = arith.constant 0 : index
    %c0_33 = arith.constant 0 : index
    %45 = vector.load %arg6[%c0_32, %c0_33] : memref<1x128xf32, #tpu.memory_space<vmem>>, vector<1x128xf32>
    %46 = vector.broadcast %45 : vector<1x128xf32> to vector<2x128xf32>
    %47 = arith.addf %44, %46 : vector<2x128xf32>
    %cst_34 = arith.constant dense<0xFF800000> : vector<2xf32>
    %48 = vector.multi_reduction <maximumf>, %47, %cst_34 [1] : vector<2x128xf32> to vector<2xf32>
    %49 = vector.shape_cast %48 : vector<2xf32> to vector<2x1xf32>
    %50 = vector.broadcast %49 : vector<2x1xf32> to vector<2x128xf32>
    %51 = arith.subf %47, %50 : vector<2x128xf32>
    %52 = math.exp %51 : vector<2x128xf32>
    %cst_35 = arith.constant dense<0.000000e+00> : vector<2xf32>
    %53 = vector.multi_reduction <add>, %52, %cst_35 [1] : vector<2x128xf32> to vector<2xf32>
    %54 = vector.shape_cast %53 : vector<2xf32> to vector<2x1xf32>
    %55 = math.log %54 : vector<2x1xf32>
    %56 = vector.broadcast %55 : vector<2x1xf32> to vector<2x128xf32>
    %57 = arith.subf %51, %56 : vector<2x128xf32>
    %58 = arith.index_cast %c1_i32 : i32 to index
    %c0_36 = arith.constant 0 : index
    %c0_37 = arith.constant 0 : index
    %59 = vector.load %arg7[%58, %c0_36, %c0_37] : memref<8x2x128xf32, #tpu.memory_space<vmem>>, vector<1x2x128xf32>
    %60 = vector.shape_cast %59 : vector<1x2x128xf32> to vector<2x128xf32>
    %61 = vector.shape_cast %57 : vector<2x128xf32> to vector<1x2x128xf32>
    tpu.vector_store %arg7[%58, %c0_36, %c0_37], %61 {strides = array<i32>} : memref<8x2x128xf32, #tpu.memory_space<vmem>>, vector<1x2x128xf32>,
    %62 = vector.extract_strided_slice %42 {offsets = [0, 0], sizes = [2, 128], strides = [1, 1]} : vector<2x256xf32> to vector<2x128xf32>
    %c2_i32 = arith.constant 2 : i32
    %63 = arith.index_cast %c2_i32 : i32 to index
    %c0_38 = arith.constant 0 : index
    %c0_39 = arith.constant 0 : index
    %64 = vector.load %arg0[%63, %c0_38, %c0_39] : memref<8x2x16xf32, #tpu.memory_space<vmem>>, vector<1x2x16xf32>
    %65 = vector.shape_cast %64 : vector<1x2x16xf32> to vector<2x16xf32>
    %c0_40 = arith.constant 0 : index
    %c0_41 = arith.constant 0 : index
    %66 = vector.load %arg2[%c0_40, %c0_41] : memref<16x256xf32, #tpu.memory_space<vmem>>, vector<16x256xf32>
    %cst_42 = arith.constant dense<0.000000e+00> : vector<2x256xf32>
    %67 = tpu.matmul %65, %66, %cst_42 {dimension_numbers = #tpu.dot_dimension_numbers<[1], [0], [0], [1], [0, 0, 1, 1], [], []>} : vector<2x16xf32>, vector<16x256xf32>, vector<2x256xf32> -> vector<2x256xf32>
    %c0_43 = arith.constant 0 : index
    %c0_44 = arith.constant 0 : index
    %68 = vector.load %arg3[%c0_43, %c0_44] : memref<128x256xf32, #tpu.memory_space<vmem>>, vector<128x256xf32>
    %cst_45 = arith.constant dense<0.000000e+00> : vector<2x256xf32>
    %69 = tpu.matmul %62, %68, %cst_45 {dimension_numbers = #tpu.dot_dimension_numbers<[1], [0], [0], [1], [0, 0, 1, 1], [], []>} : vector<2x128xf32>, vector<128x256xf32>, vector<2x256xf32> -> vector<2x256xf32>
    %70 = arith.addf %67, %69 : vector<2x256xf32>
    %c0_46 = arith.constant 0 : index
    %c0_47 = arith.constant 0 : index
    %71 = vector.load %arg4[%c0_46, %c0_47] : memref<1x256xf32, #tpu.memory_space<vmem>>, vector<1x256xf32>
    %72 = vector.broadcast %71 : vector<1x256xf32> to vector<2x256xf32>
    %73 = arith.addf %70, %72 : vector<2x256xf32>
    %c0_48 = arith.constant 0 : index
    %c0_49 = arith.constant 0 : index
    %74 = vector.load %arg5[%c0_48, %c0_49] : memref<256x128xf32, #tpu.memory_space<vmem>>, vector<256x128xf32>
    %cst_50 = arith.constant dense<0.000000e+00> : vector<2x128xf32>
    %75 = tpu.matmul %73, %74, %cst_50 {dimension_numbers = #tpu.dot_dimension_numbers<[1], [0], [0], [1], [0, 0, 1, 1], [], []>} : vector<2x256xf32>, vector<256x128xf32>, vector<2x128xf32> -> vector<2x128xf32>
    %c0_51 = arith.constant 0 : index
    %c0_52 = arith.constant 0 : index
    %76 = vector.load %arg6[%c0_51, %c0_52] : memref<1x128xf32, #tpu.memory_space<vmem>>, vector<1x128xf32>
    %77 = vector.broadcast %76 : vector<1x128xf32> to vector<2x128xf32>
    %78 = arith.addf %75, %77 : vector<2x128xf32>
    %cst_53 = arith.constant dense<0xFF800000> : vector<2xf32>
    %79 = vector.multi_reduction <maximumf>, %78, %cst_53 [1] : vector<2x128xf32> to vector<2xf32>
    %80 = vector.shape_cast %79 : vector<2xf32> to vector<2x1xf32>
    %81 = vector.broadcast %80 : vector<2x1xf32> to vector<2x128xf32>
    %82 = arith.subf %78, %81 : vector<2x128xf32>
    %83 = math.exp %82 : vector<2x128xf32>
    %cst_54 = arith.constant dense<0.000000e+00> : vector<2xf32>
    %84 = vector.multi_reduction <add>, %83, %cst_54 [1] : vector<2x128xf32> to vector<2xf32>
    %85 = vector.shape_cast %84 : vector<2xf32> to vector<2x1xf32>
    %86 = math.log %85 : vector<2x1xf32>
    %87 = vector.broadcast %86 : vector<2x1xf32> to vector<2x128xf32>
    %88 = arith.subf %82, %87 : vector<2x128xf32>
    %89 = arith.index_cast %c2_i32 : i32 to index
    %c0_55 = arith.constant 0 : index
    %c0_56 = arith.constant 0 : index
    %90 = vector.load %arg7[%89, %c0_55, %c0_56] : memref<8x2x128xf32, #tpu.memory_space<vmem>>, vector<1x2x128xf32>
    %91 = vector.shape_cast %90 : vector<1x2x128xf32> to vector<2x128xf32>
    %92 = vector.shape_cast %88 : vector<2x128xf32> to vector<1x2x128xf32>
    tpu.vector_store %arg7[%89, %c0_55, %c0_56], %92 {strides = array<i32>} : memref<8x2x128xf32, #tpu.memory_space<vmem>>, vector<1x2x128xf32>,
    %93 = vector.extract_strided_slice %73 {offsets = [0, 0], sizes = [2, 128], strides = [1, 1]} : vector<2x256xf32> to vector<2x128xf32>
    %c3_i32 = arith.constant 3 : i32
    %94 = arith.index_cast %c3_i32 : i32 to index
    %c0_57 = arith.constant 0 : index
    %c0_58 = arith.constant 0 : index
    %95 = vector.load %arg0[%94, %c0_57, %c0_58] : memref<8x2x16xf32, #tpu.memory_space<vmem>>, vector<1x2x16xf32>
    %96 = vector.shape_cast %95 : vector<1x2x16xf32> to vector<2x16xf32>
    %c0_59 = arith.constant 0 : index
    %c0_60 = arith.constant 0 : index
    %97 = vector.load %arg2[%c0_59, %c0_60] : memref<16x256xf32, #tpu.memory_space<vmem>>, vector<16x256xf32>
    %cst_61 = arith.constant dense<0.000000e+00> : vector<2x256xf32>
    %98 = tpu.matmul %96, %97, %cst_61 {dimension_numbers = #tpu.dot_dimension_numbers<[1], [0], [0], [1], [0, 0, 1, 1], [], []>} : vector<2x16xf32>, vector<16x256xf32>, vector<2x256xf32> -> vector<2x256xf32>
    %c0_62 = arith.constant 0 : index
    %c0_63 = arith.constant 0 : index
    %99 = vector.load %arg3[%c0_62, %c0_63] : memref<128x256xf32, #tpu.memory_space<vmem>>, vector<128x256xf32>
    %cst_64 = arith.constant dense<0.000000e+00> : vector<2x256xf32>
    %100 = tpu.matmul %93, %99, %cst_64 {dimension_numbers = #tpu.dot_dimension_numbers<[1], [0], [0], [1], [0, 0, 1, 1], [], []>} : vector<2x128xf32>, vector<128x256xf32>, vector<2x256xf32> -> vector<2x256xf32>
    %101 = arith.addf %98, %100 : vector<2x256xf32>
    %c0_65 = arith.constant 0 : index
    %c0_66 = arith.constant 0 : index
    %102 = vector.load %arg4[%c0_65, %c0_66] : memref<1x256xf32, #tpu.memory_space<vmem>>, vector<1x256xf32>
    %103 = vector.broadcast %102 : vector<1x256xf32> to vector<2x256xf32>
    %104 = arith.addf %101, %103 : vector<2x256xf32>
    %c0_67 = arith.constant 0 : index
    %c0_68 = arith.constant 0 : index
    %105 = vector.load %arg5[%c0_67, %c0_68] : memref<256x128xf32, #tpu.memory_space<vmem>>, vector<256x128xf32>
    %cst_69 = arith.constant dense<0.000000e+00> : vector<2x128xf32>
    %106 = tpu.matmul %104, %105, %cst_69 {dimension_numbers = #tpu.dot_dimension_numbers<[1], [0], [0], [1], [0, 0, 1, 1], [], []>} : vector<2x256xf32>, vector<256x128xf32>, vector<2x128xf32> -> vector<2x128xf32>
    %c0_70 = arith.constant 0 : index
    %c0_71 = arith.constant 0 : index
    %107 = vector.load %arg6[%c0_70, %c0_71] : memref<1x128xf32, #tpu.memory_space<vmem>>, vector<1x128xf32>
    %108 = vector.broadcast %107 : vector<1x128xf32> to vector<2x128xf32>
    %109 = arith.addf %106, %108 : vector<2x128xf32>
    %cst_72 = arith.constant dense<0xFF800000> : vector<2xf32>
    %110 = vector.multi_reduction <maximumf>, %109, %cst_72 [1] : vector<2x128xf32> to vector<2xf32>
    %111 = vector.shape_cast %110 : vector<2xf32> to vector<2x1xf32>
    %112 = vector.broadcast %111 : vector<2x1xf32> to vector<2x128xf32>
    %113 = arith.subf %109, %112 : vector<2x128xf32>
    %114 = math.exp %113 : vector<2x128xf32>
    %cst_73 = arith.constant dense<0.000000e+00> : vector<2xf32>
    %115 = vector.multi_reduction <add>, %114, %cst_73 [1] : vector<2x128xf32> to vector<2xf32>
    %116 = vector.shape_cast %115 : vector<2xf32> to vector<2x1xf32>
    %117 = math.log %116 : vector<2x1xf32>
    %118 = vector.broadcast %117 : vector<2x1xf32> to vector<2x128xf32>
    %119 = arith.subf %113, %118 : vector<2x128xf32>
    %120 = arith.index_cast %c3_i32 : i32 to index
    %c0_74 = arith.constant 0 : index
    %c0_75 = arith.constant 0 : index
    %121 = vector.load %arg7[%120, %c0_74, %c0_75] : memref<8x2x128xf32, #tpu.memory_space<vmem>>, vector<1x2x128xf32>
    %122 = vector.shape_cast %121 : vector<1x2x128xf32> to vector<2x128xf32>
    %123 = vector.shape_cast %119 : vector<2x128xf32> to vector<1x2x128xf32>
    tpu.vector_store %arg7[%120, %c0_74, %c0_75], %123 {strides = array<i32>} : memref<8x2x128xf32, #tpu.memory_space<vmem>>, vector<1x2x128xf32>,
    %124 = vector.extract_strided_slice %104 {offsets = [0, 0], sizes = [2, 128], strides = [1, 1]} : vector<2x256xf32> to vector<2x128xf32>
    %c4_i32 = arith.constant 4 : i32
    %125 = arith.index_cast %c4_i32 : i32 to index
    %c0_76 = arith.constant 0 : index
    %c0_77 = arith.constant 0 : index
    %126 = vector.load %arg0[%125, %c0_76, %c0_77] : memref<8x2x16xf32, #tpu.memory_space<vmem>>, vector<1x2x16xf32>
    %127 = vector.shape_cast %126 : vector<1x2x16xf32> to vector<2x16xf32>
    %c0_78 = arith.constant 0 : index
    %c0_79 = arith.constant 0 : index
    %128 = vector.load %arg2[%c0_78, %c0_79] : memref<16x256xf32, #tpu.memory_space<vmem>>, vector<16x256xf32>
    %cst_80 = arith.constant dense<0.000000e+00> : vector<2x256xf32>
    %129 = tpu.matmul %127, %128, %cst_80 {dimension_numbers = #tpu.dot_dimension_numbers<[1], [0], [0], [1], [0, 0, 1, 1], [], []>} : vector<2x16xf32>, vector<16x256xf32>, vector<2x256xf32> -> vector<2x256xf32>
    %c0_81 = arith.constant 0 : index
    %c0_82 = arith.constant 0 : index
    %130 = vector.load %arg3[%c0_81, %c0_82] : memref<128x256xf32, #tpu.memory_space<vmem>>, vector<128x256xf32>
    %cst_83 = arith.constant dense<0.000000e+00> : vector<2x256xf32>
    %131 = tpu.matmul %124, %130, %cst_83 {dimension_numbers = #tpu.dot_dimension_numbers<[1], [0], [0], [1], [0, 0, 1, 1], [], []>} : vector<2x128xf32>, vector<128x256xf32>, vector<2x256xf32> -> vector<2x256xf32>
    %132 = arith.addf %129, %131 : vector<2x256xf32>
    %c0_84 = arith.constant 0 : index
    %c0_85 = arith.constant 0 : index
    %133 = vector.load %arg4[%c0_84, %c0_85] : memref<1x256xf32, #tpu.memory_space<vmem>>, vector<1x256xf32>
    %134 = vector.broadcast %133 : vector<1x256xf32> to vector<2x256xf32>
    %135 = arith.addf %132, %134 : vector<2x256xf32>
    %c0_86 = arith.constant 0 : index
    %c0_87 = arith.constant 0 : index
    %136 = vector.load %arg5[%c0_86, %c0_87] : memref<256x128xf32, #tpu.memory_space<vmem>>, vector<256x128xf32>
    %cst_88 = arith.constant dense<0.000000e+00> : vector<2x128xf32>
    %137 = tpu.matmul %135, %136, %cst_88 {dimension_numbers = #tpu.dot_dimension_numbers<[1], [0], [0], [1], [0, 0, 1, 1], [], []>} : vector<2x256xf32>, vector<256x128xf32>, vector<2x128xf32> -> vector<2x128xf32>
    %c0_89 = arith.constant 0 : index
    %c0_90 = arith.constant 0 : index
    %138 = vector.load %arg6[%c0_89, %c0_90] : memref<1x128xf32, #tpu.memory_space<vmem>>, vector<1x128xf32>
    %139 = vector.broadcast %138 : vector<1x128xf32> to vector<2x128xf32>
    %140 = arith.addf %137, %139 : vector<2x128xf32>
    %cst_91 = arith.constant dense<0xFF800000> : vector<2xf32>
    %141 = vector.multi_reduction <maximumf>, %140, %cst_91 [1] : vector<2x128xf32> to vector<2xf32>
    %142 = vector.shape_cast %141 : vector<2xf32> to vector<2x1xf32>
    %143 = vector.broadcast %142 : vector<2x1xf32> to vector<2x128xf32>
    %144 = arith.subf %140, %143 : vector<2x128xf32>
    %145 = math.exp %144 : vector<2x128xf32>
    %cst_92 = arith.constant dense<0.000000e+00> : vector<2xf32>
    %146 = vector.multi_reduction <add>, %145, %cst_92 [1] : vector<2x128xf32> to vector<2xf32>
    %147 = vector.shape_cast %146 : vector<2xf32> to vector<2x1xf32>
    %148 = math.log %147 : vector<2x1xf32>
    %149 = vector.broadcast %148 : vector<2x1xf32> to vector<2x128xf32>
    %150 = arith.subf %144, %149 : vector<2x128xf32>
    %151 = arith.index_cast %c4_i32 : i32 to index
    %c0_93 = arith.constant 0 : index
    %c0_94 = arith.constant 0 : index
    %152 = vector.load %arg7[%151, %c0_93, %c0_94] : memref<8x2x128xf32, #tpu.memory_space<vmem>>, vector<1x2x128xf32>
    %153 = vector.shape_cast %152 : vector<1x2x128xf32> to vector<2x128xf32>
    %154 = vector.shape_cast %150 : vector<2x128xf32> to vector<1x2x128xf32>
    tpu.vector_store %arg7[%151, %c0_93, %c0_94], %154 {strides = array<i32>} : memref<8x2x128xf32, #tpu.memory_space<vmem>>, vector<1x2x128xf32>,
    %155 = vector.extract_strided_slice %135 {offsets = [0, 0], sizes = [2, 128], strides = [1, 1]} : vector<2x256xf32> to vector<2x128xf32>
    %c5_i32 = arith.constant 5 : i32
    %156 = arith.index_cast %c5_i32 : i32 to index
    %c0_95 = arith.constant 0 : index
    %c0_96 = arith.constant 0 : index
    %157 = vector.load %arg0[%156, %c0_95, %c0_96] : memref<8x2x16xf32, #tpu.memory_space<vmem>>, vector<1x2x16xf32>
    %158 = vector.shape_cast %157 : vector<1x2x16xf32> to vector<2x16xf32>
    %c0_97 = arith.constant 0 : index
    %c0_98 = arith.constant 0 : index
    %159 = vector.load %arg2[%c0_97, %c0_98] : memref<16x256xf32, #tpu.memory_space<vmem>>, vector<16x256xf32>
    %cst_99 = arith.constant dense<0.000000e+00> : vector<2x256xf32>
    %160 = tpu.matmul %158, %159, %cst_99 {dimension_numbers = #tpu.dot_dimension_numbers<[1], [0], [0], [1], [0, 0, 1, 1], [], []>} : vector<2x16xf32>, vector<16x256xf32>, vector<2x256xf32> -> vector<2x256xf32>
    %c0_100 = arith.constant 0 : index
    %c0_101 = arith.constant 0 : index
    %161 = vector.load %arg3[%c0_100, %c0_101] : memref<128x256xf32, #tpu.memory_space<vmem>>, vector<128x256xf32>
    %cst_102 = arith.constant dense<0.000000e+00> : vector<2x256xf32>
    %162 = tpu.matmul %155, %161, %cst_102 {dimension_numbers = #tpu.dot_dimension_numbers<[1], [0], [0], [1], [0, 0, 1, 1], [], []>} : vector<2x128xf32>, vector<128x256xf32>, vector<2x256xf32> -> vector<2x256xf32>
    %163 = arith.addf %160, %162 : vector<2x256xf32>
    %c0_103 = arith.constant 0 : index
    %c0_104 = arith.constant 0 : index
    %164 = vector.load %arg4[%c0_103, %c0_104] : memref<1x256xf32, #tpu.memory_space<vmem>>, vector<1x256xf32>
    %165 = vector.broadcast %164 : vector<1x256xf32> to vector<2x256xf32>
    %166 = arith.addf %163, %165 : vector<2x256xf32>
    %c0_105 = arith.constant 0 : index
    %c0_106 = arith.constant 0 : index
    %167 = vector.load %arg5[%c0_105, %c0_106] : memref<256x128xf32, #tpu.memory_space<vmem>>, vector<256x128xf32>
    %cst_107 = arith.constant dense<0.000000e+00> : vector<2x128xf32>
    %168 = tpu.matmul %166, %167, %cst_107 {dimension_numbers = #tpu.dot_dimension_numbers<[1], [0], [0], [1], [0, 0, 1, 1], [], []>} : vector<2x256xf32>, vector<256x128xf32>, vector<2x128xf32> -> vector<2x128xf32>
    %c0_108 = arith.constant 0 : index
    %c0_109 = arith.constant 0 : index
    %169 = vector.load %arg6[%c0_108, %c0_109] : memref<1x128xf32, #tpu.memory_space<vmem>>, vector<1x128xf32>
    %170 = vector.broadcast %169 : vector<1x128xf32> to vector<2x128xf32>
    %171 = arith.addf %168, %170 : vector<2x128xf32>
    %cst_110 = arith.constant dense<0xFF800000> : vector<2xf32>
    %172 = vector.multi_reduction <maximumf>, %171, %cst_110 [1] : vector<2x128xf32> to vector<2xf32>
    %173 = vector.shape_cast %172 : vector<2xf32> to vector<2x1xf32>
    %174 = vector.broadcast %173 : vector<2x1xf32> to vector<2x128xf32>
    %175 = arith.subf %171, %174 : vector<2x128xf32>
    %176 = math.exp %175 : vector<2x128xf32>
    %cst_111 = arith.constant dense<0.000000e+00> : vector<2xf32>
    %177 = vector.multi_reduction <add>, %176, %cst_111 [1] : vector<2x128xf32> to vector<2xf32>
    %178 = vector.shape_cast %177 : vector<2xf32> to vector<2x1xf32>
    %179 = math.log %178 : vector<2x1xf32>
    %180 = vector.broadcast %179 : vector<2x1xf32> to vector<2x128xf32>
    %181 = arith.subf %175, %180 : vector<2x128xf32>
    %182 = arith.index_cast %c5_i32 : i32 to index
    %c0_112 = arith.constant 0 : index
    %c0_113 = arith.constant 0 : index
    %183 = vector.load %arg7[%182, %c0_112, %c0_113] : memref<8x2x128xf32, #tpu.memory_space<vmem>>, vector<1x2x128xf32>
    %184 = vector.shape_cast %183 : vector<1x2x128xf32> to vector<2x128xf32>
    %185 = vector.shape_cast %181 : vector<2x128xf32> to vector<1x2x128xf32>
    tpu.vector_store %arg7[%182, %c0_112, %c0_113], %185 {strides = array<i32>} : memref<8x2x128xf32, #tpu.memory_space<vmem>>, vector<1x2x128xf32>,
    %186 = vector.extract_strided_slice %166 {offsets = [0, 0], sizes = [2, 128], strides = [1, 1]} : vector<2x256xf32> to vector<2x128xf32>
    %c6_i32 = arith.constant 6 : i32
    %187 = arith.index_cast %c6_i32 : i32 to index
    %c0_114 = arith.constant 0 : index
    %c0_115 = arith.constant 0 : index
    %188 = vector.load %arg0[%187, %c0_114, %c0_115] : memref<8x2x16xf32, #tpu.memory_space<vmem>>, vector<1x2x16xf32>
    %189 = vector.shape_cast %188 : vector<1x2x16xf32> to vector<2x16xf32>
    %c0_116 = arith.constant 0 : index
    %c0_117 = arith.constant 0 : index
    %190 = vector.load %arg2[%c0_116, %c0_117] : memref<16x256xf32, #tpu.memory_space<vmem>>, vector<16x256xf32>
    %cst_118 = arith.constant dense<0.000000e+00> : vector<2x256xf32>
    %191 = tpu.matmul %189, %190, %cst_118 {dimension_numbers = #tpu.dot_dimension_numbers<[1], [0], [0], [1], [0, 0, 1, 1], [], []>} : vector<2x16xf32>, vector<16x256xf32>, vector<2x256xf32> -> vector<2x256xf32>
    %c0_119 = arith.constant 0 : index
    %c0_120 = arith.constant 0 : index
    %192 = vector.load %arg3[%c0_119, %c0_120] : memref<128x256xf32, #tpu.memory_space<vmem>>, vector<128x256xf32>
    %cst_121 = arith.constant dense<0.000000e+00> : vector<2x256xf32>
    %193 = tpu.matmul %186, %192, %cst_121 {dimension_numbers = #tpu.dot_dimension_numbers<[1], [0], [0], [1], [0, 0, 1, 1], [], []>} : vector<2x128xf32>, vector<128x256xf32>, vector<2x256xf32> -> vector<2x256xf32>
    %194 = arith.addf %191, %193 : vector<2x256xf32>
    %c0_122 = arith.constant 0 : index
    %c0_123 = arith.constant 0 : index
    %195 = vector.load %arg4[%c0_122, %c0_123] : memref<1x256xf32, #tpu.memory_space<vmem>>, vector<1x256xf32>
    %196 = vector.broadcast %195 : vector<1x256xf32> to vector<2x256xf32>
    %197 = arith.addf %194, %196 : vector<2x256xf32>
    %c0_124 = arith.constant 0 : index
    %c0_125 = arith.constant 0 : index
    %198 = vector.load %arg5[%c0_124, %c0_125] : memref<256x128xf32, #tpu.memory_space<vmem>>, vector<256x128xf32>
    %cst_126 = arith.constant dense<0.000000e+00> : vector<2x128xf32>
    %199 = tpu.matmul %197, %198, %cst_126 {dimension_numbers = #tpu.dot_dimension_numbers<[1], [0], [0], [1], [0, 0, 1, 1], [], []>} : vector<2x256xf32>, vector<256x128xf32>, vector<2x128xf32> -> vector<2x128xf32>
    %c0_127 = arith.constant 0 : index
    %c0_128 = arith.constant 0 : index
    %200 = vector.load %arg6[%c0_127, %c0_128] : memref<1x128xf32, #tpu.memory_space<vmem>>, vector<1x128xf32>
    %201 = vector.broadcast %200 : vector<1x128xf32> to vector<2x128xf32>
    %202 = arith.addf %199, %201 : vector<2x128xf32>
    %cst_129 = arith.constant dense<0xFF800000> : vector<2xf32>
    %203 = vector.multi_reduction <maximumf>, %202, %cst_129 [1] : vector<2x128xf32> to vector<2xf32>
    %204 = vector.shape_cast %203 : vector<2xf32> to vector<2x1xf32>
    %205 = vector.broadcast %204 : vector<2x1xf32> to vector<2x128xf32>
    %206 = arith.subf %202, %205 : vector<2x128xf32>
    %207 = math.exp %206 : vector<2x128xf32>
    %cst_130 = arith.constant dense<0.000000e+00> : vector<2xf32>
    %208 = vector.multi_reduction <add>, %207, %cst_130 [1] : vector<2x128xf32> to vector<2xf32>
    %209 = vector.shape_cast %208 : vector<2xf32> to vector<2x1xf32>
    %210 = math.log %209 : vector<2x1xf32>
    %211 = vector.broadcast %210 : vector<2x1xf32> to vector<2x128xf32>
    %212 = arith.subf %206, %211 : vector<2x128xf32>
    %213 = arith.index_cast %c6_i32 : i32 to index
    %c0_131 = arith.constant 0 : index
    %c0_132 = arith.constant 0 : index
    %214 = vector.load %arg7[%213, %c0_131, %c0_132] : memref<8x2x128xf32, #tpu.memory_space<vmem>>, vector<1x2x128xf32>
    %215 = vector.shape_cast %214 : vector<1x2x128xf32> to vector<2x128xf32>
    %216 = vector.shape_cast %212 : vector<2x128xf32> to vector<1x2x128xf32>
    tpu.vector_store %arg7[%213, %c0_131, %c0_132], %216 {strides = array<i32>} : memref<8x2x128xf32, #tpu.memory_space<vmem>>, vector<1x2x128xf32>,
    %217 = vector.extract_strided_slice %197 {offsets = [0, 0], sizes = [2, 128], strides = [1, 1]} : vector<2x256xf32> to vector<2x128xf32>
    %c7_i32 = arith.constant 7 : i32
    %218 = arith.index_cast %c7_i32 : i32 to index
    %c0_133 = arith.constant 0 : index
    %c0_134 = arith.constant 0 : index
    %219 = vector.load %arg0[%218, %c0_133, %c0_134] : memref<8x2x16xf32, #tpu.memory_space<vmem>>, vector<1x2x16xf32>
    %220 = vector.shape_cast %219 : vector<1x2x16xf32> to vector<2x16xf32>
    %c0_135 = arith.constant 0 : index
    %c0_136 = arith.constant 0 : index
    %221 = vector.load %arg2[%c0_135, %c0_136] : memref<16x256xf32, #tpu.memory_space<vmem>>, vector<16x256xf32>
    %cst_137 = arith.constant dense<0.000000e+00> : vector<2x256xf32>
    %222 = tpu.matmul %220, %221, %cst_137 {dimension_numbers = #tpu.dot_dimension_numbers<[1], [0], [0], [1], [0, 0, 1, 1], [], []>} : vector<2x16xf32>, vector<16x256xf32>, vector<2x256xf32> -> vector<2x256xf32>
    %c0_138 = arith.constant 0 : index
    %c0_139 = arith.constant 0 : index
    %223 = vector.load %arg3[%c0_138, %c0_139] : memref<128x256xf32, #tpu.memory_space<vmem>>, vector<128x256xf32>
    %cst_140 = arith.constant dense<0.000000e+00> : vector<2x256xf32>
    %224 = tpu.matmul %217, %223, %cst_140 {dimension_numbers = #tpu.dot_dimension_numbers<[1], [0], [0], [1], [0, 0, 1, 1], [], []>} : vector<2x128xf32>, vector<128x256xf32>, vector<2x256xf32> -> vector<2x256xf32>
    %225 = arith.addf %222, %224 : vector<2x256xf32>
    %c0_141 = arith.constant 0 : index
    %c0_142 = arith.constant 0 : index
    %226 = vector.load %arg4[%c0_141, %c0_142] : memref<1x256xf32, #tpu.memory_space<vmem>>, vector<1x256xf32>
    %227 = vector.broadcast %226 : vector<1x256xf32> to vector<2x256xf32>
    %228 = arith.addf %225, %227 : vector<2x256xf32>
    %c0_143 = arith.constant 0 : index
    %c0_144 = arith.constant 0 : index
    %229 = vector.load %arg5[%c0_143, %c0_144] : memref<256x128xf32, #tpu.memory_space<vmem>>, vector<256x128xf32>
    %cst_145 = arith.constant dense<0.000000e+00> : vector<2x128xf32>
    %230 = tpu.matmul %228, %229, %cst_145 {dimension_numbers = #tpu.dot_dimension_numbers<[1], [0], [0], [1], [0, 0, 1, 1], [], []>} : vector<2x256xf32>, vector<256x128xf32>, vector<2x128xf32> -> vector<2x128xf32>
    %c0_146 = arith.constant 0 : index
    %c0_147 = arith.constant 0 : index
    %231 = vector.load %arg6[%c0_146, %c0_147] : memref<1x128xf32, #tpu.memory_space<vmem>>, vector<1x128xf32>
    %232 = vector.broadcast %231 : vector<1x128xf32> to vector<2x128xf32>
    %233 = arith.addf %230, %232 : vector<2x128xf32>
    %cst_148 = arith.constant dense<0xFF800000> : vector<2xf32>
    %234 = vector.multi_reduction <maximumf>, %233, %cst_148 [1] : vector<2x128xf32> to vector<2xf32>
    %235 = vector.shape_cast %234 : vector<2xf32> to vector<2x1xf32>
    %236 = vector.broadcast %235 : vector<2x1xf32> to vector<2x128xf32>
    %237 = arith.subf %233, %236 : vector<2x128xf32>
    %238 = math.exp %237 : vector<2x128xf32>
    %cst_149 = arith.constant dense<0.000000e+00> : vector<2xf32>
    %239 = vector.multi_reduction <add>, %238, %cst_149 [1] : vector<2x128xf32> to vector<2xf32>
    %240 = vector.shape_cast %239 : vector<2xf32> to vector<2x1xf32>
    %241 = math.log %240 : vector<2x1xf32>
    %242 = vector.broadcast %241 : vector<2x1xf32> to vector<2x128xf32>
    %243 = arith.subf %237, %242 : vector<2x128xf32>
    %244 = arith.index_cast %c7_i32 : i32 to index
    %c0_150 = arith.constant 0 : index
    %c0_151 = arith.constant 0 : index
    %245 = vector.load %arg7[%244, %c0_150, %c0_151] : memref<8x2x128xf32, #tpu.memory_space<vmem>>, vector<1x2x128xf32>
    %246 = vector.shape_cast %245 : vector<1x2x128xf32> to vector<2x128xf32>
    %247 = vector.shape_cast %243 : vector<2x128xf32> to vector<1x2x128xf32>
    tpu.vector_store %arg7[%244, %c0_150, %c0_151], %247 {strides = array<i32>} : memref<8x2x128xf32, #tpu.memory_space<vmem>>, vector<1x2x128xf32>,
    %248 = vector.extract_strided_slice %228 {offsets = [0, 0], sizes = [2, 128], strides = [1, 1]} : vector<2x256xf32> to vector<2x128xf32>
    %c8_i32 = arith.constant 8 : i32
    %c0_152 = arith.constant 0 : index
    %c0_153 = arith.constant 0 : index
    %249 = vector.load %arg8[%c0_152, %c0_153] : memref<2x128xf32, #tpu.memory_space<vmem>>, vector<2x128xf32>
    tpu.vector_store %arg8[%c0_152, %c0_153], %248 {strides = array<i32>} : memref<2x128xf32, #tpu.memory_space<vmem>>, vector<2x128xf32>,
    return
  }
}

</mosaic_0001>

<llo_original>
// kernel: tpu_custom_call.1
$region0: #{tpu_custom_call.1}
  #allocation0 [shape = 'u32[]', space=smem, size = 0x4, offset = 0x4, fixed_abs, tag = 'smem constant byte address 0x4 - core index']
  #allocation1 [shape = 'u32[144,128]{1,0:T(1,128)}', space=vmem, size = 0x12000, scoped, tag = 'internal scratch']
  %s0 = inlined_call_operand.hbm [shape: f32[8,2,16], index: 0, kind: input, shape index: {}]
  %s1 = inlined_call_operand.hbm [shape: f32[2,128], index: 1, kind: input, shape index: {}]
  %s2 = inlined_call_operand.hbm [shape: f32[16,256], index: 2, kind: input, shape index: {}]
  %s3 = inlined_call_operand.hbm [shape: f32[128,256], index: 3, kind: input, shape index: {}]
  %s4 = inlined_call_operand.vmem [shape: f32[1,256], index: 4, kind: input, shape index: {}]
  %s5 = inlined_call_operand.hbm [shape: f32[256,128], index: 5, kind: input, shape index: {}]
  %s6 = inlined_call_operand.vmem [shape: f32[1,128], index: 6, kind: input, shape index: {}]
  %s7 = inlined_call_operand.hbm [shape: f32[8,2,128], index: 7, kind: output, shape index: {0}]
  %s8 = inlined_call_operand.hbm [shape: f32[2,128], index: 8, kind: output, shape index: {1}]
  %9 = xla_tuple %s7, %s8
  %s10 = sld [smem:[#allocation0]]
  $region66: #{tpu_custom_call.1} parent=0
    _
  %s12 = ssub.s32 1, %s10
  %s13 = scalar_select 0, %s12, %s10
  $region1: #{tpu_custom_call.1} parent=0
    #allocation2 [shape = 'u8[8192]{0}', space=vmem, size = 0x2000, scoped, tag = 'input window, operand 0, single buffered']
    #allocation3 [shape = 's32[1]{0}', space=sflag, size = 0x4, scoped, tag = 'scoped memory for tpu_custom_call.1']
    #allocation4 [shape = 's32[1]{0}', space=sflag, size = 0x4, scoped, tag = 'scoped memory for tpu_custom_call.1']
    #allocation5 [shape = 'u8[1024]{0}', space=vmem, size = 0x400, scoped, tag = 'input window, operand 1, single buffered']
    #allocation6 [shape = 's32[1]{0}', space=sflag, size = 0x4, scoped, tag = 'scoped memory for tpu_custom_call.1']
    #allocation7 [shape = 'u8[16384]{0}', space=vmem, size = 0x4000, scoped, tag = 'input window, operand 2, single buffered']
    #allocation8 [shape = 'u8[131072]{0}', space=vmem, size = 0x20000, scoped, tag = 'input window, operand 3, single buffered']
    #allocation9 [shape = 's32[1]{0}', space=sflag, size = 0x4, scoped, tag = 'scoped memory for tpu_custom_call.1']
    #allocation10 [shape = 'u8[131072]{0}', space=vmem, size = 0x20000, scoped, tag = 'input window, operand 5, single buffered']
    #allocation11 [shape = 'u8[8192]{0}', space=vmem, size = 0x2000, scoped, tag = 'output window, operand 0, single buffered']
    #allocation12 [shape = 'u8[1024]{0}', space=vmem, size = 0x400, scoped, tag = 'output window, operand 1, single buffered']
    #allocation13 [shape = 's32[1]{0}', space=sflag, size = 0x4, scoped, tag = 'scoped memory for tpu_custom_call.1']
    %14 = vsyncpa [#allocation3], 0
    %15 = vsyncpa [#allocation6], 0
    %16 = vsyncpa [#allocation9], 0
    %17 = vsyncpa [#allocation4], 0
    %18 = vsyncpa [#allocation13], 0
    // Predicated region
    $region2: #{tpu_custom_call.1} parent=1 // pred_check
      _
    $region3: #{tpu_custom_call.1} parent=1 // pred_check_branch
      %20 = sbr.rel (0) target = $region5
    $region4: #{tpu_custom_call.1} parent=1 // pred_region
      %s22 = ssub.s32 256, 256
      %23 = vsyncadd [#allocation3], %s22
      %s24 = sshll.u32 [#allocation2], 4
      %s25 = int_to_ptr.vmem [resolvable:$true] %s24
      %30 = dma.hbm_to_vmem [thread:$0]  %s0, 256, %s25, [#allocation3], 32, 32, 2
    $region5: #{tpu_custom_call.1} parent=1 // pred_fallthru
      _
    // Predicated region
    $region6: #{tpu_custom_call.1} parent=1 // pred_check
      _
    $region7: #{tpu_custom_call.1} parent=1 // pred_check_branch
      %32 = sbr.rel (0) target = $region9
    $region8: #{tpu_custom_call.1} parent=1 // pred_region
      %s34 = ssub.s32 32, 32
      %35 = vsyncadd [#allocation6], %s34
      %s37 = sshll.u32 [#allocation5], 4
      %s38 = int_to_ptr.vmem [resolvable:$true] %s37
      %40 = dma.hbm_to_vmem [thread:$0]  %s1, 32, %s38, [#allocation6]
    $region9: #{tpu_custom_call.1} parent=1 // pred_fallthru
      _
    // Predicated region
    $region10: #{tpu_custom_call.1} parent=1 // pred_check
      _
    $region11: #{tpu_custom_call.1} parent=1 // pred_check_branch
      %42 = sbr.rel (0) target = $region13
    $region12: #{tpu_custom_call.1} parent=1 // pred_region
      %s44 = ssub.s32 512, 512
      %45 = vsyncadd [#allocation6], %s44
      %s46 = sshll.u32 [#allocation7], 4
      %s47 = int_to_ptr.vmem [resolvable:$true] %s46
      %52 = dma.hbm_to_vmem [thread:$0]  %s2, 512, %s47, [#allocation6], 256, 256, 16
    $region13: #{tpu_custom_call.1} parent=1 // pred_fallthru
      _
    // Predicated region
    $region14: #{tpu_custom_call.1} parent=1 // pred_check
      _
    $region15: #{tpu_custom_call.1} parent=1 // pred_check_branch
      %54 = sbr.rel (0) target = $region17
    $region16: #{tpu_custom_call.1} parent=1 // pred_region
      %s56 = ssub.s32 4096, 4096
      %57 = vsyncadd [#allocation9], %s56
      %s58 = sshll.u32 [#allocation8], 4
      %s59 = int_to_ptr.vmem [resolvable:$true] %s58
      %64 = dma.hbm_to_vmem [thread:$0]  %s3, 4096, %s59, [#allocation9], 256, 256, 16
    $region17: #{tpu_custom_call.1} parent=1 // pred_fallthru
      _
    // Predicated region
    $region18: #{tpu_custom_call.1} parent=1 // pred_check
      _
    $region19: #{tpu_custom_call.1} parent=1 // pred_check_branch
      %66 = sbr.rel (0) target = $region21
    $region20: #{tpu_custom_call.1} parent=1 // pred_region
      _
    $region21: #{tpu_custom_call.1} parent=1 // pred_fallthru
      _
    // Predicated region
    $region22: #{tpu_custom_call.1} parent=1 // pred_check
      _
    $region23: #{tpu_custom_call.1} parent=1 // pred_check_branch
      %68 = sbr.rel (0) target = $region25
    $region24: #{tpu_custom_call.1} parent=1 // pred_region
      %s70 = ssub.s32 4096, 4096
      %71 = vsyncadd [#allocation9], %s70
      %s72 = sshll.u32 [#allocation10], 4
      %s73 = int_to_ptr.vmem [resolvable:$true] %s72
      %78 = dma.hbm_to_vmem [thread:$0]  %s5, 4096, %s73, [#allocation9], 128, 128, 8
    $region25: #{tpu_custom_call.1} parent=1 // pred_fallthru
      _
    // Predicated region
    $region26: #{tpu_custom_call.1} parent=1 // pred_check
      _
    $region27: #{tpu_custom_call.1} parent=1 // pred_check_branch
      %80 = sbr.rel (0) target = $region29
    $region28: #{tpu_custom_call.1} parent=1 // pred_region
      _
    $region29: #{tpu_custom_call.1} parent=1 // pred_fallthru
      _
    // Predicated region
    $region30: #{tpu_custom_call.1} parent=1 // pred_check
      _
    $region31: #{tpu_custom_call.1} parent=1 // pred_check_branch
      %82 = sbr.rel (0) target = $region33
    $region32: #{tpu_custom_call.1} parent=1 // pred_region
      %83 = dma.done [#allocation3], 256
    $region33: #{tpu_custom_call.1} parent=1 // pred_fallthru
      _
    // Predicated region
    $region34: #{tpu_custom_call.1} parent=1 // pred_check
      _
    $region35: #{tpu_custom_call.1} parent=1 // pred_check_branch
      %85 = sbr.rel (0) target = $region37
    $region36: #{tpu_custom_call.1} parent=1 // pred_region
      %86 = dma.done [#allocation6], 32
    $region37: #{tpu_custom_call.1} parent=1 // pred_fallthru
      _
    // Predicated region
    $region38: #{tpu_custom_call.1} parent=1 // pred_check
      _
    $region39: #{tpu_custom_call.1} parent=1 // pred_check_branch
      %88 = sbr.rel (0) target = $region41
    $region40: #{tpu_custom_call.1} parent=1 // pred_region
      %89 = dma.done [#allocation6], 512
    $region41: #{tpu_custom_call.1} parent=1 // pred_fallthru
      _
    // Predicated region
    $region42: #{tpu_custom_call.1} parent=1 // pred_check
      _
    $region43: #{tpu_custom_call.1} parent=1 // pred_check_branch
      %91 = sbr.rel (0) target = $region45
    $region44: #{tpu_custom_call.1} parent=1 // pred_region
      %92 = dma.done [#allocation9], 4096
    $region45: #{tpu_custom_call.1} parent=1 // pred_fallthru
      _
    // Predicated region
    $region46: #{tpu_custom_call.1} parent=1 // pred_check
      _
    $region47: #{tpu_custom_call.1} parent=1 // pred_check_branch
      %94 = sbr.rel (0) target = $region49
    $region48: #{tpu_custom_call.1} parent=1 // pred_region
      %95 = dma.done [#allocation9], 4096
    $region49: #{tpu_custom_call.1} parent=1 // pred_fallthru
      _
    %v96 = vld [vmem:[#allocation5] sm:$0x3]
    %v97 = vld [vmem:[#allocation2] sm:$0x3]
    %v98 = vld [vmem:[#allocation7] sm:$0xff]
    %v99 = vld [vmem:[#allocation7 + $0x8] sm:$0xff]
    %v100 = vld [vmem:[#allocation7 + $0x10] sm:$0xff]
    %v101 = vld [vmem:[#allocation7 + $0x18] sm:$0xff]
    %v102 = vld [vmem:[#allocation8] sm:$0xff]
    %v103 = vld [vmem:[#allocation8 + $0x8] sm:$0xff]
    %v104 = vld [vmem:[#allocation8 + $0x10] sm:$0xff]
    %v105 = vld [vmem:[#allocation8 + $0x18] sm:$0xff]
    %v106 = vld [vmem:[#allocation8 + $0x20] sm:$0xff]
    %v107 = vld [vmem:[#allocation8 + $0x28] sm:$0xff]
    %v108 = vld [vmem:[#allocation8 + $0x30] sm:$0xff]
    %v109 = vld [vmem:[#allocation8 + $0x38] sm:$0xff]
    %v110 = vld [vmem:[#allocation8 + $0x40] sm:$0xff]
    %v111 = vld [vmem:[#allocation8 + $0x48] sm:$0xff]
    %v112 = vld [vmem:[#allocation8 + $0x50] sm:$0xff]
    %v113 = vld [vmem:[#allocation8 + $0x58] sm:$0xff]
    %v114 = vld [vmem:[#allocation8 + $0x60] sm:$0xff]
    %v115 = vld [vmem:[#allocation8 + $0x68] sm:$0xff]
    %v116 = vld [vmem:[#allocation8 + $0x70] sm:$0xff]
    %v117 = vld [vmem:[#allocation8 + $0x78] sm:$0xff]
    %v118 = vld [vmem:[#allocation8 + $0x80] sm:$0xff]
    %v119 = vld [vmem:[#allocation8 + $0x88] sm:$0xff]
    %v120 = vld [vmem:[#allocation8 + $0x90] sm:$0xff]
    %v121 = vld [vmem:[#allocation8 + $0x98] sm:$0xff]
    %v122 = vld [vmem:[#allocation8 + $0xa0] sm:$0xff]
    %v123 = vld [vmem:[#allocation8 + $0xa8] sm:$0xff]
    %v124 = vld [vmem:[#allocation8 + $0xb0] sm:$0xff]
    %v125 = vld [vmem:[#allocation8 + $0xb8] sm:$0xff]
    %v126 = vld [vmem:[#allocation8 + $0xc0] sm:$0xff]
    %v127 = vld [vmem:[#allocation8 + $0xc8] sm:$0xff]
    %v128 = vld [vmem:[#allocation8 + $0xd0] sm:$0xff]
    %v129 = vld [vmem:[#allocation8 + $0xd8] sm:$0xff]
    %v130 = vld [vmem:[#allocation8 + $0xe0] sm:$0xff]
    %v131 = vld [vmem:[#allocation8 + $0xe8] sm:$0xff]
    %v132 = vld [vmem:[#allocation8 + $0xf0] sm:$0xff]
    %v133 = vld [vmem:[#allocation8 + $0xf8] sm:$0xff]
    %134 = vmatprep.subr.mxu0 %v133
    %135 = vmatpush1.msra.mxu0 %v132
    %136 = vmatprep.subr.mxu0 %v131
    %137 = vmatpush1.msra.mxu0 %v130
    %138 = vmatprep.subr.mxu0 %v129
    %139 = vmatpush1.msra.mxu0 %v128
    %140 = vmatprep.subr.mxu0 %v127
    %141 = vmatpush1.msra.mxu0 %v126
    %142 = vmatprep.subr.mxu0 %v125
    %143 = vmatpush1.msra.mxu0 %v124
    %144 = vmatprep.subr.mxu0 %v123
    %145 = vmatpush1.msra.mxu0 %v122
    %146 = vmatprep.subr.mxu0 %v121
    %147 = vmatpush1.msra.mxu0 %v120
    %148 = vmatprep.subr.mxu0 %v119
    %149 = vmatpush1.msra.mxu0 %v118
    %150 = vmatprep.subr.mxu0 %v117
    %151 = vmatpush1.msra.mxu0 %v116
    %152 = vmatprep.subr.mxu0 %v115
    %153 = vmatpush1.msra.mxu0 %v114
    %154 = vmatprep.subr.mxu0 %v113
    %155 = vmatpush1.msra.mxu0 %v112
    %156 = vmatprep.subr.mxu0 %v111
    %157 = vmatpush1.msra.mxu0 %v110
    %158 = vmatprep.subr.mxu0 %v109
    %159 = vmatpush1.msra.mxu0 %v108
    %160 = vmatprep.subr.mxu0 %v107
    %161 = vmatpush1.msra.mxu0 %v106
    %162 = vmatprep.subr.mxu0 %v105
    %163 = vmatpush1.msra.mxu0 %v104
    %164 = vmatprep.subr.mxu0 %v103
    %165 = vmatpush1.msra.mxu0 %v102
    %166 = vmatprep.subr.mxu0 0.0
    %167 = vmatpush2.msra.mxu0 0.0
    %168 = vmatprep.subr.mxu0 0.0
    %169 = vmatpush2.msra.mxu0 0.0
    %170 = vmatprep.subr.mxu0 0.0
    %171 = vmatpush2.msra.mxu0 0.0
    %172 = vmatprep.subr.mxu0 0.0
    %173 = vmatpush2.msra.mxu0 0.0
    %174 = vmatprep.subr.mxu0 0.0
    %175 = vmatpush2.msra.mxu0 0.0
    %176 = vmatprep.subr.mxu0 0.0
    %177 = vmatpush2.msra.mxu0 0.0
    %178 = vmatprep.subr.mxu0 0.0
    %179 = vmatpush2.msra.mxu0 0.0
    %180 = vmatprep.subr.mxu0 0.0
    %181 = vmatpush2.msra.mxu0 0.0
    %182 = vmatprep.subr.mxu0 0.0
    %183 = vmatpush2.msra.mxu0 0.0
    %184 = vmatprep.subr.mxu0 0.0
    %185 = vmatpush2.msra.mxu0 0.0
    %186 = vmatprep.subr.mxu0 0.0
    %187 = vmatpush2.msra.mxu0 0.0
    %188 = vmatprep.subr.mxu0 0.0
    %189 = vmatpush2.msra.mxu0 0.0
    %190 = vmatprep.subr.mxu0 0.0
    %191 = vmatpush2.msra.mxu0 0.0
    %192 = vmatprep.subr.mxu0 0.0
    %193 = vmatpush2.msra.mxu0 0.0
    %194 = vmatprep.subr.mxu0 0.0
    %195 = vmatpush2.msra.mxu0 0.0
    %196 = vmatprep.subr.mxu0 0.0
    %197 = vmatpush2.msra.mxu0 0.0
    %198 = vmatprep.mubr.f32.mxu0 0.0
    %199 = vmatmul.mubr.f32.gmra.mxu0 %v96
    %v200 = vpop.f32.mrf.mxu0
    %v201 = vadd.f32 0.0, %v200
    %v202 = vpop.f32.mrf.mxu0
    %v203 = vadd.f32 0.0, %v202
    %204 = vdwg.mxu0
    %vm205 = vcmask 130048
    %v207 = vsel %vm205, %v97, 0
    %209 = vmatprep.subr.mxu0 0.0
    %210 = vmatpush1.msra.mxu0 0.0
    %211 = vmatprep.subr.mxu0 0.0
    %212 = vmatpush1.msra.mxu0 0.0
    %213 = vmatprep.subr.mxu0 0.0
    %214 = vmatpush1.msra.mxu0 0.0
    %215 = vmatprep.subr.mxu0 0.0
    %216 = vmatpush1.msra.mxu0 0.0
    %217 = vmatprep.subr.mxu0 0.0
    %218 = vmatpush1.msra.mxu0 0.0
    %219 = vmatprep.subr.mxu0 0.0
    %220 = vmatpush1.msra.mxu0 0.0
    %221 = vmatprep.subr.mxu0 0.0
    %222 = vmatpush1.msra.mxu0 0.0
    %223 = vmatprep.subr.mxu0 0.0
    %224 = vmatpush1.msra.mxu0 0.0
    %225 = vmatprep.subr.mxu0 0.0
    %226 = vmatpush1.msra.mxu0 0.0
    %227 = vmatprep.subr.mxu0 0.0
    %228 = vmatpush1.msra.mxu0 0.0
    %229 = vmatprep.subr.mxu0 0.0
    %230 = vmatpush1.msra.mxu0 0.0
    %231 = vmatprep.subr.mxu0 0.0
    %232 = vmatpush1.msra.mxu0 0.0
    %233 = vmatprep.subr.mxu0 0.0
    %234 = vmatpush1.msra.mxu0 0.0
    %235 = vmatprep.subr.mxu0 0.0
    %236 = vmatpush1.msra.mxu0 0.0
    %237 = vmatprep.subr.mxu0 %v101
    %238 = vmatpush1.msra.mxu0 %v100
    %239 = vmatprep.subr.mxu0 %v99
    %240 = vmatpush1.msra.mxu0 %v98
    %241 = vmatprep.subr.mxu0 0.0
    %242 = vmatpush2.msra.mxu0 0.0
    %243 = vmatprep.subr.mxu0 0.0
    %244 = vmatpush2.msra.mxu0 0.0
    %245 = vmatprep.subr.mxu0 0.0
    %246 = vmatpush2.msra.mxu0 0.0
    %247 = vmatprep.subr.mxu0 0.0
    %248 = vmatpush2.msra.mxu0 0.0
    %249 = vmatprep.subr.mxu0 0.0
    %250 = vmatpush2.msra.mxu0 0.0
    %251 = vmatprep.subr.mxu0 0.0
    %252 = vmatpush2.msra.mxu0 0.0
    %253 = vmatprep.subr.mxu0 0.0
    %254 = vmatpush2.msra.mxu0 0.0
    %255 = vmatprep.subr.mxu0 0.0
    %256 = vmatpush2.msra.mxu0 0.0
    %257 = vmatprep.subr.mxu0 0.0
    %258 = vmatpush2.msra.mxu0 0.0
    %259 = vmatprep.subr.mxu0 0.0
    %260 = vmatpush2.msra.mxu0 0.0
    %261 = vmatprep.subr.mxu0 0.0
    %262 = vmatpush2.msra.mxu0 0.0
    %263 = vmatprep.subr.mxu0 0.0
    %264 = vmatpush2.msra.mxu0 0.0
    %265 = vmatprep.subr.mxu0 0.0
    %266 = vmatpush2.msra.mxu0 0.0
    %267 = vmatprep.subr.mxu0 0.0
    %268 = vmatpush2.msra.mxu0 0.0
    %269 = vmatprep.subr.mxu0 0.0
    %270 = vmatpush2.msra.mxu0 0.0
    %271 = vmatprep.subr.mxu0 0.0
    %272 = vmatpush2.msra.mxu0 0.0
    %273 = vmatprep.mubr.f32.mxu0 0.0
    %274 = vmatmul.mubr.f32.gmra.mxu0 %v207
    %v275 = vpop.f32.mrf.mxu0
    %v276 = vadd.f32 %v201, %v275
    %v277 = vpop.f32.mrf.mxu0
    %v278 = vadd.f32 %v203, %v277
    %279 = vdwg.mxu0
    %v280 = vld [vmem:[%s4] sm:$0x3]
    %v282 = vlaneseq
    %v283 = vshrl.u32 %v282, 7
    %v284 = vsub.s32 0, %v283
    %v285 = vrot.slane %v280, %v284
    %v286 = vlaneseq
    %v287 = vshrl.u32 %v286, 7
    %v288 = vsub.s32 1, %v287
    %v289 = vrot.slane %v280, %v288
    %v292 = vadd.f32 %v276, %v285
    %v293 = vadd.f32 %v278, %v289
    %v294 = vld [vmem:[#allocation10] sm:$0xff]
    %v295 = vld [vmem:[#allocation10 + $0x8] sm:$0xff]
    %v296 = vld [vmem:[#allocation10 + $0x10] sm:$0xff]
    %v297 = vld [vmem:[#allocation10 + $0x18] sm:$0xff]
    %v298 = vld [vmem:[#allocation10 + $0x20] sm:$0xff]
    %v299 = vld [vmem:[#allocation10 + $0x28] sm:$0xff]
    %v300 = vld [vmem:[#allocation10 + $0x30] sm:$0xff]
    %v301 = vld [vmem:[#allocation10 + $0x38] sm:$0xff]
    %v302 = vld [vmem:[#allocation10 + $0x40] sm:$0xff]
    %v303 = vld [vmem:[#allocation10 + $0x48] sm:$0xff]
    %v304 = vld [vmem:[#allocation10 + $0x50] sm:$0xff]
    %v305 = vld [vmem:[#allocation10 + $0x58] sm:$0xff]
    %v306 = vld [vmem:[#allocation10 + $0x60] sm:$0xff]
    %v307 = vld [vmem:[#allocation10 + $0x68] sm:$0xff]
    %v308 = vld [vmem:[#allocation10 + $0x70] sm:$0xff]
    %v309 = vld [vmem:[#allocation10 + $0x78] sm:$0xff]
    %v310 = vld [vmem:[#allocation10 + $0x80] sm:$0xff]
    %v311 = vld [vmem:[#allocation10 + $0x88] sm:$0xff]
    %v312 = vld [vmem:[#allocation10 + $0x90] sm:$0xff]
    %v313 = vld [vmem:[#allocation10 + $0x98] sm:$0xff]
    %v314 = vld [vmem:[#allocation10 + $0xa0] sm:$0xff]
    %v315 = vld [vmem:[#allocation10 + $0xa8] sm:$0xff]
    %v316 = vld [vmem:[#allocation10 + $0xb0] sm:$0xff]
    %v317 = vld [vmem:[#allocation10 + $0xb8] sm:$0xff]
    %v318 = vld [vmem:[#allocation10 + $0xc0] sm:$0xff]
    %v319 = vld [vmem:[#allocation10 + $0xc8] sm:$0xff]
    %v320 = vld [vmem:[#allocation10 + $0xd0] sm:$0xff]
    %v321 = vld [vmem:[#allocation10 + $0xd8] sm:$0xff]
    %v322 = vld [vmem:[#allocation10 + $0xe0] sm:$0xff]
    %v323 = vld [vmem:[#allocation10 + $0xe8] sm:$0xff]
    %v324 = vld [vmem:[#allocation10 + $0xf0] sm:$0xff]
    %v325 = vld [vmem:[#allocation10 + $0xf8] sm:$0xff]
    %v326 = vld [vmem:[%s6] sm:$0x1]
    %v328 = vlaneseq
    %v329 = vshrl.u32 %v328, 7
    %v330 = vsub.s32 0, %v329
    %v331 = vrot.slane %v326, %v330
    %333 = vmatprep.subr.mxu0 0.0
    %334 = vmatpush1.msra.mxu0 %v309
    %335 = vmatprep.subr.mxu0 0.0
    %336 = vmatpush1.msra.mxu0 %v308
    %337 = vmatprep.subr.mxu0 0.0
    %338 = vmatpush1.msra.mxu0 %v307
    %339 = vmatprep.subr.mxu0 0.0
    %340 = vmatpush1.msra.mxu0 %v306
    %341 = vmatprep.subr.mxu0 0.0
    %342 = vmatpush1.msra.mxu0 %v305
    %343 = vmatprep.subr.mxu0 0.0
    %344 = vmatpush1.msra.mxu0 %v304
    %345 = vmatprep.subr.mxu0 0.0
    %346 = vmatpush1.msra.mxu0 %v303
    %347 = vmatprep.subr.mxu0 0.0
    %348 = vmatpush1.msra.mxu0 %v302
    %349 = vmatprep.subr.mxu0 0.0
    %350 = vmatpush1.msra.mxu0 %v301
    %351 = vmatprep.subr.mxu0 0.0
    %352 = vmatpush1.msra.mxu0 %v300
    %353 = vmatprep.subr.mxu0 0.0
    %354 = vmatpush1.msra.mxu0 %v299
    %355 = vmatprep.subr.mxu0 0.0
    %356 = vmatpush1.msra.mxu0 %v298
    %357 = vmatprep.subr.mxu0 0.0
    %358 = vmatpush1.msra.mxu0 %v297
    %359 = vmatprep.subr.mxu0 0.0
    %360 = vmatpush1.msra.mxu0 %v296
    %361 = vmatprep.subr.mxu0 0.0
    %362 = vmatpush1.msra.mxu0 %v295
    %363 = vmatprep.subr.mxu0 0.0
    %364 = vmatpush1.msra.mxu0 %v294
    %365 = vmatprep.subr.mxu0 0.0
    %366 = vmatpush2.msra.mxu0 %v325
    %367 = vmatprep.subr.mxu0 0.0
    %368 = vmatpush2.msra.mxu0 %v324
    %369 = vmatprep.subr.mxu0 0.0
    %370 = vmatpush2.msra.mxu0 %v323
    %371 = vmatprep.subr.mxu0 0.0
    %372 = vmatpush2.msra.mxu0 %v322
    %373 = vmatprep.subr.mxu0 0.0
    %374 = vmatpush2.msra.mxu0 %v321
    %375 = vmatprep.subr.mxu0 0.0
    %376 = vmatpush2.msra.mxu0 %v320
    %377 = vmatprep.subr.mxu0 0.0
    %378 = vmatpush2.msra.mxu0 %v319
    %379 = vmatprep.subr.mxu0 0.0
    %380 = vmatpush2.msra.mxu0 %v318
    %381 = vmatprep.subr.mxu0 0.0
    %382 = vmatpush2.msra.mxu0 %v317
    %383 = vmatprep.subr.mxu0 0.0
    %384 = vmatpush2.msra.mxu0 %v316
    %385 = vmatprep.subr.mxu0 0.0
    %386 = vmatpush2.msra.mxu0 %v315
    %387 = vmatprep.subr.mxu0 0.0
    %388 = vmatpush2.msra.mxu0 %v314
    %389 = vmatprep.subr.mxu0 0.0
    %390 = vmatpush2.msra.mxu0 %v313
    %391 = vmatprep.subr.mxu0 0.0
    %392 = vmatpush2.msra.mxu0 %v312
    %393 = vmatprep.subr.mxu0 0.0
    %394 = vmatpush2.msra.mxu0 %v311
    %395 = vmatprep.subr.mxu0 0.0
    %396 = vmatpush2.msra.mxu0 %v310
    %397 = vmatprep.mubr.f32.mxu0 %v293
    %398 = vmatmul.mubr.f32.gmra.mxu0 %v292
    %v399 = vpop.f32.mrf.mxu0
    %v400 = vadd.f32 %v331, %v399
    %v401 = vpop.f32.mrf.mxu0
    %402 = vdwg.mxu0
    %vm403 = vcmask 1041408
    %v404 = vsel %vm403, %v400, -inf
    %405 = vmax.xlane.f32.xlu0 %v404
    %v406 = vpop.xlane.xlu0 %405
    %v407 = vsub.f32 %v400, %v406
    %v408 = vmul.f32 %v407, 1.442695
    %v409 = vpow.pop %v408
    %v410 = vsel %vm403, %v409, 0.0
    %411 = vadd.xlane.f32.xlu0 %v410
    %v412 = vpop.xlane.xlu0 %411
    %v413 = vlog2.pop %v412
    %v414 = vmul.f32 %v413, 0.6931472
    %v415 = vsub.f32 %v407, %v414
    %416 = vst [vmem:[#allocation11] sm:$0x3] %v415
    %s417 = scalar_lea.vmem [#allocation2], 2
    %v418 = vld [vmem:[%s417] sm:$0x3]
    %v419 = vld [vmem:[#allocation7] sm:$0xff]
    %v420 = vld [vmem:[#allocation7 + $0x8] sm:$0xff]
    %v421 = vld [vmem:[#allocation7 + $0x10] sm:$0xff]
    %v422 = vld [vmem:[#allocation7 + $0x18] sm:$0xff]
    %v423 = vld [vmem:[#allocation8] sm:$0xff]
    %v424 = vld [vmem:[#allocation8 + $0x8] sm:$0xff]
    %v425 = vld [vmem:[#allocation8 + $0x10] sm:$0xff]
    %v426 = vld [vmem:[#allocation8 + $0x18] sm:$0xff]
    %v427 = vld [vmem:[#allocation8 + $0x20] sm:$0xff]
    %v428 = vld [vmem:[#allocation8 + $0x28] sm:$0xff]
    %v429 = vld [vmem:[#allocation8 + $0x30] sm:$0xff]
    %v430 = vld [vmem:[#allocation8 + $0x38] sm:$0xff]
    %v431 = vld [vmem:[#allocation8 + $0x40] sm:$0xff]
    %v432 = vld [vmem:[#allocation8 + $0x48] sm:$0xff]
    %v433 = vld [vmem:[#allocation8 + $0x50] sm:$0xff]
    %v434 = vld [vmem:[#allocation8 + $0x58] sm:$0xff]
    %v435 = vld [vmem:[#allocation8 + $0x60] sm:$0xff]
    %v436 = vld [vmem:[#allocation8 + $0x68] sm:$0xff]
    %v437 = vld [vmem:[#allocation8 + $0x70] sm:$0xff]
    %v438 = vld [vmem:[#allocation8 + $0x78] sm:$0xff]
    %v439 = vld [vmem:[#allocation8 + $0x80] sm:$0xff]
    %v440 = vld [vmem:[#allocation8 + $0x88] sm:$0xff]
    %v441 = vld [vmem:[#allocation8 + $0x90] sm:$0xff]
    %v442 = vld [vmem:[#allocation8 + $0x98] sm:$0xff]
    %v443 = vld [vmem:[#allocation8 + $0xa0] sm:$0xff]
    %v444 = vld [vmem:[#allocation8 + $0xa8] sm:$0xff]
    %v445 = vld [vmem:[#allocation8 + $0xb0] sm:$0xff]
    %v446 = vld [vmem:[#allocation8 + $0xb8] sm:$0xff]
    %v447 = vld [vmem:[#allocation8 + $0xc0] sm:$0xff]
    %v448 = vld [vmem:[#allocation8 + $0xc8] sm:$0xff]
    %v449 = vld [vmem:[#allocation8 + $0xd0] sm:$0xff]
    %v450 = vld [vmem:[#allocation8 + $0xd8] sm:$0xff]
    %v451 = vld [vmem:[#allocation8 + $0xe0] sm:$0xff]
    %v452 = vld [vmem:[#allocation8 + $0xe8] sm:$0xff]
    %v453 = vld [vmem:[#allocation8 + $0xf0] sm:$0xff]
    %v454 = vld [vmem:[#allocation8 + $0xf8] sm:$0xff]
    %455 = vmatprep.subr.mxu0 %v454
    %456 = vmatpush1.msra.mxu0 %v453
    %457 = vmatprep.subr.mxu0 %v452
    %458 = vmatpush1.msra.mxu0 %v451
    %459 = vmatprep.subr.mxu0 %v450
    %460 = vmatpush1.msra.mxu0 %v449
    %461 = vmatprep.subr.mxu0 %v448
    %462 = vmatpush1.msra.mxu0 %v447
    %463 = vmatprep.subr.mxu0 %v446
    %464 = vmatpush1.msra.mxu0 %v445
    %465 = vmatprep.subr.mxu0 %v444
    %466 = vmatpush1.msra.mxu0 %v443
    %467 = vmatprep.subr.mxu0 %v442
    %468 = vmatpush1.msra.mxu0 %v441
    %469 = vmatprep.subr.mxu0 %v440
    %470 = vmatpush1.msra.mxu0 %v439
    %471 = vmatprep.subr.mxu0 %v438
    %472 = vmatpush1.msra.mxu0 %v437
    %473 = vmatprep.subr.mxu0 %v436
    %474 = vmatpush1.msra.mxu0 %v435
    %475 = vmatprep.subr.mxu0 %v434
    %476 = vmatpush1.msra.mxu0 %v433
    %477 = vmatprep.subr.mxu0 %v432
    %478 = vmatpush1.msra.mxu0 %v431
    %479 = vmatprep.subr.mxu0 %v430
    %480 = vmatpush1.msra.mxu0 %v429
    %481 = vmatprep.subr.mxu0 %v428
    %482 = vmatpush1.msra.mxu0 %v427
    %483 = vmatprep.subr.mxu0 %v426
    %484 = vmatpush1.msra.mxu0 %v425
    %485 = vmatprep.subr.mxu0 %v424
    %486 = vmatpush1.msra.mxu0 %v423
    %487 = vmatprep.subr.mxu0 0.0
    %488 = vmatpush2.msra.mxu0 0.0
    %489 = vmatprep.subr.mxu0 0.0
    %490 = vmatpush2.msra.mxu0 0.0
    %491 = vmatprep.subr.mxu0 0.0
    %492 = vmatpush2.msra.mxu0 0.0
    %493 = vmatprep.subr.mxu0 0.0
    %494 = vmatpush2.msra.mxu0 0.0
    %495 = vmatprep.subr.mxu0 0.0
    %496 = vmatpush2.msra.mxu0 0.0
    %497 = vmatprep.subr.mxu0 0.0
    %498 = vmatpush2.msra.mxu0 0.0
    %499 = vmatprep.subr.mxu0 0.0
    %500 = vmatpush2.msra.mxu0 0.0
    %501 = vmatprep.subr.mxu0 0.0
    %502 = vmatpush2.msra.mxu0 0.0
    %503 = vmatprep.subr.mxu0 0.0
    %504 = vmatpush2.msra.mxu0 0.0
    %505 = vmatprep.subr.mxu0 0.0
    %506 = vmatpush2.msra.mxu0 0.0
    %507 = vmatprep.subr.mxu0 0.0
    %508 = vmatpush2.msra.mxu0 0.0
    %509 = vmatprep.subr.mxu0 0.0
    %510 = vmatpush2.msra.mxu0 0.0
    %511 = vmatprep.subr.mxu0 0.0
    %512 = vmatpush2.msra.mxu0 0.0
    %513 = vmatprep.subr.mxu0 0.0
    %514 = vmatpush2.msra.mxu0 0.0
    %515 = vmatprep.subr.mxu0 0.0
    %516 = vmatpush2.msra.mxu0 0.0
    %517 = vmatprep.subr.mxu0 0.0
    %518 = vmatpush2.msra.mxu0 0.0
    %519 = vmatprep.mubr.f32.mxu0 0.0
    %520 = vmatmul.mubr.f32.gmra.mxu0 %v292
    %v521 = vpop.f32.mrf.mxu0
    %v522 = vadd.f32 0.0, %v521
    %v523 = vpop.f32.mrf.mxu0
    %v524 = vadd.f32 0.0, %v523
    %525 = vdwg.mxu0
    %v527 = vsel %vm205, %v418, 0
    %529 = vmatprep.subr.mxu0 0.0
    %530 = vmatpush1.msra.mxu0 0.0
    %531 = vmatprep.subr.mxu0 0.0
    %532 = vmatpush1.msra.mxu0 0.0
    %533 = vmatprep.subr.mxu0 0.0
    %534 = vmatpush1.msra.mxu0 0.0
    %535 = vmatprep.subr.mxu0 0.0
    %536 = vmatpush1.msra.mxu0 0.0
    %537 = vmatprep.subr.mxu0 0.0
    %538 = vmatpush1.msra.mxu0 0.0
    %539 = vmatprep.subr.mxu0 0.0
    %540 = vmatpush1.msra.mxu0 0.0
    %541 = vmatprep.subr.mxu0 0.0
    %542 = vmatpush1.msra.mxu0 0.0
    %543 = vmatprep.subr.mxu0 0.0
    %544 = vmatpush1.msra.mxu0 0.0
    %545 = vmatprep.subr.mxu0 0.0
    %546 = vmatpush1.msra.mxu0 0.0
    %547 = vmatprep.subr.mxu0 0.0
    %548 = vmatpush1.msra.mxu0 0.0
    %549 = vmatprep.subr.mxu0 0.0
    %550 = vmatpush1.msra.mxu0 0.0
    %551 = vmatprep.subr.mxu0 0.0
    %552 = vmatpush1.msra.mxu0 0.0
    %553 = vmatprep.subr.mxu0 0.0
    %554 = vmatpush1.msra.mxu0 0.0
    %555 = vmatprep.subr.mxu0 0.0
    %556 = vmatpush1.msra.mxu0 0.0
    %557 = vmatprep.subr.mxu0 %v422
    %558 = vmatpush1.msra.mxu0 %v421
    %559 = vmatprep.subr.mxu0 %v420
    %560 = vmatpush1.msra.mxu0 %v419
    %561 = vmatprep.subr.mxu0 0.0
    %562 = vmatpush2.msra.mxu0 0.0
    %563 = vmatprep.subr.mxu0 0.0
    %564 = vmatpush2.msra.mxu0 0.0
    %565 = vmatprep.subr.mxu0 0.0
    %566 = vmatpush2.msra.mxu0 0.0
    %567 = vmatprep.subr.mxu0 0.0
    %568 = vmatpush2.msra.mxu0 0.0
    %569 = vmatprep.subr.mxu0 0.0
    %570 = vmatpush2.msra.mxu0 0.0
    %571 = vmatprep.subr.mxu0 0.0
    %572 = vmatpush2.msra.mxu0 0.0
    %573 = vmatprep.subr.mxu0 0.0
    %574 = vmatpush2.msra.mxu0 0.0
    %575 = vmatprep.subr.mxu0 0.0
    %576 = vmatpush2.msra.mxu0 0.0
    %577 = vmatprep.subr.mxu0 0.0
    %578 = vmatpush2.msra.mxu0 0.0
    %579 = vmatprep.subr.mxu0 0.0
    %580 = vmatpush2.msra.mxu0 0.0
    %581 = vmatprep.subr.mxu0 0.0
    %582 = vmatpush2.msra.mxu0 0.0
    %583 = vmatprep.subr.mxu0 0.0
    %584 = vmatpush2.msra.mxu0 0.0
    %585 = vmatprep.subr.mxu0 0.0
    %586 = vmatpush2.msra.mxu0 0.0
    %587 = vmatprep.subr.mxu0 0.0
    %588 = vmatpush2.msra.mxu0 0.0
    %589 = vmatprep.subr.mxu0 0.0
    %590 = vmatpush2.msra.mxu0 0.0
    %591 = vmatprep.subr.mxu0 0.0
    %592 = vmatpush2.msra.mxu0 0.0
    %593 = vmatprep.mubr.f32.mxu0 0.0
    %594 = vmatmul.mubr.f32.gmra.mxu0 %v527
    %v595 = vpop.f32.mrf.mxu0
    %v596 = vadd.f32 %v522, %v595
    %v597 = vpop.f32.mrf.mxu0
    %v598 = vadd.f32 %v524, %v597
    %599 = vdwg.mxu0
    %v600 = vld [vmem:[%s4] sm:$0x3]
    %v602 = vlaneseq
    %v603 = vshrl.u32 %v602, 7
    %v604 = vsub.s32 0, %v603
    %v605 = vrot.slane %v600, %v604
    %v606 = vlaneseq
    %v607 = vshrl.u32 %v606, 7
    %v608 = vsub.s32 1, %v607
    %v609 = vrot.slane %v600, %v608
    %v612 = vadd.f32 %v596, %v605
    %v613 = vadd.f32 %v598, %v609
    %v614 = vld [vmem:[#allocation10] sm:$0xff]
    %v615 = vld [vmem:[#allocation10 + $0x8] sm:$0xff]
    %v616 = vld [vmem:[#allocation10 + $0x10] sm:$0xff]
    %v617 = vld [vmem:[#allocation10 + $0x18] sm:$0xff]
    %v618 = vld [vmem:[#allocation10 + $0x20] sm:$0xff]
    %v619 = vld [vmem:[#allocation10 + $0x28] sm:$0xff]
    %v620 = vld [vmem:[#allocation10 + $0x30] sm:$0xff]
    %v621 = vld [vmem:[#allocation10 + $0x38] sm:$0xff]
    %v622 = vld [vmem:[#allocation10 + $0x40] sm:$0xff]
    %v623 = vld [vmem:[#allocation10 + $0x48] sm:$0xff]
    %v624 = vld [vmem:[#allocation10 + $0x50] sm:$0xff]
    %v625 = vld [vmem:[#allocation10 + $0x58] sm:$0xff]
    %v626 = vld [vmem:[#allocation10 + $0x60] sm:$0xff]
    %v627 = vld [vmem:[#allocation10 + $0x68] sm:$0xff]
    %v628 = vld [vmem:[#allocation10 + $0x70] sm:$0xff]
    %v629 = vld [vmem:[#allocation10 + $0x78] sm:$0xff]
    %v630 = vld [vmem:[#allocation10 + $0x80] sm:$0xff]
    %v631 = vld [vmem:[#allocation10 + $0x88] sm:$0xff]
    %v632 = vld [vmem:[#allocation10 + $0x90] sm:$0xff]
    %v633 = vld [vmem:[#allocation10 + $0x98] sm:$0xff]
    %v634 = vld [vmem:[#allocation10 + $0xa0] sm:$0xff]
    %v635 = vld [vmem:[#allocation10 + $0xa8] sm:$0xff]
    %v636 = vld [vmem:[#allocation10 + $0xb0] sm:$0xff]
    %v637 = vld [vmem:[#allocation10 + $0xb8] sm:$0xff]
    %v638 = vld [vmem:[#allocation10 + $0xc0] sm:$0xff]
    %v639 = vld [vmem:[#allocation10 + $0xc8] sm:$0xff]
    %v640 = vld [vmem:[#allocation10 + $0xd0] sm:$0xff]
    %v641 = vld [vmem:[#allocation10 + $0xd8] sm:$0xff]
    %v642 = vld [vmem:[#allocation10 + $0xe0] sm:$0xff]
    %v643 = vld [vmem:[#allocation10 + $0xe8] sm:$0xff]
    %v644 = vld [vmem:[#allocation10 + $0xf0] sm:$0xff]
    %v645 = vld [vmem:[#allocation10 + $0xf8] sm:$0xff]
    %v646 = vld [vmem:[%s6] sm:$0x1]
    %v648 = vlaneseq
    %v649 = vshrl.u32 %v648, 7
    %v650 = vsub.s32 0, %v649
    %v651 = vrot.slane %v646, %v650
    %653 = vmatprep.subr.mxu0 0.0
    %654 = vmatpush1.msra.mxu0 %v629
    %655 = vmatprep.subr.mxu0 0.0
    %656 = vmatpush1.msra.mxu0 %v628
    %657 = vmatprep.subr.mxu0 0.0
    %658 = vmatpush1.msra.mxu0 %v627
    %659 = vmatprep.subr.mxu0 0.0
    %660 = vmatpush1.msra.mxu0 %v626
    %661 = vmatprep.subr.mxu0 0.0
    %662 = vmatpush1.msra.mxu0 %v625
    %663 = vmatprep.subr.mxu0 0.0
    %664 = vmatpush1.msra.mxu0 %v624
    %665 = vmatprep.subr.mxu0 0.0
    %666 = vmatpush1.msra.mxu0 %v623
    %667 = vmatprep.subr.mxu0 0.0
    %668 = vmatpush1.msra.mxu0 %v622
    %669 = vmatprep.subr.mxu0 0.0
    %670 = vmatpush1.msra.mxu0 %v621
    %671 = vmatprep.subr.mxu0 0.0
    %672 = vmatpush1.msra.mxu0 %v620
    %673 = vmatprep.subr.mxu0 0.0
    %674 = vmatpush1.msra.mxu0 %v619
    %675 = vmatprep.subr.mxu0 0.0
    %676 = vmatpush1.msra.mxu0 %v618
    %677 = vmatprep.subr.mxu0 0.0
    %678 = vmatpush1.msra.mxu0 %v617
    %679 = vmatprep.subr.mxu0 0.0
    %680 = vmatpush1.msra.mxu0 %v616
    %681 = vmatprep.subr.mxu0 0.0
    %682 = vmatpush1.msra.mxu0 %v615
    %683 = vmatprep.subr.mxu0 0.0
    %684 = vmatpush1.msra.mxu0 %v614
    %685 = vmatprep.subr.mxu0 0.0
    %686 = vmatpush2.msra.mxu0 %v645
    %687 = vmatprep.subr.mxu0 0.0
    %688 = vmatpush2.msra.mxu0 %v644
    %689 = vmatprep.subr.mxu0 0.0
    %690 = vmatpush2.msra.mxu0 %v643
    %691 = vmatprep.subr.mxu0 0.0
    %692 = vmatpush2.msra.mxu0 %v642
    %693 = vmatprep.subr.mxu0 0.0
    %694 = vmatpush2.msra.mxu0 %v641
    %695 = vmatprep.subr.mxu0 0.0
    %696 = vmatpush2.msra.mxu0 %v640
    %697 = vmatprep.subr.mxu0 0.0
    %698 = vmatpush2.msra.mxu0 %v639
    %699 = vmatprep.subr.mxu0 0.0
    %700 = vmatpush2.msra.mxu0 %v638
    %701 = vmatprep.subr.mxu0 0.0
    %702 = vmatpush2.msra.mxu0 %v637
    %703 = vmatprep.subr.mxu0 0.0
    %704 = vmatpush2.msra.mxu0 %v636
    %705 = vmatprep.subr.mxu0 0.0
    %706 = vmatpush2.msra.mxu0 %v635
    %707 = vmatprep.subr.mxu0 0.0
    %708 = vmatpush2.msra.mxu0 %v634
    %709 = vmatprep.subr.mxu0 0.0
    %710 = vmatpush2.msra.mxu0 %v633
    %711 = vmatprep.subr.mxu0 0.0
    %712 = vmatpush2.msra.mxu0 %v632
    %713 = vmatprep.subr.mxu0 0.0
    %714 = vmatpush2.msra.mxu0 %v631
    %715 = vmatprep.subr.mxu0 0.0
    %716 = vmatpush2.msra.mxu0 %v630
    %717 = vmatprep.mubr.f32.mxu0 %v613
    %718 = vmatmul.mubr.f32.gmra.mxu0 %v612
    %v719 = vpop.f32.mrf.mxu0
    %v720 = vadd.f32 %v651, %v719
    %v721 = vpop.f32.mrf.mxu0
    %722 = vdwg.mxu0
    %v723 = vsel %vm403, %v720, -inf
    %724 = vmax.xlane.f32.xlu0 %v723
    %v725 = vpop.xlane.xlu0 %724
    %v726 = vsub.f32 %v720, %v725
    %v727 = vmul.f32 %v726, 1.442695
    %v728 = vpow.pop %v727
    %v729 = vsel %vm403, %v728, 0.0
    %730 = vadd.xlane.f32.xlu0 %v729
    %v731 = vpop.xlane.xlu0 %730
    %v732 = vlog2.pop %v731
    %v733 = vmul.f32 %v732, 0.6931472
    %v734 = vsub.f32 %v726, %v733
    %s735 = scalar_lea.vmem [#allocation11], 2
    %736 = vst [vmem:[%s735] sm:$0x3] %v734
    %s737 = scalar_lea.vmem [#allocation2], 4
    %v738 = vld [vmem:[%s737] sm:$0x3]
    %v739 = vld [vmem:[#allocation7] sm:$0xff]
    %v740 = vld [vmem:[#allocation7 + $0x8] sm:$0xff]
    %v741 = vld [vmem:[#allocation7 + $0x10] sm:$0xff]
    %v742 = vld [vmem:[#allocation7 + $0x18] sm:$0xff]
    %v743 = vld [vmem:[#allocation8] sm:$0xff]
    %v744 = vld [vmem:[#allocation8 + $0x8] sm:$0xff]
    %v745 = vld [vmem:[#allocation8 + $0x10] sm:$0xff]
    %v746 = vld [vmem:[#allocation8 + $0x18] sm:$0xff]
    %v747 = vld [vmem:[#allocation8 + $0x20] sm:$0xff]
    %v748 = vld [vmem:[#allocation8 + $0x28] sm:$0xff]
    %v749 = vld [vmem:[#allocation8 + $0x30] sm:$0xff]
    %v750 = vld [vmem:[#allocation8 + $0x38] sm:$0xff]
    %v751 = vld [vmem:[#allocation8 + $0x40] sm:$0xff]
    %v752 = vld [vmem:[#allocation8 + $0x48] sm:$0xff]
    %v753 = vld [vmem:[#allocation8 + $0x50] sm:$0xff]
    %v754 = vld [vmem:[#allocation8 + $0x58] sm:$0xff]
    %v755 = vld [vmem:[#allocation8 + $0x60] sm:$0xff]
    %v756 = vld [vmem:[#allocation8 + $0x68] sm:$0xff]
    %v757 = vld [vmem:[#allocation8 + $0x70] sm:$0xff]
    %v758 = vld [vmem:[#allocation8 + $0x78] sm:$0xff]
    %v759 = vld [vmem:[#allocation8 + $0x80] sm:$0xff]
    %v760 = vld [vmem:[#allocation8 + $0x88] sm:$0xff]
    %v761 = vld [vmem:[#allocation8 + $0x90] sm:$0xff]
    %v762 = vld [vmem:[#allocation8 + $0x98] sm:$0xff]
    %v763 = vld [vmem:[#allocation8 + $0xa0] sm:$0xff]
    %v764 = vld [vmem:[#allocation8 + $0xa8] sm:$0xff]
    %v765 = vld [vmem:[#allocation8 + $0xb0] sm:$0xff]
    %v766 = vld [vmem:[#allocation8 + $0xb8] sm:$0xff]
    %v767 = vld [vmem:[#allocation8 + $0xc0] sm:$0xff]
    %v768 = vld [vmem:[#allocation8 + $0xc8] sm:$0xff]
    %v769 = vld [vmem:[#allocation8 + $0xd0] sm:$0xff]
    %v770 = vld [vmem:[#allocation8 + $0xd8] sm:$0xff]
    %v771 = vld [vmem:[#allocation8 + $0xe0] sm:$0xff]
    %v772 = vld [vmem:[#allocation8 + $0xe8] sm:$0xff]
    %v773 = vld [vmem:[#allocation8 + $0xf0] sm:$0xff]
    %v774 = vld [vmem:[#allocation8 + $0xf8] sm:$0xff]
    %775 = vmatprep.subr.mxu0 %v774
    %776 = vmatpush1.msra.mxu0 %v773
    %777 = vmatprep.subr.mxu0 %v772
    %778 = vmatpush1.msra.mxu0 %v771
    %779 = vmatprep.subr.mxu0 %v770
    %780 = vmatpush1.msra.mxu0 %v769
    %781 = vmatprep.subr.mxu0 %v768
    %782 = vmatpush1.msra.mxu0 %v767
    %783 = vmatprep.subr.mxu0 %v766
    %784 = vmatpush1.msra.mxu0 %v765
    %785 = vmatprep.subr.mxu0 %v764
    %786 = vmatpush1.msra.mxu0 %v763
    %787 = vmatprep.subr.mxu0 %v762
    %788 = vmatpush1.msra.mxu0 %v761
    %789 = vmatprep.subr.mxu0 %v760
    %790 = vmatpush1.msra.mxu0 %v759
    %791 = vmatprep.subr.mxu0 %v758
    %792 = vmatpush1.msra.mxu0 %v757
    %793 = vmatprep.subr.mxu0 %v756
    %794 = vmatpush1.msra.mxu0 %v755
    %795 = vmatprep.subr.mxu0 %v754
    %796 = vmatpush1.msra.mxu0 %v753
    %797 = vmatprep.subr.mxu0 %v752
    %798 = vmatpush1.msra.mxu0 %v751
    %799 = vmatprep.subr.mxu0 %v750
    %800 = vmatpush1.msra.mxu0 %v749
    %801 = vmatprep.subr.mxu0 %v748
    %802 = vmatpush1.msra.mxu0 %v747
    %803 = vmatprep.subr.mxu0 %v746
    %804 = vmatpush1.msra.mxu0 %v745
    %805 = vmatprep.subr.mxu0 %v744
    %806 = vmatpush1.msra.mxu0 %v743
    %807 = vmatprep.subr.mxu0 0.0
    %808 = vmatpush2.msra.mxu0 0.0
    %809 = vmatprep.subr.mxu0 0.0
    %810 = vmatpush2.msra.mxu0 0.0
    %811 = vmatprep.subr.mxu0 0.0
    %812 = vmatpush2.msra.mxu0 0.0
    %813 = vmatprep.subr.mxu0 0.0
    %814 = vmatpush2.msra.mxu0 0.0
    %815 = vmatprep.subr.mxu0 0.0
    %816 = vmatpush2.msra.mxu0 0.0
    %817 = vmatprep.subr.mxu0 0.0
    %818 = vmatpush2.msra.mxu0 0.0
    %819 = vmatprep.subr.mxu0 0.0
    %820 = vmatpush2.msra.mxu0 0.0
    %821 = vmatprep.subr.mxu0 0.0
    %822 = vmatpush2.msra.mxu0 0.0
    %823 = vmatprep.subr.mxu0 0.0
    %824 = vmatpush2.msra.mxu0 0.0
    %825 = vmatprep.subr.mxu0 0.0
    %826 = vmatpush2.msra.mxu0 0.0
    %827 = vmatprep.subr.mxu0 0.0
    %828 = vmatpush2.msra.mxu0 0.0
    %829 = vmatprep.subr.mxu0 0.0
    %830 = vmatpush2.msra.mxu0 0.0
    %831 = vmatprep.subr.mxu0 0.0
    %832 = vmatpush2.msra.mxu0 0.0
    %833 = vmatprep.subr.mxu0 0.0
    %834 = vmatpush2.msra.mxu0 0.0
    %835 = vmatprep.subr.mxu0 0.0
    %836 = vmatpush2.msra.mxu0 0.0
    %837 = vmatprep.subr.mxu0 0.0
    %838 = vmatpush2.msra.mxu0 0.0
    %839 = vmatprep.mubr.f32.mxu0 0.0
    %840 = vmatmul.mubr.f32.gmra.mxu0 %v612
    %v841 = vpop.f32.mrf.mxu0
    %v842 = vadd.f32 0.0, %v841
    %v843 = vpop.f32.mrf.mxu0
    %v844 = vadd.f32 0.0, %v843
    %845 = vdwg.mxu0
    %v847 = vsel %vm205, %v738, 0
    %849 = vmatprep.subr.mxu0 0.0
    %850 = vmatpush1.msra.mxu0 0.0
    %851 = vmatprep.subr.mxu0 0.0
    %852 = vmatpush1.msra.mxu0 0.0
    %853 = vmatprep.subr.mxu0 0.0
    %854 = vmatpush1.msra.mxu0 0.0
    %855 = vmatprep.subr.mxu0 0.0
    %856 = vmatpush1.msra.mxu0 0.0
    %857 = vmatprep.subr.mxu0 0.0
    %858 = vmatpush1.msra.mxu0 0.0
    %859 = vmatprep.subr.mxu0 0.0
    %860 = vmatpush1.msra.mxu0 0.0
    %861 = vmatprep.subr.mxu0 0.0
    %862 = vmatpush1.msra.mxu0 0.0
    %863 = vmatprep.subr.mxu0 0.0
    %864 = vmatpush1.msra.mxu0 0.0
    %865 = vmatprep.subr.mxu0 0.0
    %866 = vmatpush1.msra.mxu0 0.0
    %867 = vmatprep.subr.mxu0 0.0
    %868 = vmatpush1.msra.mxu0 0.0
    %869 = vmatprep.subr.mxu0 0.0
    %870 = vmatpush1.msra.mxu0 0.0
    %871 = vmatprep.subr.mxu0 0.0
    %872 = vmatpush1.msra.mxu0 0.0
    %873 = vmatprep.subr.mxu0 0.0
    %874 = vmatpush1.msra.mxu0 0.0
    %875 = vmatprep.subr.mxu0 0.0
    %876 = vmatpush1.msra.mxu0 0.0
    %877 = vmatprep.subr.mxu0 %v742
    %878 = vmatpush1.msra.mxu0 %v741
    %879 = vmatprep.subr.mxu0 %v740
    %880 = vmatpush1.msra.mxu0 %v739
    %881 = vmatprep.subr.mxu0 0.0
    %882 = vmatpush2.msra.mxu0 0.0
    %883 = vmatprep.subr.mxu0 0.0
    %884 = vmatpush2.msra.mxu0 0.0
    %885 = vmatprep.subr.mxu0 0.0
    %886 = vmatpush2.msra.mxu0 0.0
    %887 = vmatprep.subr.mxu0 0.0
    %888 = vmatpush2.msra.mxu0 0.0
    %889 = vmatprep.subr.mxu0 0.0
    %890 = vmatpush2.msra.mxu0 0.0
    %891 = vmatprep.subr.mxu0 0.0
    %892 = vmatpush2.msra.mxu0 0.0
    %893 = vmatprep.subr.mxu0 0.0
    %894 = vmatpush2.msra.mxu0 0.0
    %895 = vmatprep.subr.mxu0 0.0
    %896 = vmatpush2.msra.mxu0 0.0
    %897 = vmatprep.subr.mxu0 0.0
    %898 = vmatpush2.msra.mxu0 0.0
    %899 = vmatprep.subr.mxu0 0.0
    %900 = vmatpush2.msra.mxu0 0.0
    %901 = vmatprep.subr.mxu0 0.0
    %902 = vmatpush2.msra.mxu0 0.0
    %903 = vmatprep.subr.mxu0 0.0
    %904 = vmatpush2.msra.mxu0 0.0
    %905 = vmatprep.subr.mxu0 0.0
    %906 = vmatpush2.msra.mxu0 0.0
    %907 = vmatprep.subr.mxu0 0.0
    %908 = vmatpush2.msra.mxu0 0.0
    %909 = vmatprep.subr.mxu0 0.0
    %910 = vmatpush2.msra.mxu0 0.0
    %911 = vmatprep.subr.mxu0 0.0
    %912 = vmatpush2.msra.mxu0 0.0
    %913 = vmatprep.mubr.f32.mxu0 0.0
    %914 = vmatmul.mubr.f32.gmra.mxu0 %v847
    %v915 = vpop.f32.mrf.mxu0
    %v916 = vadd.f32 %v842, %v915
    %v917 = vpop.f32.mrf.mxu0
    %v918 = vadd.f32 %v844, %v917
    %919 = vdwg.mxu0
    %v920 = vld [vmem:[%s4] sm:$0x3]
    %v922 = vlaneseq
    %v923 = vshrl.u32 %v922, 7
    %v924 = vsub.s32 0, %v923
    %v925 = vrot.slane %v920, %v924
    %v926 = vlaneseq
    %v927 = vshrl.u32 %v926, 7
    %v928 = vsub.s32 1, %v927
    %v929 = vrot.slane %v920, %v928
    %v932 = vadd.f32 %v916, %v925
    %v933 = vadd.f32 %v918, %v929
    %v934 = vld [vmem:[#allocation10] sm:$0xff]
    %v935 = vld [vmem:[#allocation10 + $0x8] sm:$0xff]
    %v936 = vld [vmem:[#allocation10 + $0x10] sm:$0xff]
    %v937 = vld [vmem:[#allocation10 + $0x18] sm:$0xff]
    %v938 = vld [vmem:[#allocation10 + $0x20] sm:$0xff]
    %v939 = vld [vmem:[#allocation10 + $0x28] sm:$0xff]
    %v940 = vld [vmem:[#allocation10 + $0x30] sm:$0xff]
    %v941 = vld [vmem:[#allocation10 + $0x38] sm:$0xff]
    %v942 = vld [vmem:[#allocation10 + $0x40] sm:$0xff]
    %v943 = vld [vmem:[#allocation10 + $0x48] sm:$0xff]
    %v944 = vld [vmem:[#allocation10 + $0x50] sm:$0xff]
    %v945 = vld [vmem:[#allocation10 + $0x58] sm:$0xff]
    %v946 = vld [vmem:[#allocation10 + $0x60] sm:$0xff]
    %v947 = vld [vmem:[#allocation10 + $0x68] sm:$0xff]
    %v948 = vld [vmem:[#allocation10 + $0x70] sm:$0xff]
    %v949 = vld [vmem:[#allocation10 + $0x78] sm:$0xff]
    %v950 = vld [vmem:[#allocation10 + $0x80] sm:$0xff]
    %v951 = vld [vmem:[#allocation10 + $0x88] sm:$0xff]
    %v952 = vld [vmem:[#allocation10 + $0x90] sm:$0xff]
    %v953 = vld [vmem:[#allocation10 + $0x98] sm:$0xff]
    %v954 = vld [vmem:[#allocation10 + $0xa0] sm:$0xff]
    %v955 = vld [vmem:[#allocation10 + $0xa8] sm:$0xff]
    %v956 = vld [vmem:[#allocation10 + $0xb0] sm:$0xff]
    %v957 = vld [vmem:[#allocation10 + $0xb8] sm:$0xff]
    %v958 = vld [vmem:[#allocation10 + $0xc0] sm:$0xff]
    %v959 = vld [vmem:[#allocation10 + $0xc8] sm:$0xff]
    %v960 = vld [vmem:[#allocation10 + $0xd0] sm:$0xff]
    %v961 = vld [vmem:[#allocation10 + $0xd8] sm:$0xff]
    %v962 = vld [vmem:[#allocation10 + $0xe0] sm:$0xff]
    %v963 = vld [vmem:[#allocation10 + $0xe8] sm:$0xff]
    %v964 = vld [vmem:[#allocation10 + $0xf0] sm:$0xff]
    %v965 = vld [vmem:[#allocation10 + $0xf8] sm:$0xff]
    %v966 = vld [vmem:[%s6] sm:$0x1]
    %v968 = vlaneseq
    %v969 = vshrl.u32 %v968, 7
    %v970 = vsub.s32 0, %v969
    %v971 = vrot.slane %v966, %v970
    %973 = vmatprep.subr.mxu0 0.0
    %974 = vmatpush1.msra.mxu0 %v949
    %975 = vmatprep.subr.mxu0 0.0
    %976 = vmatpush1.msra.mxu0 %v948
    %977 = vmatprep.subr.mxu0 0.0
    %978 = vmatpush1.msra.mxu0 %v947
    %979 = vmatprep.subr.mxu0 0.0
    %980 = vmatpush1.msra.mxu0 %v946
    %981 = vmatprep.subr.mxu0 0.0
    %982 = vmatpush1.msra.mxu0 %v945
    %983 = vmatprep.subr.mxu0 0.0
    %984 = vmatpush1.msra.mxu0 %v944
    %985 = vmatprep.subr.mxu0 0.0
    %986 = vmatpush1.msra.mxu0 %v943
    %987 = vmatprep.subr.mxu0 0.0
    %988 = vmatpush1.msra.mxu0 %v942
    %989 = vmatprep.subr.mxu0 0.0
    %990 = vmatpush1.msra.mxu0 %v941
    %991 = vmatprep.subr.mxu0 0.0
    %992 = vmatpush1.msra.mxu0 %v940
    %993 = vmatprep.subr.mxu0 0.0
    %994 = vmatpush1.msra.mxu0 %v939
    %995 = vmatprep.subr.mxu0 0.0
    %996 = vmatpush1.msra.mxu0 %v938
    %997 = vmatprep.subr.mxu0 0.0
    %998 = vmatpush1.msra.mxu0 %v937
    %999 = vmatprep.subr.mxu0 0.0
    %1000 = vmatpush1.msra.mxu0 %v936
    %1001 = vmatprep.subr.mxu0 0.0
    %1002 = vmatpush1.msra.mxu0 %v935
    %1003 = vmatprep.subr.mxu0 0.0
    %1004 = vmatpush1.msra.mxu0 %v934
    %1005 = vmatprep.subr.mxu0 0.0
    %1006 = vmatpush2.msra.mxu0 %v965
    %1007 = vmatprep.subr.mxu0 0.0
    %1008 = vmatpush2.msra.mxu0 %v964
    %1009 = vmatprep.subr.mxu0 0.0
    %1010 = vmatpush2.msra.mxu0 %v963
    %1011 = vmatprep.subr.mxu0 0.0
    %1012 = vmatpush2.msra.mxu0 %v962
    %1013 = vmatprep.subr.mxu0 0.0
    %1014 = vmatpush2.msra.mxu0 %v961
    %1015 = vmatprep.subr.mxu0 0.0
    %1016 = vmatpush2.msra.mxu0 %v960
    %1017 = vmatprep.subr.mxu0 0.0
    %1018 = vmatpush2.msra.mxu0 %v959
    %1019 = vmatprep.subr.mxu0 0.0
    %1020 = vmatpush2.msra.mxu0 %v958
    %1021 = vmatprep.subr.mxu0 0.0
    %1022 = vmatpush2.msra.mxu0 %v957
    %1023 = vmatprep.subr.mxu0 0.0
    %1024 = vmatpush2.msra.mxu0 %v956
    %1025 = vmatprep.subr.mxu0 0.0
    %1026 = vmatpush2.msra.mxu0 %v955
    %1027 = vmatprep.subr.mxu0 0.0
    %1028 = vmatpush2.msra.mxu0 %v954
    %1029 = vmatprep.subr.mxu0 0.0
    %1030 = vmatpush2.msra.mxu0 %v953
    %1031 = vmatprep.subr.mxu0 0.0
    %1032 = vmatpush2.msra.mxu0 %v952
    %1033 = vmatprep.subr.mxu0 0.0
    %1034 = vmatpush2.msra.mxu0 %v951
    %1035 = vmatprep.subr.mxu0 0.0
    %1036 = vmatpush2.msra.mxu0 %v950
    %1037 = vmatprep.mubr.f32.mxu0 %v933
    %1038 = vmatmul.mubr.f32.gmra.mxu0 %v932
    %v1039 = vpop.f32.mrf.mxu0
    %v1040 = vadd.f32 %v971, %v1039
    %v1041 = vpop.f32.mrf.mxu0
    %1042 = vdwg.mxu0
    %v1043 = vsel %vm403, %v1040, -inf
    %1044 = vmax.xlane.f32.xlu0 %v1043
    %v1045 = vpop.xlane.xlu0 %1044
    %v1046 = vsub.f32 %v1040, %v1045
    %v1047 = vmul.f32 %v1046, 1.442695
    %v1048 = vpow.pop %v1047
    %v1049 = vsel %vm403, %v1048, 0.0
    %1050 = vadd.xlane.f32.xlu0 %v1049
    %v1051 = vpop.xlane.xlu0 %1050
    %v1052 = vlog2.pop %v1051
    %v1053 = vmul.f32 %v1052, 0.6931472
    %v1054 = vsub.f32 %v1046, %v1053
    %s1055 = scalar_lea.vmem [#allocation11], 4
    %1056 = vst [vmem:[%s1055] sm:$0x3] %v1054
    %s1057 = scalar_lea.vmem [#allocation2], 6
    %v1058 = vld [vmem:[%s1057] sm:$0x3]
    %v1059 = vld [vmem:[#allocation7] sm:$0xff]
    %v1060 = vld [vmem:[#allocation7 + $0x8] sm:$0xff]
    %v1061 = vld [vmem:[#allocation7 + $0x10] sm:$0xff]
    %v1062 = vld [vmem:[#allocation7 + $0x18] sm:$0xff]
    %v1063 = vld [vmem:[#allocation8] sm:$0xff]
    %v1064 = vld [vmem:[#allocation8 + $0x8] sm:$0xff]
    %v1065 = vld [vmem:[#allocation8 + $0x10] sm:$0xff]
    %v1066 = vld [vmem:[#allocation8 + $0x18] sm:$0xff]
    %v1067 = vld [vmem:[#allocation8 + $0x20] sm:$0xff]
    %v1068 = vld [vmem:[#allocation8 + $0x28] sm:$0xff]
    %v1069 = vld [vmem:[#allocation8 + $0x30] sm:$0xff]
    %v1070 = vld [vmem:[#allocation8 + $0x38] sm:$0xff]
    %v1071 = vld [vmem:[#allocation8 + $0x40] sm:$0xff]
    %v1072 = vld [vmem:[#allocation8 + $0x48] sm:$0xff]
    %v1073 = vld [vmem:[#allocation8 + $0x50] sm:$0xff]
    %v1074 = vld [vmem:[#allocation8 + $0x58] sm:$0xff]
    %v1075 = vld [vmem:[#allocation8 + $0x60] sm:$0xff]
    %v1076 = vld [vmem:[#allocation8 + $0x68] sm:$0xff]
    %v1077 = vld [vmem:[#allocation8 + $0x70] sm:$0xff]
    %v1078 = vld [vmem:[#allocation8 + $0x78] sm:$0xff]
    %v1079 = vld [vmem:[#allocation8 + $0x80] sm:$0xff]
    %v1080 = vld [vmem:[#allocation8 + $0x88] sm:$0xff]
    %v1081 = vld [vmem:[#allocation8 + $0x90] sm:$0xff]
    %v1082 = vld [vmem:[#allocation8 + $0x98] sm:$0xff]
    %v1083 = vld [vmem:[#allocation8 + $0xa0] sm:$0xff]
    %v1084 = vld [vmem:[#allocation8 + $0xa8] sm:$0xff]
    %v1085 = vld [vmem:[#allocation8 + $0xb0] sm:$0xff]
    %v1086 = vld [vmem:[#allocation8 + $0xb8] sm:$0xff]
    %v1087 = vld [vmem:[#allocation8 + $0xc0] sm:$0xff]
    %v1088 = vld [vmem:[#allocation8 + $0xc8] sm:$0xff]
    %v1089 = vld [vmem:[#allocation8 + $0xd0] sm:$0xff]
    %v1090 = vld [vmem:[#allocation8 + $0xd8] sm:$0xff]
    %v1091 = vld [vmem:[#allocation8 + $0xe0] sm:$0xff]
    %v1092 = vld [vmem:[#allocation8 + $0xe8] sm:$0xff]
    %v1093 = vld [vmem:[#allocation8 + $0xf0] sm:$0xff]
    %v1094 = vld [vmem:[#allocation8 + $0xf8] sm:$0xff]
    %1095 = vmatprep.subr.mxu0 %v1094
    %1096 = vmatpush1.msra.mxu0 %v1093
    %1097 = vmatprep.subr.mxu0 %v1092
    %1098 = vmatpush1.msra.mxu0 %v1091
    %1099 = vmatprep.subr.mxu0 %v1090
    %1100 = vmatpush1.msra.mxu0 %v1089
    %1101 = vmatprep.subr.mxu0 %v1088
    %1102 = vmatpush1.msra.mxu0 %v1087
    %1103 = vmatprep.subr.mxu0 %v1086
    %1104 = vmatpush1.msra.mxu0 %v1085
    %1105 = vmatprep.subr.mxu0 %v1084
    %1106 = vmatpush1.msra.mxu0 %v1083
    %1107 = vmatprep.subr.mxu0 %v1082
    %1108 = vmatpush1.msra.mxu0 %v1081
    %1109 = vmatprep.subr.mxu0 %v1080
    %1110 = vmatpush1.msra.mxu0 %v1079
    %1111 = vmatprep.subr.mxu0 %v1078
    %1112 = vmatpush1.msra.mxu0 %v1077
    %1113 = vmatprep.subr.mxu0 %v1076
    %1114 = vmatpush1.msra.mxu0 %v1075
    %1115 = vmatprep.subr.mxu0 %v1074
    %1116 = vmatpush1.msra.mxu0 %v1073
    %1117 = vmatprep.subr.mxu0 %v1072
    %1118 = vmatpush1.msra.mxu0 %v1071
    %1119 = vmatprep.subr.mxu0 %v1070
    %1120 = vmatpush1.msra.mxu0 %v1069
    %1121 = vmatprep.subr.mxu0 %v1068
    %1122 = vmatpush1.msra.mxu0 %v1067
    %1123 = vmatprep.subr.mxu0 %v1066
    %1124 = vmatpush1.msra.mxu0 %v1065
    %1125 = vmatprep.subr.mxu0 %v1064
    %1126 = vmatpush1.msra.mxu0 %v1063
    %1127 = vmatprep.subr.mxu0 0.0
    %1128 = vmatpush2.msra.mxu0 0.0
    %1129 = vmatprep.subr.mxu0 0.0
    %1130 = vmatpush2.msra.mxu0 0.0
    %1131 = vmatprep.subr.mxu0 0.0
    %1132 = vmatpush2.msra.mxu0 0.0
    %1133 = vmatprep.subr.mxu0 0.0
    %1134 = vmatpush2.msra.mxu0 0.0
    %1135 = vmatprep.subr.mxu0 0.0
    %1136 = vmatpush2.msra.mxu0 0.0
    %1137 = vmatprep.subr.mxu0 0.0
    %1138 = vmatpush2.msra.mxu0 0.0
    %1139 = vmatprep.subr.mxu0 0.0
    %1140 = vmatpush2.msra.mxu0 0.0
    %1141 = vmatprep.subr.mxu0 0.0
    %1142 = vmatpush2.msra.mxu0 0.0
    %1143 = vmatprep.subr.mxu0 0.0
    %1144 = vmatpush2.msra.mxu0 0.0
    %1145 = vmatprep.subr.mxu0 0.0
    %1146 = vmatpush2.msra.mxu0 0.0
    %1147 = vmatprep.subr.mxu0 0.0
    %1148 = vmatpush2.msra.mxu0 0.0
    %1149 = vmatprep.subr.mxu0 0.0
    %1150 = vmatpush2.msra.mxu0 0.0
    %1151 = vmatprep.subr.mxu0 0.0
    %1152 = vmatpush2.msra.mxu0 0.0
    %1153 = vmatprep.subr.mxu0 0.0
    %1154 = vmatpush2.msra.mxu0 0.0
    %1155 = vmatprep.subr.mxu0 0.0
    %1156 = vmatpush2.msra.mxu0 0.0
    %1157 = vmatprep.subr.mxu0 0.0
    %1158 = vmatpush2.msra.mxu0 0.0
    %1159 = vmatprep.mubr.f32.mxu0 0.0
    %1160 = vmatmul.mubr.f32.gmra.mxu0 %v932
    %v1161 = vpop.f32.mrf.mxu0
    %v1162 = vadd.f32 0.0, %v1161
    %v1163 = vpop.f32.mrf.mxu0
    %v1164 = vadd.f32 0.0, %v1163
    %1165 = vdwg.mxu0
    %v1167 = vsel %vm205, %v1058, 0
    %1169 = vmatprep.subr.mxu0 0.0
    %1170 = vmatpush1.msra.mxu0 0.0
    %1171 = vmatprep.subr.mxu0 0.0
    %1172 = vmatpush1.msra.mxu0 0.0
    %1173 = vmatprep.subr.mxu0 0.0
    %1174 = vmatpush1.msra.mxu0 0.0
    %1175 = vmatprep.subr.mxu0 0.0
    %1176 = vmatpush1.msra.mxu0 0.0
    %1177 = vmatprep.subr.mxu0 0.0
    %1178 = vmatpush1.msra.mxu0 0.0
    %1179 = vmatprep.subr.mxu0 0.0
    %1180 = vmatpush1.msra.mxu0 0.0
    %1181 = vmatprep.subr.mxu0 0.0
    %1182 = vmatpush1.msra.mxu0 0.0
    %1183 = vmatprep.subr.mxu0 0.0
    %1184 = vmatpush1.msra.mxu0 0.0
    %1185 = vmatprep.subr.mxu0 0.0
    %1186 = vmatpush1.msra.mxu0 0.0
    %1187 = vmatprep.subr.mxu0 0.0
    %1188 = vmatpush1.msra.mxu0 0.0
    %1189 = vmatprep.subr.mxu0 0.0
    %1190 = vmatpush1.msra.mxu0 0.0
    %1191 = vmatprep.subr.mxu0 0.0
    %1192 = vmatpush1.msra.mxu0 0.0
    %1193 = vmatprep.subr.mxu0 0.0
    %1194 = vmatpush1.msra.mxu0 0.0
    %1195 = vmatprep.subr.mxu0 0.0
    %1196 = vmatpush1.msra.mxu0 0.0
    %1197 = vmatprep.subr.mxu0 %v1062
    %1198 = vmatpush1.msra.mxu0 %v1061
    %1199 = vmatprep.subr.mxu0 %v1060
    %1200 = vmatpush1.msra.mxu0 %v1059
    %1201 = vmatprep.subr.mxu0 0.0
    %1202 = vmatpush2.msra.mxu0 0.0
    %1203 = vmatprep.subr.mxu0 0.0
    %1204 = vmatpush2.msra.mxu0 0.0
    %1205 = vmatprep.subr.mxu0 0.0
    %1206 = vmatpush2.msra.mxu0 0.0
    %1207 = vmatprep.subr.mxu0 0.0
    %1208 = vmatpush2.msra.mxu0 0.0
    %1209 = vmatprep.subr.mxu0 0.0
    %1210 = vmatpush2.msra.mxu0 0.0
    %1211 = vmatprep.subr.mxu0 0.0
    %1212 = vmatpush2.msra.mxu0 0.0
    %1213 = vmatprep.subr.mxu0 0.0
    %1214 = vmatpush2.msra.mxu0 0.0
    %1215 = vmatprep.subr.mxu0 0.0
    %1216 = vmatpush2.msra.mxu0 0.0
    %1217 = vmatprep.subr.mxu0 0.0
    %1218 = vmatpush2.msra.mxu0 0.0
    %1219 = vmatprep.subr.mxu0 0.0
    %1220 = vmatpush2.msra.mxu0 0.0
    %1221 = vmatprep.subr.mxu0 0.0
    %1222 = vmatpush2.msra.mxu0 0.0
    %1223 = vmatprep.subr.mxu0 0.0
    %1224 = vmatpush2.msra.mxu0 0.0
    %1225 = vmatprep.subr.mxu0 0.0
    %1226 = vmatpush2.msra.mxu0 0.0
    %1227 = vmatprep.subr.mxu0 0.0
    %1228 = vmatpush2.msra.mxu0 0.0
    %1229 = vmatprep.subr.mxu0 0.0
    %1230 = vmatpush2.msra.mxu0 0.0
    %1231 = vmatprep.subr.mxu0 0.0
    %1232 = vmatpush2.msra.mxu0 0.0
    %1233 = vmatprep.mubr.f32.mxu0 0.0
    %1234 = vmatmul.mubr.f32.gmra.mxu0 %v1167
    %v1235 = vpop.f32.mrf.mxu0
    %v1236 = vadd.f32 %v1162, %v1235
    %v1237 = vpop.f32.mrf.mxu0
    %v1238 = vadd.f32 %v1164, %v1237
    %1239 = vdwg.mxu0
    %v1240 = vld [vmem:[%s4] sm:$0x3]
    %v1242 = vlaneseq
    %v1243 = vshrl.u32 %v1242, 7
    %v1244 = vsub.s32 0, %v1243
    %v1245 = vrot.slane %v1240, %v1244
    %v1246 = vlaneseq
    %v1247 = vshrl.u32 %v1246, 7
    %v1248 = vsub.s32 1, %v1247
    %v1249 = vrot.slane %v1240, %v1248
    %v1252 = vadd.f32 %v1236, %v1245
    %v1253 = vadd.f32 %v1238, %v1249
    %v1254 = vld [vmem:[#allocation10] sm:$0xff]
    %v1255 = vld [vmem:[#allocation10 + $0x8] sm:$0xff]
    %v1256 = vld [vmem:[#allocation10 + $0x10] sm:$0xff]
    %v1257 = vld [vmem:[#allocation10 + $0x18] sm:$0xff]
    %v1258 = vld [vmem:[#allocation10 + $0x20] sm:$0xff]
    %v1259 = vld [vmem:[#allocation10 + $0x28] sm:$0xff]
    %v1260 = vld [vmem:[#allocation10 + $0x30] sm:$0xff]
    %v1261 = vld [vmem:[#allocation10 + $0x38] sm:$0xff]
    %v1262 = vld [vmem:[#allocation10 + $0x40] sm:$0xff]
    %v1263 = vld [vmem:[#allocation10 + $0x48] sm:$0xff]
    %v1264 = vld [vmem:[#allocation10 + $0x50] sm:$0xff]
    %v1265 = vld [vmem:[#allocation10 + $0x58] sm:$0xff]
    %v1266 = vld [vmem:[#allocation10 + $0x60] sm:$0xff]
    %v1267 = vld [vmem:[#allocation10 + $0x68] sm:$0xff]
    %v1268 = vld [vmem:[#allocation10 + $0x70] sm:$0xff]
    %v1269 = vld [vmem:[#allocation10 + $0x78] sm:$0xff]
    %v1270 = vld [vmem:[#allocation10 + $0x80] sm:$0xff]
    %v1271 = vld [vmem:[#allocation10 + $0x88] sm:$0xff]
    %v1272 = vld [vmem:[#allocation10 + $0x90] sm:$0xff]
    %v1273 = vld [vmem:[#allocation10 + $0x98] sm:$0xff]
    %v1274 = vld [vmem:[#allocation10 + $0xa0] sm:$0xff]
    %v1275 = vld [vmem:[#allocation10 + $0xa8] sm:$0xff]
    %v1276 = vld [vmem:[#allocation10 + $0xb0] sm:$0xff]
    %v1277 = vld [vmem:[#allocation10 + $0xb8] sm:$0xff]
    %v1278 = vld [vmem:[#allocation10 + $0xc0] sm:$0xff]
    %v1279 = vld [vmem:[#allocation10 + $0xc8] sm:$0xff]
    %v1280 = vld [vmem:[#allocation10 + $0xd0] sm:$0xff]
    %v1281 = vld [vmem:[#allocation10 + $0xd8] sm:$0xff]
    %v1282 = vld [vmem:[#allocation10 + $0xe0] sm:$0xff]
    %v1283 = vld [vmem:[#allocation10 + $0xe8] sm:$0xff]
    %v1284 = vld [vmem:[#allocation10 + $0xf0] sm:$0xff]
    %v1285 = vld [vmem:[#allocation10 + $0xf8] sm:$0xff]
    %v1286 = vld [vmem:[%s6] sm:$0x1]
    %v1288 = vlaneseq
    %v1289 = vshrl.u32 %v1288, 7
    %v1290 = vsub.s32 0, %v1289
    %v1291 = vrot.slane %v1286, %v1290
    %1293 = vmatprep.subr.mxu0 0.0
    %1294 = vmatpush1.msra.mxu0 %v1269
    %1295 = vmatprep.subr.mxu0 0.0
    %1296 = vmatpush1.msra.mxu0 %v1268
    %1297 = vmatprep.subr.mxu0 0.0
    %1298 = vmatpush1.msra.mxu0 %v1267
    %1299 = vmatprep.subr.mxu0 0.0
    %1300 = vmatpush1.msra.mxu0 %v1266
    %1301 = vmatprep.subr.mxu0 0.0
    %1302 = vmatpush1.msra.mxu0 %v1265
    %1303 = vmatprep.subr.mxu0 0.0
    %1304 = vmatpush1.msra.mxu0 %v1264
    %1305 = vmatprep.subr.mxu0 0.0
    %1306 = vmatpush1.msra.mxu0 %v1263
    %1307 = vmatprep.subr.mxu0 0.0
    %1308 = vmatpush1.msra.mxu0 %v1262
    %1309 = vmatprep.subr.mxu0 0.0
    %1310 = vmatpush1.msra.mxu0 %v1261
    %1311 = vmatprep.subr.mxu0 0.0
    %1312 = vmatpush1.msra.mxu0 %v1260
    %1313 = vmatprep.subr.mxu0 0.0
    %1314 = vmatpush1.msra.mxu0 %v1259
    %1315 = vmatprep.subr.mxu0 0.0
    %1316 = vmatpush1.msra.mxu0 %v1258
    %1317 = vmatprep.subr.mxu0 0.0
    %1318 = vmatpush1.msra.mxu0 %v1257
    %1319 = vmatprep.subr.mxu0 0.0
    %1320 = vmatpush1.msra.mxu0 %v1256
    %1321 = vmatprep.subr.mxu0 0.0
    %1322 = vmatpush1.msra.mxu0 %v1255
    %1323 = vmatprep.subr.mxu0 0.0
    %1324 = vmatpush1.msra.mxu0 %v1254
    %1325 = vmatprep.subr.mxu0 0.0
    %1326 = vmatpush2.msra.mxu0 %v1285
    %1327 = vmatprep.subr.mxu0 0.0
    %1328 = vmatpush2.msra.mxu0 %v1284
    %1329 = vmatprep.subr.mxu0 0.0
    %1330 = vmatpush2.msra.mxu0 %v1283
    %1331 = vmatprep.subr.mxu0 0.0
    %1332 = vmatpush2.msra.mxu0 %v1282
    %1333 = vmatprep.subr.mxu0 0.0
    %1334 = vmatpush2.msra.mxu0 %v1281
    %1335 = vmatprep.subr.mxu0 0.0
    %1336 = vmatpush2.msra.mxu0 %v1280
    %1337 = vmatprep.subr.mxu0 0.0
    %1338 = vmatpush2.msra.mxu0 %v1279
    %1339 = vmatprep.subr.mxu0 0.0
    %1340 = vmatpush2.msra.mxu0 %v1278
    %1341 = vmatprep.subr.mxu0 0.0
    %1342 = vmatpush2.msra.mxu0 %v1277
    %1343 = vmatprep.subr.mxu0 0.0
    %1344 = vmatpush2.msra.mxu0 %v1276
    %1345 = vmatprep.subr.mxu0 0.0
    %1346 = vmatpush2.msra.mxu0 %v1275
    %1347 = vmatprep.subr.mxu0 0.0
    %1348 = vmatpush2.msra.mxu0 %v1274
    %1349 = vmatprep.subr.mxu0 0.0
    %1350 = vmatpush2.msra.mxu0 %v1273
    %1351 = vmatprep.subr.mxu0 0.0
    %1352 = vmatpush2.msra.mxu0 %v1272
    %1353 = vmatprep.subr.mxu0 0.0
    %1354 = vmatpush2.msra.mxu0 %v1271
    %1355 = vmatprep.subr.mxu0 0.0
    %1356 = vmatpush2.msra.mxu0 %v1270
    %1357 = vmatprep.mubr.f32.mxu0 %v1253
    %1358 = vmatmul.mubr.f32.gmra.mxu0 %v1252
    %v1359 = vpop.f32.mrf.mxu0
    %v1360 = vadd.f32 %v1291, %v1359
    %v1361 = vpop.f32.mrf.mxu0
    %1362 = vdwg.mxu0
    %v1363 = vsel %vm403, %v1360, -inf
    %1364 = vmax.xlane.f32.xlu0 %v1363
    %v1365 = vpop.xlane.xlu0 %1364
    %v1366 = vsub.f32 %v1360, %v1365
    %v1367 = vmul.f32 %v1366, 1.442695
    %v1368 = vpow.pop %v1367
    %v1369 = vsel %vm403, %v1368, 0.0
    %1370 = vadd.xlane.f32.xlu0 %v1369
    %v1371 = vpop.xlane.xlu0 %1370
    %v1372 = vlog2.pop %v1371
    %v1373 = vmul.f32 %v1372, 0.6931472
    %v1374 = vsub.f32 %v1366, %v1373
    %s1375 = scalar_lea.vmem [#allocation11], 6
    %1376 = vst [vmem:[%s1375] sm:$0x3] %v1374
    %s1377 = scalar_lea.vmem [#allocation2], 8
    %v1378 = vld [vmem:[%s1377] sm:$0x3]
    %v1379 = vld [vmem:[#allocation7] sm:$0xff]
    %v1380 = vld [vmem:[#allocation7 + $0x8] sm:$0xff]
    %v1381 = vld [vmem:[#allocation7 + $0x10] sm:$0xff]
    %v1382 = vld [vmem:[#allocation7 + $0x18] sm:$0xff]
    %v1383 = vld [vmem:[#allocation8] sm:$0xff]
    %v1384 = vld [vmem:[#allocation8 + $0x8] sm:$0xff]
    %v1385 = vld [vmem:[#allocation8 + $0x10] sm:$0xff]
    %v1386 = vld [vmem:[#allocation8 + $0x18] sm:$0xff]
    %v1387 = vld [vmem:[#allocation8 + $0x20] sm:$0xff]
    %v1388 = vld [vmem:[#allocation8 + $0x28] sm:$0xff]
    %v1389 = vld [vmem:[#allocation8 + $0x30] sm:$0xff]
    %v1390 = vld [vmem:[#allocation8 + $0x38] sm:$0xff]
    %v1391 = vld [vmem:[#allocation8 + $0x40] sm:$0xff]
    %v1392 = vld [vmem:[#allocation8 + $0x48] sm:$0xff]
    %v1393 = vld [vmem:[#allocation8 + $0x50] sm:$0xff]
    %v1394 = vld [vmem:[#allocation8 + $0x58] sm:$0xff]
    %v1395 = vld [vmem:[#allocation8 + $0x60] sm:$0xff]
    %v1396 = vld [vmem:[#allocation8 + $0x68] sm:$0xff]
    %v1397 = vld [vmem:[#allocation8 + $0x70] sm:$0xff]
    %v1398 = vld [vmem:[#allocation8 + $0x78] sm:$0xff]
    %v1399 = vld [vmem:[#allocation8 + $0x80] sm:$0xff]
    %v1400 = vld [vmem:[#allocation8 + $0x88] sm:$0xff]
    %v1401 = vld [vmem:[#allocation8 + $0x90] sm:$0xff]
    %v1402 = vld [vmem:[#allocation8 + $0x98] sm:$0xff]
    %v1403 = vld [vmem:[#allocation8 + $0xa0] sm:$0xff]
    %v1404 = vld [vmem:[#allocation8 + $0xa8] sm:$0xff]
    %v1405 = vld [vmem:[#allocation8 + $0xb0] sm:$0xff]
    %v1406 = vld [vmem:[#allocation8 + $0xb8] sm:$0xff]
    %v1407 = vld [vmem:[#allocation8 + $0xc0] sm:$0xff]
    %v1408 = vld [vmem:[#allocation8 + $0xc8] sm:$0xff]
    %v1409 = vld [vmem:[#allocation8 + $0xd0] sm:$0xff]
    %v1410 = vld [vmem:[#allocation8 + $0xd8] sm:$0xff]
    %v1411 = vld [vmem:[#allocation8 + $0xe0] sm:$0xff]
    %v1412 = vld [vmem:[#allocation8 + $0xe8] sm:$0xff]
    %v1413 = vld [vmem:[#allocation8 + $0xf0] sm:$0xff]
    %v1414 = vld [vmem:[#allocation8 + $0xf8] sm:$0xff]
    %1415 = vmatprep.subr.mxu0 %v1414
    %1416 = vmatpush1.msra.mxu0 %v1413
    %1417 = vmatprep.subr.mxu0 %v1412
    %1418 = vmatpush1.msra.mxu0 %v1411
    %1419 = vmatprep.subr.mxu0 %v1410
    %1420 = vmatpush1.msra.mxu0 %v1409
    %1421 = vmatprep.subr.mxu0 %v1408
    %1422 = vmatpush1.msra.mxu0 %v1407
    %1423 = vmatprep.subr.mxu0 %v1406
    %1424 = vmatpush1.msra.mxu0 %v1405
    %1425 = vmatprep.subr.mxu0 %v1404
    %1426 = vmatpush1.msra.mxu0 %v1403
    %1427 = vmatprep.subr.mxu0 %v1402
    %1428 = vmatpush1.msra.mxu0 %v1401
    %1429 = vmatprep.subr.mxu0 %v1400
    %1430 = vmatpush1.msra.mxu0 %v1399
    %1431 = vmatprep.subr.mxu0 %v1398
    %1432 = vmatpush1.msra.mxu0 %v1397
    %1433 = vmatprep.subr.mxu0 %v1396
    %1434 = vmatpush1.msra.mxu0 %v1395
    %1435 = vmatprep.subr.mxu0 %v1394
    %1436 = vmatpush1.msra.mxu0 %v1393
    %1437 = vmatprep.subr.mxu0 %v1392
    %1438 = vmatpush1.msra.mxu0 %v1391
    %1439 = vmatprep.subr.mxu0 %v1390
    %1440 = vmatpush1.msra.mxu0 %v1389
    %1441 = vmatprep.subr.mxu0 %v1388
    %1442 = vmatpush1.msra.mxu0 %v1387
    %1443 = vmatprep.subr.mxu0 %v1386
    %1444 = vmatpush1.msra.mxu0 %v1385
    %1445 = vmatprep.subr.mxu0 %v1384
    %1446 = vmatpush1.msra.mxu0 %v1383
    %1447 = vmatprep.subr.mxu0 0.0
    %1448 = vmatpush2.msra.mxu0 0.0
    %1449 = vmatprep.subr.mxu0 0.0
    %1450 = vmatpush2.msra.mxu0 0.0
    %1451 = vmatprep.subr.mxu0 0.0
    %1452 = vmatpush2.msra.mxu0 0.0
    %1453 = vmatprep.subr.mxu0 0.0
    %1454 = vmatpush2.msra.mxu0 0.0
    %1455 = vmatprep.subr.mxu0 0.0
    %1456 = vmatpush2.msra.mxu0 0.0
    %1457 = vmatprep.subr.mxu0 0.0
    %1458 = vmatpush2.msra.mxu0 0.0
    %1459 = vmatprep.subr.mxu0 0.0
    %1460 = vmatpush2.msra.mxu0 0.0
    %1461 = vmatprep.subr.mxu0 0.0
    %1462 = vmatpush2.msra.mxu0 0.0
    %1463 = vmatprep.subr.mxu0 0.0
    %1464 = vmatpush2.msra.mxu0 0.0
    %1465 = vmatprep.subr.mxu0 0.0
    %1466 = vmatpush2.msra.mxu0 0.0
    %1467 = vmatprep.subr.mxu0 0.0
    %1468 = vmatpush2.msra.mxu0 0.0
    %1469 = vmatprep.subr.mxu0 0.0
    %1470 = vmatpush2.msra.mxu0 0.0
    %1471 = vmatprep.subr.mxu0 0.0
    %1472 = vmatpush2.msra.mxu0 0.0
    %1473 = vmatprep.subr.mxu0 0.0
    %1474 = vmatpush2.msra.mxu0 0.0
    %1475 = vmatprep.subr.mxu0 0.0
    %1476 = vmatpush2.msra.mxu0 0.0
    %1477 = vmatprep.subr.mxu0 0.0
    %1478 = vmatpush2.msra.mxu0 0.0
    %1479 = vmatprep.mubr.f32.mxu0 0.0
    %1480 = vmatmul.mubr.f32.gmra.mxu0 %v1252
    %v1481 = vpop.f32.mrf.mxu0
    %v1482 = vadd.f32 0.0, %v1481
    %v1483 = vpop.f32.mrf.mxu0
    %v1484 = vadd.f32 0.0, %v1483
    %1485 = vdwg.mxu0
    %v1487 = vsel %vm205, %v1378, 0
    %1489 = vmatprep.subr.mxu0 0.0
    %1490 = vmatpush1.msra.mxu0 0.0
    %1491 = vmatprep.subr.mxu0 0.0
    %1492 = vmatpush1.msra.mxu0 0.0
    %1493 = vmatprep.subr.mxu0 0.0
    %1494 = vmatpush1.msra.mxu0 0.0
    %1495 = vmatprep.subr.mxu0 0.0
    %1496 = vmatpush1.msra.mxu0 0.0
    %1497 = vmatprep.subr.mxu0 0.0
    %1498 = vmatpush1.msra.mxu0 0.0
    %1499 = vmatprep.subr.mxu0 0.0
    %1500 = vmatpush1.msra.mxu0 0.0
    %1501 = vmatprep.subr.mxu0 0.0
    %1502 = vmatpush1.msra.mxu0 0.0
    %1503 = vmatprep.subr.mxu0 0.0
    %1504 = vmatpush1.msra.mxu0 0.0
    %1505 = vmatprep.subr.mxu0 0.0
    %1506 = vmatpush1.msra.mxu0 0.0
    %1507 = vmatprep.subr.mxu0 0.0
    %1508 = vmatpush1.msra.mxu0 0.0
    %1509 = vmatprep.subr.mxu0 0.0
    %1510 = vmatpush1.msra.mxu0 0.0
    %1511 = vmatprep.subr.mxu0 0.0
    %1512 = vmatpush1.msra.mxu0 0.0
    %1513 = vmatprep.subr.mxu0 0.0
    %1514 = vmatpush1.msra.mxu0 0.0
    %1515 = vmatprep.subr.mxu0 0.0
    %1516 = vmatpush1.msra.mxu0 0.0
    %1517 = vmatprep.subr.mxu0 %v1382
    %1518 = vmatpush1.msra.mxu0 %v1381
    %1519 = vmatprep.subr.mxu0 %v1380
    %1520 = vmatpush1.msra.mxu0 %v1379
    %1521 = vmatprep.subr.mxu0 0.0
    %1522 = vmatpush2.msra.mxu0 0.0
    %1523 = vmatprep.subr.mxu0 0.0
    %1524 = vmatpush2.msra.mxu0 0.0
    %1525 = vmatprep.subr.mxu0 0.0
    %1526 = vmatpush2.msra.mxu0 0.0
    %1527 = vmatprep.subr.mxu0 0.0
    %1528 = vmatpush2.msra.mxu0 0.0
    %1529 = vmatprep.subr.mxu0 0.0
    %1530 = vmatpush2.msra.mxu0 0.0
    %1531 = vmatprep.subr.mxu0 0.0
    %1532 = vmatpush2.msra.mxu0 0.0
    %1533 = vmatprep.subr.mxu0 0.0
    %1534 = vmatpush2.msra.mxu0 0.0
    %1535 = vmatprep.subr.mxu0 0.0
    %1536 = vmatpush2.msra.mxu0 0.0
    %1537 = vmatprep.subr.mxu0 0.0
    %1538 = vmatpush2.msra.mxu0 0.0
    %1539 = vmatprep.subr.mxu0 0.0
    %1540 = vmatpush2.msra.mxu0 0.0
    %1541 = vmatprep.subr.mxu0 0.0
    %1542 = vmatpush2.msra.mxu0 0.0
    %1543 = vmatprep.subr.mxu0 0.0
    %1544 = vmatpush2.msra.mxu0 0.0
    %1545 = vmatprep.subr.mxu0 0.0
    %1546 = vmatpush2.msra.mxu0 0.0
    %1547 = vmatprep.subr.mxu0 0.0
    %1548 = vmatpush2.msra.mxu0 0.0
    %1549 = vmatprep.subr.mxu0 0.0
    %1550 = vmatpush2.msra.mxu0 0.0
    %1551 = vmatprep.subr.mxu0 0.0
    %1552 = vmatpush2.msra.mxu0 0.0
    %1553 = vmatprep.mubr.f32.mxu0 0.0
    %1554 = vmatmul.mubr.f32.gmra.mxu0 %v1487
    %v1555 = vpop.f32.mrf.mxu0
    %v1556 = vadd.f32 %v1482, %v1555
    %v1557 = vpop.f32.mrf.mxu0
    %v1558 = vadd.f32 %v1484, %v1557
    %1559 = vdwg.mxu0
    %v1560 = vld [vmem:[%s4] sm:$0x3]
    %v1562 = vlaneseq
    %v1563 = vshrl.u32 %v1562, 7
    %v1564 = vsub.s32 0, %v1563
    %v1565 = vrot.slane %v1560, %v1564
    %v1566 = vlaneseq
    %v1567 = vshrl.u32 %v1566, 7
    %v1568 = vsub.s32 1, %v1567
    %v1569 = vrot.slane %v1560, %v1568
    %v1572 = vadd.f32 %v1556, %v1565
    %v1573 = vadd.f32 %v1558, %v1569
    %v1574 = vld [vmem:[#allocation10] sm:$0xff]
    %v1575 = vld [vmem:[#allocation10 + $0x8] sm:$0xff]
    %v1576 = vld [vmem:[#allocation10 + $0x10] sm:$0xff]
    %v1577 = vld [vmem:[#allocation10 + $0x18] sm:$0xff]
    %v1578 = vld [vmem:[#allocation10 + $0x20] sm:$0xff]
    %v1579 = vld [vmem:[#allocation10 + $0x28] sm:$0xff]
    %v1580 = vld [vmem:[#allocation10 + $0x30] sm:$0xff]
    %v1581 = vld [vmem:[#allocation10 + $0x38] sm:$0xff]
    %v1582 = vld [vmem:[#allocation10 + $0x40] sm:$0xff]
    %v1583 = vld [vmem:[#allocation10 + $0x48] sm:$0xff]
    %v1584 = vld [vmem:[#allocation10 + $0x50] sm:$0xff]
    %v1585 = vld [vmem:[#allocation10 + $0x58] sm:$0xff]
    %v1586 = vld [vmem:[#allocation10 + $0x60] sm:$0xff]
    %v1587 = vld [vmem:[#allocation10 + $0x68] sm:$0xff]
    %v1588 = vld [vmem:[#allocation10 + $0x70] sm:$0xff]
    %v1589 = vld [vmem:[#allocation10 + $0x78] sm:$0xff]
    %v1590 = vld [vmem:[#allocation10 + $0x80] sm:$0xff]
    %v1591 = vld [vmem:[#allocation10 + $0x88] sm:$0xff]
    %v1592 = vld [vmem:[#allocation10 + $0x90] sm:$0xff]
    %v1593 = vld [vmem:[#allocation10 + $0x98] sm:$0xff]
    %v1594 = vld [vmem:[#allocation10 + $0xa0] sm:$0xff]
    %v1595 = vld [vmem:[#allocation10 + $0xa8] sm:$0xff]
    %v1596 = vld [vmem:[#allocation10 + $0xb0] sm:$0xff]
    %v1597 = vld [vmem:[#allocation10 + $0xb8] sm:$0xff]
    %v1598 = vld [vmem:[#allocation10 + $0xc0] sm:$0xff]
    %v1599 = vld [vmem:[#allocation10 + $0xc8] sm:$0xff]
    %v1600 = vld [vmem:[#allocation10 + $0xd0] sm:$0xff]
    %v1601 = vld [vmem:[#allocation10 + $0xd8] sm:$0xff]
    %v1602 = vld [vmem:[#allocation10 + $0xe0] sm:$0xff]
    %v1603 = vld [vmem:[#allocation10 + $0xe8] sm:$0xff]
    %v1604 = vld [vmem:[#allocation10 + $0xf0] sm:$0xff]
    %v1605 = vld [vmem:[#allocation10 + $0xf8] sm:$0xff]
    %v1606 = vld [vmem:[%s6] sm:$0x1]
    %v1608 = vlaneseq
    %v1609 = vshrl.u32 %v1608, 7
    %v1610 = vsub.s32 0, %v1609
    %v1611 = vrot.slane %v1606, %v1610
    %1613 = vmatprep.subr.mxu0 0.0
    %1614 = vmatpush1.msra.mxu0 %v1589
    %1615 = vmatprep.subr.mxu0 0.0
    %1616 = vmatpush1.msra.mxu0 %v1588
    %1617 = vmatprep.subr.mxu0 0.0
    %1618 = vmatpush1.msra.mxu0 %v1587
    %1619 = vmatprep.subr.mxu0 0.0
    %1620 = vmatpush1.msra.mxu0 %v1586
    %1621 = vmatprep.subr.mxu0 0.0
    %1622 = vmatpush1.msra.mxu0 %v1585
    %1623 = vmatprep.subr.mxu0 0.0
    %1624 = vmatpush1.msra.mxu0 %v1584
    %1625 = vmatprep.subr.mxu0 0.0
    %1626 = vmatpush1.msra.mxu0 %v1583
    %1627 = vmatprep.subr.mxu0 0.0
    %1628 = vmatpush1.msra.mxu0 %v1582
    %1629 = vmatprep.subr.mxu0 0.0
    %1630 = vmatpush1.msra.mxu0 %v1581
    %1631 = vmatprep.subr.mxu0 0.0
    %1632 = vmatpush1.msra.mxu0 %v1580
    %1633 = vmatprep.subr.mxu0 0.0
    %1634 = vmatpush1.msra.mxu0 %v1579
    %1635 = vmatprep.subr.mxu0 0.0
    %1636 = vmatpush1.msra.mxu0 %v1578
    %1637 = vmatprep.subr.mxu0 0.0
    %1638 = vmatpush1.msra.mxu0 %v1577
    %1639 = vmatprep.subr.mxu0 0.0
    %1640 = vmatpush1.msra.mxu0 %v1576
    %1641 = vmatprep.subr.mxu0 0.0
    %1642 = vmatpush1.msra.mxu0 %v1575
    %1643 = vmatprep.subr.mxu0 0.0
    %1644 = vmatpush1.msra.mxu0 %v1574
    %1645 = vmatprep.subr.mxu0 0.0
    %1646 = vmatpush2.msra.mxu0 %v1605
    %1647 = vmatprep.subr.mxu0 0.0
    %1648 = vmatpush2.msra.mxu0 %v1604
    %1649 = vmatprep.subr.mxu0 0.0
    %1650 = vmatpush2.msra.mxu0 %v1603
    %1651 = vmatprep.subr.mxu0 0.0
    %1652 = vmatpush2.msra.mxu0 %v1602
    %1653 = vmatprep.subr.mxu0 0.0
    %1654 = vmatpush2.msra.mxu0 %v1601
    %1655 = vmatprep.subr.mxu0 0.0
    %1656 = vmatpush2.msra.mxu0 %v1600
    %1657 = vmatprep.subr.mxu0 0.0
    %1658 = vmatpush2.msra.mxu0 %v1599
    %1659 = vmatprep.subr.mxu0 0.0
    %1660 = vmatpush2.msra.mxu0 %v1598
    %1661 = vmatprep.subr.mxu0 0.0
    %1662 = vmatpush2.msra.mxu0 %v1597
    %1663 = vmatprep.subr.mxu0 0.0
    %1664 = vmatpush2.msra.mxu0 %v1596
    %1665 = vmatprep.subr.mxu0 0.0
    %1666 = vmatpush2.msra.mxu0 %v1595
    %1667 = vmatprep.subr.mxu0 0.0
    %1668 = vmatpush2.msra.mxu0 %v1594
    %1669 = vmatprep.subr.mxu0 0.0
    %1670 = vmatpush2.msra.mxu0 %v1593
    %1671 = vmatprep.subr.mxu0 0.0
    %1672 = vmatpush2.msra.mxu0 %v1592
    %1673 = vmatprep.subr.mxu0 0.0
    %1674 = vmatpush2.msra.mxu0 %v1591
    %1675 = vmatprep.subr.mxu0 0.0
    %1676 = vmatpush2.msra.mxu0 %v1590
    %1677 = vmatprep.mubr.f32.mxu0 %v1573
    %1678 = vmatmul.mubr.f32.gmra.mxu0 %v1572
    %v1679 = vpop.f32.mrf.mxu0
    %v1680 = vadd.f32 %v1611, %v1679
    %v1681 = vpop.f32.mrf.mxu0
    %1682 = vdwg.mxu0
    %v1683 = vsel %vm403, %v1680, -inf
    %1684 = vmax.xlane.f32.xlu0 %v1683
    %v1685 = vpop.xlane.xlu0 %1684
    %v1686 = vsub.f32 %v1680, %v1685
    %v1687 = vmul.f32 %v1686, 1.442695
    %v1688 = vpow.pop %v1687
    %v1689 = vsel %vm403, %v1688, 0.0
    %1690 = vadd.xlane.f32.xlu0 %v1689
    %v1691 = vpop.xlane.xlu0 %1690
    %v1692 = vlog2.pop %v1691
    %v1693 = vmul.f32 %v1692, 0.6931472
    %v1694 = vsub.f32 %v1686, %v1693
    %s1695 = scalar_lea.vmem [#allocation11], 8
    %1696 = vst [vmem:[%s1695] sm:$0x3] %v1694
    %s1697 = scalar_lea.vmem [#allocation2], 10
    %v1698 = vld [vmem:[%s1697] sm:$0x3]
    %v1699 = vld [vmem:[#allocation7] sm:$0xff]
    %v1700 = vld [vmem:[#allocation7 + $0x8] sm:$0xff]
    %v1701 = vld [vmem:[#allocation7 + $0x10] sm:$0xff]
    %v1702 = vld [vmem:[#allocation7 + $0x18] sm:$0xff]
    %v1703 = vld [vmem:[#allocation8] sm:$0xff]
    %v1704 = vld [vmem:[#allocation8 + $0x8] sm:$0xff]
    %v1705 = vld [vmem:[#allocation8 + $0x10] sm:$0xff]
    %v1706 = vld [vmem:[#allocation8 + $0x18] sm:$0xff]
    %v1707 = vld [vmem:[#allocation8 + $0x20] sm:$0xff]
    %v1708 = vld [vmem:[#allocation8 + $0x28] sm:$0xff]
    %v1709 = vld [vmem:[#allocation8 + $0x30] sm:$0xff]
    %v1710 = vld [vmem:[#allocation8 + $0x38] sm:$0xff]
    %v1711 = vld [vmem:[#allocation8 + $0x40] sm:$0xff]
    %v1712 = vld [vmem:[#allocation8 + $0x48] sm:$0xff]
    %v1713 = vld [vmem:[#allocation8 + $0x50] sm:$0xff]
    %v1714 = vld [vmem:[#allocation8 + $0x58] sm:$0xff]
    %v1715 = vld [vmem:[#allocation8 + $0x60] sm:$0xff]
    %v1716 = vld [vmem:[#allocation8 + $0x68] sm:$0xff]
    %v1717 = vld [vmem:[#allocation8 + $0x70] sm:$0xff]
    %v1718 = vld [vmem:[#allocation8 + $0x78] sm:$0xff]
    %v1719 = vld [vmem:[#allocation8 + $0x80] sm:$0xff]
    %v1720 = vld [vmem:[#allocation8 + $0x88] sm:$0xff]
    %v1721 = vld [vmem:[#allocation8 + $0x90] sm:$0xff]
    %v1722 = vld [vmem:[#allocation8 + $0x98] sm:$0xff]
    %v1723 = vld [vmem:[#allocation8 + $0xa0] sm:$0xff]
    %v1724 = vld [vmem:[#allocation8 + $0xa8] sm:$0xff]
    %v1725 = vld [vmem:[#allocation8 + $0xb0] sm:$0xff]
    %v1726 = vld [vmem:[#allocation8 + $0xb8] sm:$0xff]
    %v1727 = vld [vmem:[#allocation8 + $0xc0] sm:$0xff]
    %v1728 = vld [vmem:[#allocation8 + $0xc8] sm:$0xff]
    %v1729 = vld [vmem:[#allocation8 + $0xd0] sm:$0xff]
    %v1730 = vld [vmem:[#allocation8 + $0xd8] sm:$0xff]
    %v1731 = vld [vmem:[#allocation8 + $0xe0] sm:$0xff]
    %v1732 = vld [vmem:[#allocation8 + $0xe8] sm:$0xff]
    %v1733 = vld [vmem:[#allocation8 + $0xf0] sm:$0xff]
    %v1734 = vld [vmem:[#allocation8 + $0xf8] sm:$0xff]
    %1735 = vmatprep.subr.mxu0 %v1734
    %1736 = vmatpush1.msra.mxu0 %v1733
    %1737 = vmatprep.subr.mxu0 %v1732
    %1738 = vmatpush1.msra.mxu0 %v1731
    %1739 = vmatprep.subr.mxu0 %v1730
    %1740 = vmatpush1.msra.mxu0 %v1729
    %1741 = vmatprep.subr.mxu0 %v1728
    %1742 = vmatpush1.msra.mxu0 %v1727
    %1743 = vmatprep.subr.mxu0 %v1726
    %1744 = vmatpush1.msra.mxu0 %v1725
    %1745 = vmatprep.subr.mxu0 %v1724
    %1746 = vmatpush1.msra.mxu0 %v1723
    %1747 = vmatprep.subr.mxu0 %v1722
    %1748 = vmatpush1.msra.mxu0 %v1721
    %1749 = vmatprep.subr.mxu0 %v1720
    %1750 = vmatpush1.msra.mxu0 %v1719
    %1751 = vmatprep.subr.mxu0 %v1718
    %1752 = vmatpush1.msra.mxu0 %v1717
    %1753 = vmatprep.subr.mxu0 %v1716
    %1754 = vmatpush1.msra.mxu0 %v1715
    %1755 = vmatprep.subr.mxu0 %v1714
    %1756 = vmatpush1.msra.mxu0 %v1713
    %1757 = vmatprep.subr.mxu0 %v1712
    %1758 = vmatpush1.msra.mxu0 %v1711
    %1759 = vmatprep.subr.mxu0 %v1710
    %1760 = vmatpush1.msra.mxu0 %v1709
    %1761 = vmatprep.subr.mxu0 %v1708
    %1762 = vmatpush1.msra.mxu0 %v1707
    %1763 = vmatprep.subr.mxu0 %v1706
    %1764 = vmatpush1.msra.mxu0 %v1705
    %1765 = vmatprep.subr.mxu0 %v1704
    %1766 = vmatpush1.msra.mxu0 %v1703
    %1767 = vmatprep.subr.mxu0 0.0
    %1768 = vmatpush2.msra.mxu0 0.0
    %1769 = vmatprep.subr.mxu0 0.0
    %1770 = vmatpush2.msra.mxu0 0.0
    %1771 = vmatprep.subr.mxu0 0.0
    %1772 = vmatpush2.msra.mxu0 0.0
    %1773 = vmatprep.subr.mxu0 0.0
    %1774 = vmatpush2.msra.mxu0 0.0
    %1775 = vmatprep.subr.mxu0 0.0
    %1776 = vmatpush2.msra.mxu0 0.0
    %1777 = vmatprep.subr.mxu0 0.0
    %1778 = vmatpush2.msra.mxu0 0.0
    %1779 = vmatprep.subr.mxu0 0.0
    %1780 = vmatpush2.msra.mxu0 0.0
    %1781 = vmatprep.subr.mxu0 0.0
    %1782 = vmatpush2.msra.mxu0 0.0
    %1783 = vmatprep.subr.mxu0 0.0
    %1784 = vmatpush2.msra.mxu0 0.0
    %1785 = vmatprep.subr.mxu0 0.0
    %1786 = vmatpush2.msra.mxu0 0.0
    %1787 = vmatprep.subr.mxu0 0.0
    %1788 = vmatpush2.msra.mxu0 0.0
    %1789 = vmatprep.subr.mxu0 0.0
    %1790 = vmatpush2.msra.mxu0 0.0
    %1791 = vmatprep.subr.mxu0 0.0
    %1792 = vmatpush2.msra.mxu0 0.0
    %1793 = vmatprep.subr.mxu0 0.0
    %1794 = vmatpush2.msra.mxu0 0.0
    %1795 = vmatprep.subr.mxu0 0.0
    %1796 = vmatpush2.msra.mxu0 0.0
    %1797 = vmatprep.subr.mxu0 0.0
    %1798 = vmatpush2.msra.mxu0 0.0
    %1799 = vmatprep.mubr.f32.mxu0 0.0
    %1800 = vmatmul.mubr.f32.gmra.mxu0 %v1572
    %v1801 = vpop.f32.mrf.mxu0
    %v1802 = vadd.f32 0.0, %v1801
    %v1803 = vpop.f32.mrf.mxu0
    %v1804 = vadd.f32 0.0, %v1803
    %1805 = vdwg.mxu0
    %v1807 = vsel %vm205, %v1698, 0
    %1809 = vmatprep.subr.mxu0 0.0
    %1810 = vmatpush1.msra.mxu0 0.0
    %1811 = vmatprep.subr.mxu0 0.0
    %1812 = vmatpush1.msra.mxu0 0.0
    %1813 = vmatprep.subr.mxu0 0.0
    %1814 = vmatpush1.msra.mxu0 0.0
    %1815 = vmatprep.subr.mxu0 0.0
    %1816 = vmatpush1.msra.mxu0 0.0
    %1817 = vmatprep.subr.mxu0 0.0
    %1818 = vmatpush1.msra.mxu0 0.0
    %1819 = vmatprep.subr.mxu0 0.0
    %1820 = vmatpush1.msra.mxu0 0.0
    %1821 = vmatprep.subr.mxu0 0.0
    %1822 = vmatpush1.msra.mxu0 0.0
    %1823 = vmatprep.subr.mxu0 0.0
    %1824 = vmatpush1.msra.mxu0 0.0
    %1825 = vmatprep.subr.mxu0 0.0
    %1826 = vmatpush1.msra.mxu0 0.0
    %1827 = vmatprep.subr.mxu0 0.0
    %1828 = vmatpush1.msra.mxu0 0.0
    %1829 = vmatprep.subr.mxu0 0.0
    %1830 = vmatpush1.msra.mxu0 0.0
    %1831 = vmatprep.subr.mxu0 0.0
    %1832 = vmatpush1.msra.mxu0 0.0
    %1833 = vmatprep.subr.mxu0 0.0
    %1834 = vmatpush1.msra.mxu0 0.0
    %1835 = vmatprep.subr.mxu0 0.0
    %1836 = vmatpush1.msra.mxu0 0.0
    %1837 = vmatprep.subr.mxu0 %v1702
    %1838 = vmatpush1.msra.mxu0 %v1701
    %1839 = vmatprep.subr.mxu0 %v1700
    %1840 = vmatpush1.msra.mxu0 %v1699
    %1841 = vmatprep.subr.mxu0 0.0
    %1842 = vmatpush2.msra.mxu0 0.0
    %1843 = vmatprep.subr.mxu0 0.0
    %1844 = vmatpush2.msra.mxu0 0.0
    %1845 = vmatprep.subr.mxu0 0.0
    %1846 = vmatpush2.msra.mxu0 0.0
    %1847 = vmatprep.subr.mxu0 0.0
    %1848 = vmatpush2.msra.mxu0 0.0
    %1849 = vmatprep.subr.mxu0 0.0
    %1850 = vmatpush2.msra.mxu0 0.0
    %1851 = vmatprep.subr.mxu0 0.0
    %1852 = vmatpush2.msra.mxu0 0.0
    %1853 = vmatprep.subr.mxu0 0.0
    %1854 = vmatpush2.msra.mxu0 0.0
    %1855 = vmatprep.subr.mxu0 0.0
    %1856 = vmatpush2.msra.mxu0 0.0
    %1857 = vmatprep.subr.mxu0 0.0
    %1858 = vmatpush2.msra.mxu0 0.0
    %1859 = vmatprep.subr.mxu0 0.0
    %1860 = vmatpush2.msra.mxu0 0.0
    %1861 = vmatprep.subr.mxu0 0.0
    %1862 = vmatpush2.msra.mxu0 0.0
    %1863 = vmatprep.subr.mxu0 0.0
    %1864 = vmatpush2.msra.mxu0 0.0
    %1865 = vmatprep.subr.mxu0 0.0
    %1866 = vmatpush2.msra.mxu0 0.0
    %1867 = vmatprep.subr.mxu0 0.0
    %1868 = vmatpush2.msra.mxu0 0.0
    %1869 = vmatprep.subr.mxu0 0.0
    %1870 = vmatpush2.msra.mxu0 0.0
    %1871 = vmatprep.subr.mxu0 0.0
    %1872 = vmatpush2.msra.mxu0 0.0
    %1873 = vmatprep.mubr.f32.mxu0 0.0
    %1874 = vmatmul.mubr.f32.gmra.mxu0 %v1807
    %v1875 = vpop.f32.mrf.mxu0
    %v1876 = vadd.f32 %v1802, %v1875
    %v1877 = vpop.f32.mrf.mxu0
    %v1878 = vadd.f32 %v1804, %v1877
    %1879 = vdwg.mxu0
    %v1880 = vld [vmem:[%s4] sm:$0x3]
    %v1882 = vlaneseq
    %v1883 = vshrl.u32 %v1882, 7
    %v1884 = vsub.s32 0, %v1883
    %v1885 = vrot.slane %v1880, %v1884
    %v1886 = vlaneseq
    %v1887 = vshrl.u32 %v1886, 7
    %v1888 = vsub.s32 1, %v1887
    %v1889 = vrot.slane %v1880, %v1888
    %v1892 = vadd.f32 %v1876, %v1885
    %v1893 = vadd.f32 %v1878, %v1889
    %v1894 = vld [vmem:[#allocation10] sm:$0xff]
    %v1895 = vld [vmem:[#allocation10 + $0x8] sm:$0xff]
    %v1896 = vld [vmem:[#allocation10 + $0x10] sm:$0xff]
    %v1897 = vld [vmem:[#allocation10 + $0x18] sm:$0xff]
    %v1898 = vld [vmem:[#allocation10 + $0x20] sm:$0xff]
    %v1899 = vld [vmem:[#allocation10 + $0x28] sm:$0xff]
    %v1900 = vld [vmem:[#allocation10 + $0x30] sm:$0xff]
    %v1901 = vld [vmem:[#allocation10 + $0x38] sm:$0xff]
    %v1902 = vld [vmem:[#allocation10 + $0x40] sm:$0xff]
    %v1903 = vld [vmem:[#allocation10 + $0x48] sm:$0xff]
    %v1904 = vld [vmem:[#allocation10 + $0x50] sm:$0xff]
    %v1905 = vld [vmem:[#allocation10 + $0x58] sm:$0xff]
    %v1906 = vld [vmem:[#allocation10 + $0x60] sm:$0xff]
    %v1907 = vld [vmem:[#allocation10 + $0x68] sm:$0xff]
    %v1908 = vld [vmem:[#allocation10 + $0x70] sm:$0xff]
    %v1909 = vld [vmem:[#allocation10 + $0x78] sm:$0xff]
    %v1910 = vld [vmem:[#allocation10 + $0x80] sm:$0xff]
    %v1911 = vld [vmem:[#allocation10 + $0x88] sm:$0xff]
    %v1912 = vld [vmem:[#allocation10 + $0x90] sm:$0xff]
    %v1913 = vld [vmem:[#allocation10 + $0x98] sm:$0xff]
    %v1914 = vld [vmem:[#allocation10 + $0xa0] sm:$0xff]
    %v1915 = vld [vmem:[#allocation10 + $0xa8] sm:$0xff]
    %v1916 = vld [vmem:[#allocation10 + $0xb0] sm:$0xff]
    %v1917 = vld [vmem:[#allocation10 + $0xb8] sm:$0xff]
    %v1918 = vld [vmem:[#allocation10 + $0xc0] sm:$0xff]
    %v1919 = vld [vmem:[#allocation10 + $0xc8] sm:$0xff]
    %v1920 = vld [vmem:[#allocation10 + $0xd0] sm:$0xff]
    %v1921 = vld [vmem:[#allocation10 + $0xd8] sm:$0xff]
    %v1922 = vld [vmem:[#allocation10 + $0xe0] sm:$0xff]
    %v1923 = vld [vmem:[#allocation10 + $0xe8] sm:$0xff]
    %v1924 = vld [vmem:[#allocation10 + $0xf0] sm:$0xff]
    %v1925 = vld [vmem:[#allocation10 + $0xf8] sm:$0xff]
    %v1926 = vld [vmem:[%s6] sm:$0x1]
    %v1928 = vlaneseq
    %v1929 = vshrl.u32 %v1928, 7
    %v1930 = vsub.s32 0, %v1929
    %v1931 = vrot.slane %v1926, %v1930
    %1933 = vmatprep.subr.mxu0 0.0
    %1934 = vmatpush1.msra.mxu0 %v1909
    %1935 = vmatprep.subr.mxu0 0.0
    %1936 = vmatpush1.msra.mxu0 %v1908
    %1937 = vmatprep.subr.mxu0 0.0
    %1938 = vmatpush1.msra.mxu0 %v1907
    %1939 = vmatprep.subr.mxu0 0.0
    %1940 = vmatpush1.msra.mxu0 %v1906
    %1941 = vmatprep.subr.mxu0 0.0
    %1942 = vmatpush1.msra.mxu0 %v1905
    %1943 = vmatprep.subr.mxu0 0.0
    %1944 = vmatpush1.msra.mxu0 %v1904
    %1945 = vmatprep.subr.mxu0 0.0
    %1946 = vmatpush1.msra.mxu0 %v1903
    %1947 = vmatprep.subr.mxu0 0.0
    %1948 = vmatpush1.msra.mxu0 %v1902
    %1949 = vmatprep.subr.mxu0 0.0
    %1950 = vmatpush1.msra.mxu0 %v1901
    %1951 = vmatprep.subr.mxu0 0.0
    %1952 = vmatpush1.msra.mxu0 %v1900
    %1953 = vmatprep.subr.mxu0 0.0
    %1954 = vmatpush1.msra.mxu0 %v1899
    %1955 = vmatprep.subr.mxu0 0.0
    %1956 = vmatpush1.msra.mxu0 %v1898
    %1957 = vmatprep.subr.mxu0 0.0
    %1958 = vmatpush1.msra.mxu0 %v1897
    %1959 = vmatprep.subr.mxu0 0.0
    %1960 = vmatpush1.msra.mxu0 %v1896
    %1961 = vmatprep.subr.mxu0 0.0
    %1962 = vmatpush1.msra.mxu0 %v1895
    %1963 = vmatprep.subr.mxu0 0.0
    %1964 = vmatpush1.msra.mxu0 %v1894
    %1965 = vmatprep.subr.mxu0 0.0
    %1966 = vmatpush2.msra.mxu0 %v1925
    %1967 = vmatprep.subr.mxu0 0.0
    %1968 = vmatpush2.msra.mxu0 %v1924
    %1969 = vmatprep.subr.mxu0 0.0
    %1970 = vmatpush2.msra.mxu0 %v1923
    %1971 = vmatprep.subr.mxu0 0.0
    %1972 = vmatpush2.msra.mxu0 %v1922
    %1973 = vmatprep.subr.mxu0 0.0
    %1974 = vmatpush2.msra.mxu0 %v1921
    %1975 = vmatprep.subr.mxu0 0.0
    %1976 = vmatpush2.msra.mxu0 %v1920
    %1977 = vmatprep.subr.mxu0 0.0
    %1978 = vmatpush2.msra.mxu0 %v1919
    %1979 = vmatprep.subr.mxu0 0.0
    %1980 = vmatpush2.msra.mxu0 %v1918
    %1981 = vmatprep.subr.mxu0 0.0
    %1982 = vmatpush2.msra.mxu0 %v1917
    %1983 = vmatprep.subr.mxu0 0.0
    %1984 = vmatpush2.msra.mxu0 %v1916
    %1985 = vmatprep.subr.mxu0 0.0
    %1986 = vmatpush2.msra.mxu0 %v1915
    %1987 = vmatprep.subr.mxu0 0.0
    %1988 = vmatpush2.msra.mxu0 %v1914
    %1989 = vmatprep.subr.mxu0 0.0
    %1990 = vmatpush2.msra.mxu0 %v1913
    %1991 = vmatprep.subr.mxu0 0.0
    %1992 = vmatpush2.msra.mxu0 %v1912
    %1993 = vmatprep.subr.mxu0 0.0
    %1994 = vmatpush2.msra.mxu0 %v1911
    %1995 = vmatprep.subr.mxu0 0.0
    %1996 = vmatpush2.msra.mxu0 %v1910
    %1997 = vmatprep.mubr.f32.mxu0 %v1893
    %1998 = vmatmul.mubr.f32.gmra.mxu0 %v1892
    %v1999 = vpop.f32.mrf.mxu0
    %v2000 = vadd.f32 %v1931, %v1999
    %v2001 = vpop.f32.mrf.mxu0
    %2002 = vdwg.mxu0
    %v2003 = vsel %vm403, %v2000, -inf
    %2004 = vmax.xlane.f32.xlu0 %v2003
    %v2005 = vpop.xlane.xlu0 %2004
    %v2006 = vsub.f32 %v2000, %v2005
    %v2007 = vmul.f32 %v2006, 1.442695
    %v2008 = vpow.pop %v2007
    %v2009 = vsel %vm403, %v2008, 0.0
    %2010 = vadd.xlane.f32.xlu0 %v2009
    %v2011 = vpop.xlane.xlu0 %2010
    %v2012 = vlog2.pop %v2011
    %v2013 = vmul.f32 %v2012, 0.6931472
    %v2014 = vsub.f32 %v2006, %v2013
    %s2015 = scalar_lea.vmem [#allocation11], 10
    %2016 = vst [vmem:[%s2015] sm:$0x3] %v2014
    %s2017 = scalar_lea.vmem [#allocation2], 12
    %v2018 = vld [vmem:[%s2017] sm:$0x3]
    %v2019 = vld [vmem:[#allocation7] sm:$0xff]
    %v2020 = vld [vmem:[#allocation7 + $0x8] sm:$0xff]
    %v2021 = vld [vmem:[#allocation7 + $0x10] sm:$0xff]
    %v2022 = vld [vmem:[#allocation7 + $0x18] sm:$0xff]
    %v2023 = vld [vmem:[#allocation8] sm:$0xff]
    %v2024 = vld [vmem:[#allocation8 + $0x8] sm:$0xff]
    %v2025 = vld [vmem:[#allocation8 + $0x10] sm:$0xff]
    %v2026 = vld [vmem:[#allocation8 + $0x18] sm:$0xff]
    %v2027 = vld [vmem:[#allocation8 + $0x20] sm:$0xff]
    %v2028 = vld [vmem:[#allocation8 + $0x28] sm:$0xff]
    %v2029 = vld [vmem:[#allocation8 + $0x30] sm:$0xff]
    %v2030 = vld [vmem:[#allocation8 + $0x38] sm:$0xff]
    %v2031 = vld [vmem:[#allocation8 + $0x40] sm:$0xff]
    %v2032 = vld [vmem:[#allocation8 + $0x48] sm:$0xff]
    %v2033 = vld [vmem:[#allocation8 + $0x50] sm:$0xff]
    %v2034 = vld [vmem:[#allocation8 + $0x58] sm:$0xff]
    %v2035 = vld [vmem:[#allocation8 + $0x60] sm:$0xff]
    %v2036 = vld [vmem:[#allocation8 + $0x68] sm:$0xff]
    %v2037 = vld [vmem:[#allocation8 + $0x70] sm:$0xff]
    %v2038 = vld [vmem:[#allocation8 + $0x78] sm:$0xff]
    %v2039 = vld [vmem:[#allocation8 + $0x80] sm:$0xff]
    %v2040 = vld [vmem:[#allocation8 + $0x88] sm:$0xff]
    %v2041 = vld [vmem:[#allocation8 + $0x90] sm:$0xff]
    %v2042 = vld [vmem:[#allocation8 + $0x98] sm:$0xff]
    %v2043 = vld [vmem:[#allocation8 + $0xa0] sm:$0xff]
    %v2044 = vld [vmem:[#allocation8 + $0xa8] sm:$0xff]
    %v2045 = vld [vmem:[#allocation8 + $0xb0] sm:$0xff]
    %v2046 = vld [vmem:[#allocation8 + $0xb8] sm:$0xff]
    %v2047 = vld [vmem:[#allocation8 + $0xc0] sm:$0xff]
    %v2048 = vld [vmem:[#allocation8 + $0xc8] sm:$0xff]
    %v2049 = vld [vmem:[#allocation8 + $0xd0] sm:$0xff]
    %v2050 = vld [vmem:[#allocation8 + $0xd8] sm:$0xff]
    %v2051 = vld [vmem:[#allocation8 + $0xe0] sm:$0xff]
    %v2052 = vld [vmem:[#allocation8 + $0xe8] sm:$0xff]
    %v2053 = vld [vmem:[#allocation8 + $0xf0] sm:$0xff]
    %v2054 = vld [vmem:[#allocation8 + $0xf8] sm:$0xff]
    %2055 = vmatprep.subr.mxu0 %v2054
    %2056 = vmatpush1.msra.mxu0 %v2053
    %2057 = vmatprep.subr.mxu0 %v2052
    %2058 = vmatpush1.msra.mxu0 %v2051
    %2059 = vmatprep.subr.mxu0 %v2050
    %2060 = vmatpush1.msra.mxu0 %v2049
    %2061 = vmatprep.subr.mxu0 %v2048
    %2062 = vmatpush1.msra.mxu0 %v2047
    %2063 = vmatprep.subr.mxu0 %v2046
    %2064 = vmatpush1.msra.mxu0 %v2045
    %2065 = vmatprep.subr.mxu0 %v2044
    %2066 = vmatpush1.msra.mxu0 %v2043
    %2067 = vmatprep.subr.mxu0 %v2042
    %2068 = vmatpush1.msra.mxu0 %v2041
    %2069 = vmatprep.subr.mxu0 %v2040
    %2070 = vmatpush1.msra.mxu0 %v2039
    %2071 = vmatprep.subr.mxu0 %v2038
    %2072 = vmatpush1.msra.mxu0 %v2037
    %2073 = vmatprep.subr.mxu0 %v2036
    %2074 = vmatpush1.msra.mxu0 %v2035
    %2075 = vmatprep.subr.mxu0 %v2034
    %2076 = vmatpush1.msra.mxu0 %v2033
    %2077 = vmatprep.subr.mxu0 %v2032
    %2078 = vmatpush1.msra.mxu0 %v2031
    %2079 = vmatprep.subr.mxu0 %v2030
    %2080 = vmatpush1.msra.mxu0 %v2029
    %2081 = vmatprep.subr.mxu0 %v2028
    %2082 = vmatpush1.msra.mxu0 %v2027
    %2083 = vmatprep.subr.mxu0 %v2026
    %2084 = vmatpush1.msra.mxu0 %v2025
    %2085 = vmatprep.subr.mxu0 %v2024
    %2086 = vmatpush1.msra.mxu0 %v2023
    %2087 = vmatprep.subr.mxu0 0.0
    %2088 = vmatpush2.msra.mxu0 0.0
    %2089 = vmatprep.subr.mxu0 0.0
    %2090 = vmatpush2.msra.mxu0 0.0
    %2091 = vmatprep.subr.mxu0 0.0
    %2092 = vmatpush2.msra.mxu0 0.0
    %2093 = vmatprep.subr.mxu0 0.0
    %2094 = vmatpush2.msra.mxu0 0.0
    %2095 = vmatprep.subr.mxu0 0.0
    %2096 = vmatpush2.msra.mxu0 0.0
    %2097 = vmatprep.subr.mxu0 0.0
    %2098 = vmatpush2.msra.mxu0 0.0
    %2099 = vmatprep.subr.mxu0 0.0
    %2100 = vmatpush2.msra.mxu0 0.0
    %2101 = vmatprep.subr.mxu0 0.0
    %2102 = vmatpush2.msra.mxu0 0.0
    %2103 = vmatprep.subr.mxu0 0.0
    %2104 = vmatpush2.msra.mxu0 0.0
    %2105 = vmatprep.subr.mxu0 0.0
    %2106 = vmatpush2.msra.mxu0 0.0
    %2107 = vmatprep.subr.mxu0 0.0
    %2108 = vmatpush2.msra.mxu0 0.0
    %2109 = vmatprep.subr.mxu0 0.0
    %2110 = vmatpush2.msra.mxu0 0.0
    %2111 = vmatprep.subr.mxu0 0.0
    %2112 = vmatpush2.msra.mxu0 0.0
    %2113 = vmatprep.subr.mxu0 0.0
    %2114 = vmatpush2.msra.mxu0 0.0
    %2115 = vmatprep.subr.mxu0 0.0
    %2116 = vmatpush2.msra.mxu0 0.0
    %2117 = vmatprep.subr.mxu0 0.0
    %2118 = vmatpush2.msra.mxu0 0.0
    %2119 = vmatprep.mubr.f32.mxu0 0.0
    %2120 = vmatmul.mubr.f32.gmra.mxu0 %v1892
    %v2121 = vpop.f32.mrf.mxu0
    %v2122 = vadd.f32 0.0, %v2121
    %v2123 = vpop.f32.mrf.mxu0
    %v2124 = vadd.f32 0.0, %v2123
    %2125 = vdwg.mxu0
    %v2127 = vsel %vm205, %v2018, 0
    %2129 = vmatprep.subr.mxu0 0.0
    %2130 = vmatpush1.msra.mxu0 0.0
    %2131 = vmatprep.subr.mxu0 0.0
    %2132 = vmatpush1.msra.mxu0 0.0
    %2133 = vmatprep.subr.mxu0 0.0
    %2134 = vmatpush1.msra.mxu0 0.0
    %2135 = vmatprep.subr.mxu0 0.0
    %2136 = vmatpush1.msra.mxu0 0.0
    %2137 = vmatprep.subr.mxu0 0.0
    %2138 = vmatpush1.msra.mxu0 0.0
    %2139 = vmatprep.subr.mxu0 0.0
    %2140 = vmatpush1.msra.mxu0 0.0
    %2141 = vmatprep.subr.mxu0 0.0
    %2142 = vmatpush1.msra.mxu0 0.0
    %2143 = vmatprep.subr.mxu0 0.0
    %2144 = vmatpush1.msra.mxu0 0.0
    %2145 = vmatprep.subr.mxu0 0.0
    %2146 = vmatpush1.msra.mxu0 0.0
    %2147 = vmatprep.subr.mxu0 0.0
    %2148 = vmatpush1.msra.mxu0 0.0
    %2149 = vmatprep.subr.mxu0 0.0
    %2150 = vmatpush1.msra.mxu0 0.0
    %2151 = vmatprep.subr.mxu0 0.0
    %2152 = vmatpush1.msra.mxu0 0.0
    %2153 = vmatprep.subr.mxu0 0.0
    %2154 = vmatpush1.msra.mxu0 0.0
    %2155 = vmatprep.subr.mxu0 0.0
    %2156 = vmatpush1.msra.mxu0 0.0
    %2157 = vmatprep.subr.mxu0 %v2022
    %2158 = vmatpush1.msra.mxu0 %v2021
    %2159 = vmatprep.subr.mxu0 %v2020
    %2160 = vmatpush1.msra.mxu0 %v2019
    %2161 = vmatprep.subr.mxu0 0.0
    %2162 = vmatpush2.msra.mxu0 0.0
    %2163 = vmatprep.subr.mxu0 0.0
    %2164 = vmatpush2.msra.mxu0 0.0
    %2165 = vmatprep.subr.mxu0 0.0
    %2166 = vmatpush2.msra.mxu0 0.0
    %2167 = vmatprep.subr.mxu0 0.0
    %2168 = vmatpush2.msra.mxu0 0.0
    %2169 = vmatprep.subr.mxu0 0.0
    %2170 = vmatpush2.msra.mxu0 0.0
    %2171 = vmatprep.subr.mxu0 0.0
    %2172 = vmatpush2.msra.mxu0 0.0
    %2173 = vmatprep.subr.mxu0 0.0
    %2174 = vmatpush2.msra.mxu0 0.0
    %2175 = vmatprep.subr.mxu0 0.0
    %2176 = vmatpush2.msra.mxu0 0.0
    %2177 = vmatprep.subr.mxu0 0.0
    %2178 = vmatpush2.msra.mxu0 0.0
    %2179 = vmatprep.subr.mxu0 0.0
    %2180 = vmatpush2.msra.mxu0 0.0
    %2181 = vmatprep.subr.mxu0 0.0
    %2182 = vmatpush2.msra.mxu0 0.0
    %2183 = vmatprep.subr.mxu0 0.0
    %2184 = vmatpush2.msra.mxu0 0.0
    %2185 = vmatprep.subr.mxu0 0.0
    %2186 = vmatpush2.msra.mxu0 0.0
    %2187 = vmatprep.subr.mxu0 0.0
    %2188 = vmatpush2.msra.mxu0 0.0
    %2189 = vmatprep.subr.mxu0 0.0
    %2190 = vmatpush2.msra.mxu0 0.0
    %2191 = vmatprep.subr.mxu0 0.0
    %2192 = vmatpush2.msra.mxu0 0.0
    %2193 = vmatprep.mubr.f32.mxu0 0.0
    %2194 = vmatmul.mubr.f32.gmra.mxu0 %v2127
    %v2195 = vpop.f32.mrf.mxu0
    %v2196 = vadd.f32 %v2122, %v2195
    %v2197 = vpop.f32.mrf.mxu0
    %v2198 = vadd.f32 %v2124, %v2197
    %2199 = vdwg.mxu0
    %v2200 = vld [vmem:[%s4] sm:$0x3]
    %v2202 = vlaneseq
    %v2203 = vshrl.u32 %v2202, 7
    %v2204 = vsub.s32 0, %v2203
    %v2205 = vrot.slane %v2200, %v2204
    %v2206 = vlaneseq
    %v2207 = vshrl.u32 %v2206, 7
    %v2208 = vsub.s32 1, %v2207
    %v2209 = vrot.slane %v2200, %v2208
    %v2212 = vadd.f32 %v2196, %v2205
    %v2213 = vadd.f32 %v2198, %v2209
    %v2214 = vld [vmem:[#allocation10] sm:$0xff]
    %v2215 = vld [vmem:[#allocation10 + $0x8] sm:$0xff]
    %v2216 = vld [vmem:[#allocation10 + $0x10] sm:$0xff]
    %v2217 = vld [vmem:[#allocation10 + $0x18] sm:$0xff]
    %v2218 = vld [vmem:[#allocation10 + $0x20] sm:$0xff]
    %v2219 = vld [vmem:[#allocation10 + $0x28] sm:$0xff]
    %v2220 = vld [vmem:[#allocation10 + $0x30] sm:$0xff]
    %v2221 = vld [vmem:[#allocation10 + $0x38] sm:$0xff]
    %v2222 = vld [vmem:[#allocation10 + $0x40] sm:$0xff]
    %v2223 = vld [vmem:[#allocation10 + $0x48] sm:$0xff]
    %v2224 = vld [vmem:[#allocation10 + $0x50] sm:$0xff]
    %v2225 = vld [vmem:[#allocation10 + $0x58] sm:$0xff]
    %v2226 = vld [vmem:[#allocation10 + $0x60] sm:$0xff]
    %v2227 = vld [vmem:[#allocation10 + $0x68] sm:$0xff]
    %v2228 = vld [vmem:[#allocation10 + $0x70] sm:$0xff]
    %v2229 = vld [vmem:[#allocation10 + $0x78] sm:$0xff]
    %v2230 = vld [vmem:[#allocation10 + $0x80] sm:$0xff]
    %v2231 = vld [vmem:[#allocation10 + $0x88] sm:$0xff]
    %v2232 = vld [vmem:[#allocation10 + $0x90] sm:$0xff]
    %v2233 = vld [vmem:[#allocation10 + $0x98] sm:$0xff]
    %v2234 = vld [vmem:[#allocation10 + $0xa0] sm:$0xff]
    %v2235 = vld [vmem:[#allocation10 + $0xa8] sm:$0xff]
    %v2236 = vld [vmem:[#allocation10 + $0xb0] sm:$0xff]
    %v2237 = vld [vmem:[#allocation10 + $0xb8] sm:$0xff]
    %v2238 = vld [vmem:[#allocation10 + $0xc0] sm:$0xff]
    %v2239 = vld [vmem:[#allocation10 + $0xc8] sm:$0xff]
    %v2240 = vld [vmem:[#allocation10 + $0xd0] sm:$0xff]
    %v2241 = vld [vmem:[#allocation10 + $0xd8] sm:$0xff]
    %v2242 = vld [vmem:[#allocation10 + $0xe0] sm:$0xff]
    %v2243 = vld [vmem:[#allocation10 + $0xe8] sm:$0xff]
    %v2244 = vld [vmem:[#allocation10 + $0xf0] sm:$0xff]
    %v2245 = vld [vmem:[#allocation10 + $0xf8] sm:$0xff]
    %v2246 = vld [vmem:[%s6] sm:$0x1]
    %v2248 = vlaneseq
    %v2249 = vshrl.u32 %v2248, 7
    %v2250 = vsub.s32 0, %v2249
    %v2251 = vrot.slane %v2246, %v2250
    %2253 = vmatprep.subr.mxu0 0.0
    %2254 = vmatpush1.msra.mxu0 %v2229
    %2255 = vmatprep.subr.mxu0 0.0
    %2256 = vmatpush1.msra.mxu0 %v2228
    %2257 = vmatprep.subr.mxu0 0.0
    %2258 = vmatpush1.msra.mxu0 %v2227
    %2259 = vmatprep.subr.mxu0 0.0
    %2260 = vmatpush1.msra.mxu0 %v2226
    %2261 = vmatprep.subr.mxu0 0.0
    %2262 = vmatpush1.msra.mxu0 %v2225
    %2263 = vmatprep.subr.mxu0 0.0
    %2264 = vmatpush1.msra.mxu0 %v2224
    %2265 = vmatprep.subr.mxu0 0.0
    %2266 = vmatpush1.msra.mxu0 %v2223
    %2267 = vmatprep.subr.mxu0 0.0
    %2268 = vmatpush1.msra.mxu0 %v2222
    %2269 = vmatprep.subr.mxu0 0.0
    %2270 = vmatpush1.msra.mxu0 %v2221
    %2271 = vmatprep.subr.mxu0 0.0
    %2272 = vmatpush1.msra.mxu0 %v2220
    %2273 = vmatprep.subr.mxu0 0.0
    %2274 = vmatpush1.msra.mxu0 %v2219
    %2275 = vmatprep.subr.mxu0 0.0
    %2276 = vmatpush1.msra.mxu0 %v2218
    %2277 = vmatprep.subr.mxu0 0.0
    %2278 = vmatpush1.msra.mxu0 %v2217
    %2279 = vmatprep.subr.mxu0 0.0
    %2280 = vmatpush1.msra.mxu0 %v2216
    %2281 = vmatprep.subr.mxu0 0.0
    %2282 = vmatpush1.msra.mxu0 %v2215
    %2283 = vmatprep.subr.mxu0 0.0
    %2284 = vmatpush1.msra.mxu0 %v2214
    %2285 = vmatprep.subr.mxu0 0.0
    %2286 = vmatpush2.msra.mxu0 %v2245
    %2287 = vmatprep.subr.mxu0 0.0
    %2288 = vmatpush2.msra.mxu0 %v2244
    %2289 = vmatprep.subr.mxu0 0.0
    %2290 = vmatpush2.msra.mxu0 %v2243
    %2291 = vmatprep.subr.mxu0 0.0
    %2292 = vmatpush2.msra.mxu0 %v2242
    %2293 = vmatprep.subr.mxu0 0.0
    %2294 = vmatpush2.msra.mxu0 %v2241
    %2295 = vmatprep.subr.mxu0 0.0
    %2296 = vmatpush2.msra.mxu0 %v2240
    %2297 = vmatprep.subr.mxu0 0.0
    %2298 = vmatpush2.msra.mxu0 %v2239
    %2299 = vmatprep.subr.mxu0 0.0
    %2300 = vmatpush2.msra.mxu0 %v2238
    %2301 = vmatprep.subr.mxu0 0.0
    %2302 = vmatpush2.msra.mxu0 %v2237
    %2303 = vmatprep.subr.mxu0 0.0
    %2304 = vmatpush2.msra.mxu0 %v2236
    %2305 = vmatprep.subr.mxu0 0.0
    %2306 = vmatpush2.msra.mxu0 %v2235
    %2307 = vmatprep.subr.mxu0 0.0
    %2308 = vmatpush2.msra.mxu0 %v2234
    %2309 = vmatprep.subr.mxu0 0.0
    %2310 = vmatpush2.msra.mxu0 %v2233
    %2311 = vmatprep.subr.mxu0 0.0
    %2312 = vmatpush2.msra.mxu0 %v2232
    %2313 = vmatprep.subr.mxu0 0.0
    %2314 = vmatpush2.msra.mxu0 %v2231
    %2315 = vmatprep.subr.mxu0 0.0
    %2316 = vmatpush2.msra.mxu0 %v2230
    %2317 = vmatprep.mubr.f32.mxu0 %v2213
    %2318 = vmatmul.mubr.f32.gmra.mxu0 %v2212
    %v2319 = vpop.f32.mrf.mxu0
    %v2320 = vadd.f32 %v2251, %v2319
    %v2321 = vpop.f32.mrf.mxu0
    %2322 = vdwg.mxu0
    %v2323 = vsel %vm403, %v2320, -inf
    %2324 = vmax.xlane.f32.xlu0 %v2323
    %v2325 = vpop.xlane.xlu0 %2324
    %v2326 = vsub.f32 %v2320, %v2325
    %v2327 = vmul.f32 %v2326, 1.442695
    %v2328 = vpow.pop %v2327
    %v2329 = vsel %vm403, %v2328, 0.0
    %2330 = vadd.xlane.f32.xlu0 %v2329
    %v2331 = vpop.xlane.xlu0 %2330
    %v2332 = vlog2.pop %v2331
    %v2333 = vmul.f32 %v2332, 0.6931472
    %v2334 = vsub.f32 %v2326, %v2333
    %s2335 = scalar_lea.vmem [#allocation11], 12
    %2336 = vst [vmem:[%s2335] sm:$0x3] %v2334
    %s2337 = scalar_lea.vmem [#allocation2], 14
    %v2338 = vld [vmem:[%s2337] sm:$0x3]
    %v2339 = vld [vmem:[#allocation7] sm:$0xff]
    %v2340 = vld [vmem:[#allocation7 + $0x8] sm:$0xff]
    %v2341 = vld [vmem:[#allocation7 + $0x10] sm:$0xff]
    %v2342 = vld [vmem:[#allocation7 + $0x18] sm:$0xff]
    %v2343 = vld [vmem:[#allocation8] sm:$0xff]
    %v2344 = vld [vmem:[#allocation8 + $0x8] sm:$0xff]
    %v2345 = vld [vmem:[#allocation8 + $0x10] sm:$0xff]
    %v2346 = vld [vmem:[#allocation8 + $0x18] sm:$0xff]
    %v2347 = vld [vmem:[#allocation8 + $0x20] sm:$0xff]
    %v2348 = vld [vmem:[#allocation8 + $0x28] sm:$0xff]
    %v2349 = vld [vmem:[#allocation8 + $0x30] sm:$0xff]
    %v2350 = vld [vmem:[#allocation8 + $0x38] sm:$0xff]
    %v2351 = vld [vmem:[#allocation8 + $0x40] sm:$0xff]
    %v2352 = vld [vmem:[#allocation8 + $0x48] sm:$0xff]
    %v2353 = vld [vmem:[#allocation8 + $0x50] sm:$0xff]
    %v2354 = vld [vmem:[#allocation8 + $0x58] sm:$0xff]
    %v2355 = vld [vmem:[#allocation8 + $0x60] sm:$0xff]
    %v2356 = vld [vmem:[#allocation8 + $0x68] sm:$0xff]
    %v2357 = vld [vmem:[#allocation8 + $0x70] sm:$0xff]
    %v2358 = vld [vmem:[#allocation8 + $0x78] sm:$0xff]
    %v2359 = vld [vmem:[#allocation8 + $0x80] sm:$0xff]
    %v2360 = vld [vmem:[#allocation8 + $0x88] sm:$0xff]
    %v2361 = vld [vmem:[#allocation8 + $0x90] sm:$0xff]
    %v2362 = vld [vmem:[#allocation8 + $0x98] sm:$0xff]
    %v2363 = vld [vmem:[#allocation8 + $0xa0] sm:$0xff]
    %v2364 = vld [vmem:[#allocation8 + $0xa8] sm:$0xff]
    %v2365 = vld [vmem:[#allocation8 + $0xb0] sm:$0xff]
    %v2366 = vld [vmem:[#allocation8 + $0xb8] sm:$0xff]
    %v2367 = vld [vmem:[#allocation8 + $0xc0] sm:$0xff]
    %v2368 = vld [vmem:[#allocation8 + $0xc8] sm:$0xff]
    %v2369 = vld [vmem:[#allocation8 + $0xd0] sm:$0xff]
    %v2370 = vld [vmem:[#allocation8 + $0xd8] sm:$0xff]
    %v2371 = vld [vmem:[#allocation8 + $0xe0] sm:$0xff]
    %v2372 = vld [vmem:[#allocation8 + $0xe8] sm:$0xff]
    %v2373 = vld [vmem:[#allocation8 + $0xf0] sm:$0xff]
    %v2374 = vld [vmem:[#allocation8 + $0xf8] sm:$0xff]
    %2375 = vmatprep.subr.mxu0 %v2374
    %2376 = vmatpush1.msra.mxu0 %v2373
    %2377 = vmatprep.subr.mxu0 %v2372
    %2378 = vmatpush1.msra.mxu0 %v2371
    %2379 = vmatprep.subr.mxu0 %v2370
    %2380 = vmatpush1.msra.mxu0 %v2369
    %2381 = vmatprep.subr.mxu0 %v2368
    %2382 = vmatpush1.msra.mxu0 %v2367
    %2383 = vmatprep.subr.mxu0 %v2366
    %2384 = vmatpush1.msra.mxu0 %v2365
    %2385 = vmatprep.subr.mxu0 %v2364
    %2386 = vmatpush1.msra.mxu0 %v2363
    %2387 = vmatprep.subr.mxu0 %v2362
    %2388 = vmatpush1.msra.mxu0 %v2361
    %2389 = vmatprep.subr.mxu0 %v2360
    %2390 = vmatpush1.msra.mxu0 %v2359
    %2391 = vmatprep.subr.mxu0 %v2358
    %2392 = vmatpush1.msra.mxu0 %v2357
    %2393 = vmatprep.subr.mxu0 %v2356
    %2394 = vmatpush1.msra.mxu0 %v2355
    %2395 = vmatprep.subr.mxu0 %v2354
    %2396 = vmatpush1.msra.mxu0 %v2353
    %2397 = vmatprep.subr.mxu0 %v2352
    %2398 = vmatpush1.msra.mxu0 %v2351
    %2399 = vmatprep.subr.mxu0 %v2350
    %2400 = vmatpush1.msra.mxu0 %v2349
    %2401 = vmatprep.subr.mxu0 %v2348
    %2402 = vmatpush1.msra.mxu0 %v2347
    %2403 = vmatprep.subr.mxu0 %v2346
    %2404 = vmatpush1.msra.mxu0 %v2345
    %2405 = vmatprep.subr.mxu0 %v2344
    %2406 = vmatpush1.msra.mxu0 %v2343
    %2407 = vmatprep.subr.mxu0 0.0
    %2408 = vmatpush2.msra.mxu0 0.0
    %2409 = vmatprep.subr.mxu0 0.0
    %2410 = vmatpush2.msra.mxu0 0.0
    %2411 = vmatprep.subr.mxu0 0.0
    %2412 = vmatpush2.msra.mxu0 0.0
    %2413 = vmatprep.subr.mxu0 0.0
    %2414 = vmatpush2.msra.mxu0 0.0
    %2415 = vmatprep.subr.mxu0 0.0
    %2416 = vmatpush2.msra.mxu0 0.0
    %2417 = vmatprep.subr.mxu0 0.0
    %2418 = vmatpush2.msra.mxu0 0.0
    %2419 = vmatprep.subr.mxu0 0.0
    %2420 = vmatpush2.msra.mxu0 0.0
    %2421 = vmatprep.subr.mxu0 0.0
    %2422 = vmatpush2.msra.mxu0 0.0
    %2423 = vmatprep.subr.mxu0 0.0
    %2424 = vmatpush2.msra.mxu0 0.0
    %2425 = vmatprep.subr.mxu0 0.0
    %2426 = vmatpush2.msra.mxu0 0.0
    %2427 = vmatprep.subr.mxu0 0.0
    %2428 = vmatpush2.msra.mxu0 0.0
    %2429 = vmatprep.subr.mxu0 0.0
    %2430 = vmatpush2.msra.mxu0 0.0
    %2431 = vmatprep.subr.mxu0 0.0
    %2432 = vmatpush2.msra.mxu0 0.0
    %2433 = vmatprep.subr.mxu0 0.0
    %2434 = vmatpush2.msra.mxu0 0.0
    %2435 = vmatprep.subr.mxu0 0.0
    %2436 = vmatpush2.msra.mxu0 0.0
    %2437 = vmatprep.subr.mxu0 0.0
    %2438 = vmatpush2.msra.mxu0 0.0
    %2439 = vmatprep.mubr.f32.mxu0 0.0
    %2440 = vmatmul.mubr.f32.gmra.mxu0 %v2212
    %v2441 = vpop.f32.mrf.mxu0
    %v2442 = vadd.f32 0.0, %v2441
    %v2443 = vpop.f32.mrf.mxu0
    %v2444 = vadd.f32 0.0, %v2443
    %2445 = vdwg.mxu0
    %v2447 = vsel %vm205, %v2338, 0
    %2449 = vmatprep.subr.mxu0 0.0
    %2450 = vmatpush1.msra.mxu0 0.0
    %2451 = vmatprep.subr.mxu0 0.0
    %2452 = vmatpush1.msra.mxu0 0.0
    %2453 = vmatprep.subr.mxu0 0.0
    %2454 = vmatpush1.msra.mxu0 0.0
    %2455 = vmatprep.subr.mxu0 0.0
    %2456 = vmatpush1.msra.mxu0 0.0
    %2457 = vmatprep.subr.mxu0 0.0
    %2458 = vmatpush1.msra.mxu0 0.0
    %2459 = vmatprep.subr.mxu0 0.0
    %2460 = vmatpush1.msra.mxu0 0.0
    %2461 = vmatprep.subr.mxu0 0.0
    %2462 = vmatpush1.msra.mxu0 0.0
    %2463 = vmatprep.subr.mxu0 0.0
    %2464 = vmatpush1.msra.mxu0 0.0
    %2465 = vmatprep.subr.mxu0 0.0
    %2466 = vmatpush1.msra.mxu0 0.0
    %2467 = vmatprep.subr.mxu0 0.0
    %2468 = vmatpush1.msra.mxu0 0.0
    %2469 = vmatprep.subr.mxu0 0.0
    %2470 = vmatpush1.msra.mxu0 0.0
    %2471 = vmatprep.subr.mxu0 0.0
    %2472 = vmatpush1.msra.mxu0 0.0
    %2473 = vmatprep.subr.mxu0 0.0
    %2474 = vmatpush1.msra.mxu0 0.0
    %2475 = vmatprep.subr.mxu0 0.0
    %2476 = vmatpush1.msra.mxu0 0.0
    %2477 = vmatprep.subr.mxu0 %v2342
    %2478 = vmatpush1.msra.mxu0 %v2341
    %2479 = vmatprep.subr.mxu0 %v2340
    %2480 = vmatpush1.msra.mxu0 %v2339
    %2481 = vmatprep.subr.mxu0 0.0
    %2482 = vmatpush2.msra.mxu0 0.0
    %2483 = vmatprep.subr.mxu0 0.0
    %2484 = vmatpush2.msra.mxu0 0.0
    %2485 = vmatprep.subr.mxu0 0.0
    %2486 = vmatpush2.msra.mxu0 0.0
    %2487 = vmatprep.subr.mxu0 0.0
    %2488 = vmatpush2.msra.mxu0 0.0
    %2489 = vmatprep.subr.mxu0 0.0
    %2490 = vmatpush2.msra.mxu0 0.0
    %2491 = vmatprep.subr.mxu0 0.0
    %2492 = vmatpush2.msra.mxu0 0.0
    %2493 = vmatprep.subr.mxu0 0.0
    %2494 = vmatpush2.msra.mxu0 0.0
    %2495 = vmatprep.subr.mxu0 0.0
    %2496 = vmatpush2.msra.mxu0 0.0
    %2497 = vmatprep.subr.mxu0 0.0
    %2498 = vmatpush2.msra.mxu0 0.0
    %2499 = vmatprep.subr.mxu0 0.0
    %2500 = vmatpush2.msra.mxu0 0.0
    %2501 = vmatprep.subr.mxu0 0.0
    %2502 = vmatpush2.msra.mxu0 0.0
    %2503 = vmatprep.subr.mxu0 0.0
    %2504 = vmatpush2.msra.mxu0 0.0
    %2505 = vmatprep.subr.mxu0 0.0
    %2506 = vmatpush2.msra.mxu0 0.0
    %2507 = vmatprep.subr.mxu0 0.0
    %2508 = vmatpush2.msra.mxu0 0.0
    %2509 = vmatprep.subr.mxu0 0.0
    %2510 = vmatpush2.msra.mxu0 0.0
    %2511 = vmatprep.subr.mxu0 0.0
    %2512 = vmatpush2.msra.mxu0 0.0
    %2513 = vmatprep.mubr.f32.mxu0 0.0
    %2514 = vmatmul.mubr.f32.gmra.mxu0 %v2447
    %v2515 = vpop.f32.mrf.mxu0
    %v2516 = vadd.f32 %v2442, %v2515
    %v2517 = vpop.f32.mrf.mxu0
    %v2518 = vadd.f32 %v2444, %v2517
    %2519 = vdwg.mxu0
    %v2520 = vld [vmem:[%s4] sm:$0x3]
    %v2522 = vlaneseq
    %v2523 = vshrl.u32 %v2522, 7
    %v2524 = vsub.s32 0, %v2523
    %v2525 = vrot.slane %v2520, %v2524
    %v2526 = vlaneseq
    %v2527 = vshrl.u32 %v2526, 7
    %v2528 = vsub.s32 1, %v2527
    %v2529 = vrot.slane %v2520, %v2528
    %v2532 = vadd.f32 %v2516, %v2525
    %v2533 = vadd.f32 %v2518, %v2529
    %v2534 = vld [vmem:[#allocation10] sm:$0xff]
    %v2535 = vld [vmem:[#allocation10 + $0x8] sm:$0xff]
    %v2536 = vld [vmem:[#allocation10 + $0x10] sm:$0xff]
    %v2537 = vld [vmem:[#allocation10 + $0x18] sm:$0xff]
    %v2538 = vld [vmem:[#allocation10 + $0x20] sm:$0xff]
    %v2539 = vld [vmem:[#allocation10 + $0x28] sm:$0xff]
    %v2540 = vld [vmem:[#allocation10 + $0x30] sm:$0xff]
    %v2541 = vld [vmem:[#allocation10 + $0x38] sm:$0xff]
    %v2542 = vld [vmem:[#allocation10 + $0x40] sm:$0xff]
    %v2543 = vld [vmem:[#allocation10 + $0x48] sm:$0xff]
    %v2544 = vld [vmem:[#allocation10 + $0x50] sm:$0xff]
    %v2545 = vld [vmem:[#allocation10 + $0x58] sm:$0xff]
    %v2546 = vld [vmem:[#allocation10 + $0x60] sm:$0xff]
    %v2547 = vld [vmem:[#allocation10 + $0x68] sm:$0xff]
    %v2548 = vld [vmem:[#allocation10 + $0x70] sm:$0xff]
    %v2549 = vld [vmem:[#allocation10 + $0x78] sm:$0xff]
    %v2550 = vld [vmem:[#allocation10 + $0x80] sm:$0xff]
    %v2551 = vld [vmem:[#allocation10 + $0x88] sm:$0xff]
    %v2552 = vld [vmem:[#allocation10 + $0x90] sm:$0xff]
    %v2553 = vld [vmem:[#allocation10 + $0x98] sm:$0xff]
    %v2554 = vld [vmem:[#allocation10 + $0xa0] sm:$0xff]
    %v2555 = vld [vmem:[#allocation10 + $0xa8] sm:$0xff]
    %v2556 = vld [vmem:[#allocation10 + $0xb0] sm:$0xff]
    %v2557 = vld [vmem:[#allocation10 + $0xb8] sm:$0xff]
    %v2558 = vld [vmem:[#allocation10 + $0xc0] sm:$0xff]
    %v2559 = vld [vmem:[#allocation10 + $0xc8] sm:$0xff]
    %v2560 = vld [vmem:[#allocation10 + $0xd0] sm:$0xff]
    %v2561 = vld [vmem:[#allocation10 + $0xd8] sm:$0xff]
    %v2562 = vld [vmem:[#allocation10 + $0xe0] sm:$0xff]
    %v2563 = vld [vmem:[#allocation10 + $0xe8] sm:$0xff]
    %v2564 = vld [vmem:[#allocation10 + $0xf0] sm:$0xff]
    %v2565 = vld [vmem:[#allocation10 + $0xf8] sm:$0xff]
    %v2566 = vld [vmem:[%s6] sm:$0x1]
    %v2568 = vlaneseq
    %v2569 = vshrl.u32 %v2568, 7
    %v2570 = vsub.s32 0, %v2569
    %v2571 = vrot.slane %v2566, %v2570
    %2573 = vmatprep.subr.mxu0 0.0
    %2574 = vmatpush1.msra.mxu0 %v2549
    %2575 = vmatprep.subr.mxu0 0.0
    %2576 = vmatpush1.msra.mxu0 %v2548
    %2577 = vmatprep.subr.mxu0 0.0
    %2578 = vmatpush1.msra.mxu0 %v2547
    %2579 = vmatprep.subr.mxu0 0.0
    %2580 = vmatpush1.msra.mxu0 %v2546
    %2581 = vmatprep.subr.mxu0 0.0
    %2582 = vmatpush1.msra.mxu0 %v2545
    %2583 = vmatprep.subr.mxu0 0.0
    %2584 = vmatpush1.msra.mxu0 %v2544
    %2585 = vmatprep.subr.mxu0 0.0
    %2586 = vmatpush1.msra.mxu0 %v2543
    %2587 = vmatprep.subr.mxu0 0.0
    %2588 = vmatpush1.msra.mxu0 %v2542
    %2589 = vmatprep.subr.mxu0 0.0
    %2590 = vmatpush1.msra.mxu0 %v2541
    %2591 = vmatprep.subr.mxu0 0.0
    %2592 = vmatpush1.msra.mxu0 %v2540
    %2593 = vmatprep.subr.mxu0 0.0
    %2594 = vmatpush1.msra.mxu0 %v2539
    %2595 = vmatprep.subr.mxu0 0.0
    %2596 = vmatpush1.msra.mxu0 %v2538
    %2597 = vmatprep.subr.mxu0 0.0
    %2598 = vmatpush1.msra.mxu0 %v2537
    %2599 = vmatprep.subr.mxu0 0.0
    %2600 = vmatpush1.msra.mxu0 %v2536
    %2601 = vmatprep.subr.mxu0 0.0
    %2602 = vmatpush1.msra.mxu0 %v2535
    %2603 = vmatprep.subr.mxu0 0.0
    %2604 = vmatpush1.msra.mxu0 %v2534
    %2605 = vmatprep.subr.mxu0 0.0
    %2606 = vmatpush2.msra.mxu0 %v2565
    %2607 = vmatprep.subr.mxu0 0.0
    %2608 = vmatpush2.msra.mxu0 %v2564
    %2609 = vmatprep.subr.mxu0 0.0
    %2610 = vmatpush2.msra.mxu0 %v2563
    %2611 = vmatprep.subr.mxu0 0.0
    %2612 = vmatpush2.msra.mxu0 %v2562
    %2613 = vmatprep.subr.mxu0 0.0
    %2614 = vmatpush2.msra.mxu0 %v2561
    %2615 = vmatprep.subr.mxu0 0.0
    %2616 = vmatpush2.msra.mxu0 %v2560
    %2617 = vmatprep.subr.mxu0 0.0
    %2618 = vmatpush2.msra.mxu0 %v2559
    %2619 = vmatprep.subr.mxu0 0.0
    %2620 = vmatpush2.msra.mxu0 %v2558
    %2621 = vmatprep.subr.mxu0 0.0
    %2622 = vmatpush2.msra.mxu0 %v2557
    %2623 = vmatprep.subr.mxu0 0.0
    %2624 = vmatpush2.msra.mxu0 %v2556
    %2625 = vmatprep.subr.mxu0 0.0
    %2626 = vmatpush2.msra.mxu0 %v2555
    %2627 = vmatprep.subr.mxu0 0.0
    %2628 = vmatpush2.msra.mxu0 %v2554
    %2629 = vmatprep.subr.mxu0 0.0
    %2630 = vmatpush2.msra.mxu0 %v2553
    %2631 = vmatprep.subr.mxu0 0.0
    %2632 = vmatpush2.msra.mxu0 %v2552
    %2633 = vmatprep.subr.mxu0 0.0
    %2634 = vmatpush2.msra.mxu0 %v2551
    %2635 = vmatprep.subr.mxu0 0.0
    %2636 = vmatpush2.msra.mxu0 %v2550
    %2637 = vmatprep.mubr.f32.mxu0 %v2533
    %2638 = vmatmul.mubr.f32.gmra.mxu0 %v2532
    %v2639 = vpop.f32.mrf.mxu0
    %v2640 = vadd.f32 %v2571, %v2639
    %v2641 = vpop.f32.mrf.mxu0
    %2642 = vdwg.mxu0
    %v2643 = vsel %vm403, %v2640, -inf
    %2644 = vmax.xlane.f32.xlu0 %v2643
    %v2645 = vpop.xlane.xlu0 %2644
    %v2646 = vsub.f32 %v2640, %v2645
    %v2647 = vmul.f32 %v2646, 1.442695
    %v2648 = vpow.pop %v2647
    %v2649 = vsel %vm403, %v2648, 0.0
    %2650 = vadd.xlane.f32.xlu0 %v2649
    %v2651 = vpop.xlane.xlu0 %2650
    %v2652 = vlog2.pop %v2651
    %v2653 = vmul.f32 %v2652, 0.6931472
    %v2654 = vsub.f32 %v2646, %v2653
    %s2655 = scalar_lea.vmem [#allocation11], 14
    %2656 = vst [vmem:[%s2655] sm:$0x3] %v2654
    %2657 = vst [vmem:[#allocation12] sm:$0x3] %v2532
    // Predicated region
    $region50: #{tpu_custom_call.1} parent=1 // pred_check
      _
    $region51: #{tpu_custom_call.1} parent=1 // pred_check_branch
      %2659 = sbr.rel (0) target = $region53
    $region52: #{tpu_custom_call.1} parent=1 // pred_region
      %s2661 = ssub.s32 256, 256
      %2662 = vsyncadd [#allocation4], %s2661
      %s2663 = sshll.u32 [#allocation11], 4
      %s2664 = int_to_ptr.vmem [resolvable:$true] %s2663
      %2669 = dma.vmem_to_hbm [thread:$0]  %s2664, 256, %s7, [#allocation4], 32, 32, 2
    $region53: #{tpu_custom_call.1} parent=1 // pred_fallthru
      _
    // Predicated region
    $region54: #{tpu_custom_call.1} parent=1 // pred_check
      _
    $region55: #{tpu_custom_call.1} parent=1 // pred_check_branch
      %2671 = sbr.rel (0) target = $region57
    $region56: #{tpu_custom_call.1} parent=1 // pred_region
      %s2673 = ssub.s32 32, 32
      %2674 = vsyncadd [#allocation13], %s2673
      %s2676 = sshll.u32 [#allocation12], 4
      %s2677 = int_to_ptr.vmem [resolvable:$true] %s2676
      %2679 = dma.vmem_to_hbm [thread:$0]  %s2677, 32, %s8, [#allocation13]
    $region57: #{tpu_custom_call.1} parent=1 // pred_fallthru
      _
    // Predicated region
    $region58: #{tpu_custom_call.1} parent=1 // pred_check
      _
    $region59: #{tpu_custom_call.1} parent=1 // pred_check_branch
      %2681 = sbr.rel (0) target = $region61
    $region60: #{tpu_custom_call.1} parent=1 // pred_region
      %2682 = dma.done [#allocation4], 256
    $region61: #{tpu_custom_call.1} parent=1 // pred_fallthru
      _
    // Predicated region
    $region62: #{tpu_custom_call.1} parent=1 // pred_check
      _
    $region63: #{tpu_custom_call.1} parent=1 // pred_check_branch
      %2684 = sbr.rel (0) target = $region65
    $region64: #{tpu_custom_call.1} parent=1 // pred_region
      %2685 = dma.done [#allocation13], 32
    $region65: #{tpu_custom_call.1} parent=1 // pred_fallthru
      _
    %2686 = vsyncpa [#allocation3], 1
    %2687 = vsyncpa [#allocation6], 1
    %2688 = vsyncpa [#allocation9], 1
    %2689 = vsyncpa [#allocation4], 1
    %2690 = vsyncpa [#allocation13], 1

</llo_original>
